<compile_context>
chip_gen: v6e
topology: v6e:2x2x1
jax: 0.10.0
libtpu: 0.0.40
codegen_flags: <defaults>
</compile_context>

<pallas_src>
import functools

import jax
import jax.numpy as jnp
from jax.experimental import pallas as pl
from jax.experimental.pallas import tpu as pltpu


def _round_up(x, m):
    return ((x + m - 1) // m) * m


def _vmem_capacity_bytes():
    """Physical VMEM per TensorCore; conservative 64 MiB (v7x) fallback."""
    try:
        info = pltpu.get_tpu_info()
        for name in ("vmem_capacity_bytes", "vmem_size_bytes", "vmem_bytes"):
            v = getattr(info, name, None)
            if v:
                return int(v)
    except Exception:
        pass
    return 64 * 1024 * 1024


def _choose_tile_and_vmem(n, batch, p1, p2, p3, out_dim, const_bytes, tile_n):
    """Pick the points-axis tile and a matching vmem_limit_bytes.

    Per-column cost is dominated by the f32/bf16 chained-matmul temporaries
    (~6 B * (P1+P2+P3) per column); the single-buffered constants are small.
    v7x (64 MiB VMEM/TC) is capped at 768 columns; v5e/v6e (128 MiB) up to 2048.
    """
    vmem_cap = _vmem_capacity_bytes()
    per_col = 6 * (p1 + p2 + p3) + 4 * (3 + out_dim) + 64
    per_col_io = 2 * 4 * (3 + out_dim)              # double-buffered in/out tiles
    per_col_total = per_col + per_col_io
    n_pad128 = _round_up(max(n, 1), 128)

    if tile_n is None:
        cap = 768 if vmem_cap <= 72 * 1024 * 1024 else 2048
        budget = max(int(0.45 * vmem_cap) - const_bytes, 128 * per_col_total)
        tile = 128
        for cand in (2048, 1536, 1024, 768, 512, 384, 256, 128):
            if cand <= cap and cand * per_col_total <= budget:
                tile = cand
                break
        tile = min(tile, n_pad128)
    else:
        tile = max(128, min(_round_up(tile_n, 128), n_pad128))

    # Keep >= 2 grid programs when possible: v7x has 2 TensorCores per chip and
    # a one-program grid would idle half the chip.
    while batch * pl.cdiv(n_pad128, tile) < 2 and tile > 128:
        tile = max(128, (tile // 2) // 128 * 128)

    vmem_limit = const_bytes + 2 * tile * per_col_total + (8 << 20)
    vmem_limit = max(vmem_limit, 32 << 20)
    vmem_limit = min(vmem_limit, int(0.85 * vmem_cap))
    return tile, int(vmem_limit)


# ---------------------------------------------------------------------------
# Pallas kernel: fused 4-layer MLP in channels-major layout.
#   layer1: VPU outer-product over the 3 point coords + per-batch shift + ReLU
#   layer2/3: bf16 MXU matmul -> f32 -> bias -> ReLU
#   layer4: bf16 MXU matmul (decoder) or VPU/XLU row-reduce (EREstimate)
#           -> bias [-> tanh] [-> + x residual]
# Shared by PointGenCon (use_tanh=True, out_dim=3, fused residual) and
# EREstimate (use_tanh=False, out_dim=1, layer 4 on VPU).
# ---------------------------------------------------------------------------
def _mlp_kernel(use_tanh, fuse_residual, l4_vpu,
                x_ref, sh1_ref, w1_ref, w2_ref, t2_ref, w3_ref, t3_ref,
                w4_ref, b4_ref, o_ref):
    x = x_ref[0]                                   # (3, T) f32 point coords
    w1 = w1_ref[...]                               # (P1, 3) f32 (BN scale folded)

    # Layer 1 on the VPU: K = 3 is far too thin for the MXU.
    h = (w1[:, 0:1] * x[0:1, :]
         + w1[:, 1:2] * x[1:2, :]
         + w1[:, 2:3] * x[2:3, :])                 # (P1, T) f32
    h = jnp.maximum(h + sh1_ref[0], 0.0)           # per-batch feature shift + ReLU

    # Layers 2-3: bf16 MXU matmuls, f32 accumulation, f32 bias + ReLU.
    # TODO(synk): if bundle dumps show exposed MXU push gaps at the layer
    # boundaries, split T into 256-wide sub-chunks so layer-(l+1) pushes
    # overlap the previous chunk's bias/ReLU/bf16-cast epilogue.
    h = jnp.dot(w2_ref[...], h.astype(jnp.bfloat16),
                preferred_element_type=jnp.float32)
    h = jnp.maximum(h + t2_ref[...], 0.0)

    h = jnp.dot(w3_ref[...], h.astype(jnp.bfloat16),
                preferred_element_type=jnp.float32)
    h = jnp.maximum(h + t3_ref[...], 0.0)

    if l4_vpu:
        # out_dim == 1 (EREstimate): a full MXU pass for a single output row
        # wastes MXU time; do a broadcast-multiply + cross-sublane reduce.
        y = jnp.sum(h * w4_ref[...], axis=0, keepdims=True) + b4_ref[...]
    else:
        y = jnp.dot(w4_ref[...], h.astype(jnp.bfloat16),
                    preferred_element_type=jnp.float32) + b4_ref[...]
    if use_tanh:
        y = jnp.tanh(y)                            # f32 EUP
    if fuse_residual:
        y = y + x                                  # fused residual update
    o_ref[0] = y                                   # (out, T) lane-dense store


def mlp_pallas(points, image_feat, fp, *, use_tanh, fuse_residual=False,
               tile_n=None):
    """points: (B, 3, N) f32; image_feat: (B, C_feat) f32; fp: folded params.
    Returns (B, out_dim, N) f32 in the PyTorch Conv1d layout.  With
    fuse_residual=True the kernel stores points + mlp(points) directly."""
    B, _, N = points.shape
    w1p, w1f, t1 = fp["w1p"], fp["w1f"], fp["t1"]
    w2, t2, w3, t3, b4 = fp["w2"], fp["t2"], fp["w3"], fp["t3"], fp["b4"]
    p1, p2, p3 = w1p.shape[0], w2.shape[0], w3.shape[0]
    out_dim = b4.shape[0]
    l4_vpu = out_dim == 1                      # EREstimate head: skip the MXU
    w4 = fp["w4c"] if l4_vpu else fp["w4"]
    if fuse_residual and out_dim != 3:
        raise ValueError("residual fusion requires out_dim == 3")

    # Constant-per-batch layer-1 contribution of the replicated image feature,
    # folded with BN/bias into a (B, P1, 1) shift.  Tiny XLA matmul; removes
    # the ~C_feat/3 extra FLOPs and HBM traffic from the per-point kernel path.
    shift1 = (image_feat @ w1f + t1[None, :])[:, :, None]      # (B, P1, 1)

    consts = (w1p, w2, t2, w3, t3, w4, b4)

    # Conservative VMEM footprint of the (lane/sublane padded) constants.
    def padded_bytes(a):
        lead = 1
        for d in a.shape[:-2]:
            lead *= d
        subl = _round_up(a.shape[-2], 8)
        lanes = _round_up(a.shape[-1], 128)
        return lead * subl * lanes * a.dtype.itemsize

    const_bytes = sum(padded_bytes(a) for a in consts) + padded_bytes(shift1[:1])
    const_bytes *= 2                           # fallback path double-buffers

    tile, vmem_limit = _choose_tile_and_vmem(N, B, p1, p2, p3, out_dim,
                                             const_bytes, tile_n)
    n_pad = _round_up(N, tile)
    if n_pad != N:
        points = jnp.pad(points, ((0, 0), (0, 0), (0, n_pad - N)))
    grid = (B, n_pad // tile)

    flops = 2 * B * n_pad * (3 * p1 + p1 * p2 + p2 * p3 + p3 * out_dim)
    weight_bytes = sum(int(a.size) * a.dtype.itemsize for a in consts)
    bytes_accessed = (4 * B * n_pad * (3 + out_dim) + weight_bytes
                      + int(shift1.size) * 4)
    cost = pl.CostEstimate(
        flops=int(flops),
        transcendentals=int(B * n_pad * out_dim) if use_tanh else 0,
        bytes_accessed=int(bytes_accessed))

    def build(single_buffer):
        def spec(shape, index_map):
            if single_buffer:
                try:
                    return pl.BlockSpec(shape, index_map,
                                        pipeline_mode=pl.Buffered(1))
                except Exception:          # older JAX: no pipeline_mode kwarg
                    pass
            return pl.BlockSpec(shape, index_map)

        const_specs = [spec(a.shape, lambda b, n: (0, 0)) for a in consts]
        return pl.pallas_call(
            functools.partial(_mlp_kernel, use_tanh, fuse_residual, l4_vpu),
            out_shape=jax.ShapeDtypeStruct((B, out_dim, n_pad), jnp.float32),
            grid=grid,
            in_specs=[
                pl.BlockSpec((1, 3, tile), lambda b, n: (b, 0, n)),
                spec((1, p1, 1), lambda b, n: (b, 0, 0)),  # per-batch shift
                *const_specs,
            ],
            out_specs=pl.BlockSpec((1, out_dim, tile), lambda b, n: (b, 0, n)),
            compiler_params=pltpu.CompilerParams(
                dimension_semantics=("parallel", "parallel"),
                vmem_limit_bytes=vmem_limit),
            cost_estimate=cost,
        )

    try:
        out = build(single_buffer=True)(points, shift1, *consts)
    except Exception:
        # Fallback: default double-buffering of the grid-invariant inputs.
        out = build(single_buffer=False)(points, shift1, *consts)

    if n_pad != N:
        out = out[:, :, :N]    # padded point columns carry garbage; always slice
    return out


# ---------------------------------------------------------------------------
# Parameter construction (deterministic, synthetic) + folding
# ---------------------------------------------------------------------------
def init_mlp_params(key, c_in, out_dim):
    c2, c4 = c_in // 2, c_in // 4
    ks = jax.random.split(key, 11)

    def w(k, ci, co):
        return jax.random.normal(k, (ci, co), jnp.float32) / jnp.sqrt(float(ci))

    def bn(k, c):
        k1, k2, k3, k4 = jax.random.split(k, 4)
        gamma = 1.0 + 0.1 * jax.random.normal(k1, (c,), jnp.float32)
        beta = 0.1 * jax.random.normal(k2, (c,), jnp.float32)
        mean = 0.1 * jax.random.normal(k3, (c,), jnp.float32)
        var = 1.0 + 0.1 * jnp.abs(jax.random.normal(k4, (c,), jnp.float32))
        return gamma, beta, mean, var

    return dict(
        w1=w(ks[0], c_in, c_in), b1=0.01 * jax.random.normal(ks[1], (c_in,), jnp.float32),
        bn1=bn(ks[2], c_in),
        w2=w(ks[3], c_in, c2), b2=0.01 * jax.random.normal(ks[4], (c2,), jnp.float32),
        bn2=bn(ks[5], c2),
        w3=w(ks[6], c2, c4), b3=0.01 * jax.random.normal(ks[7], (c4,), jnp.float32),
        bn3=bn(ks[8], c4),
        w4=w(ks[9], c4, out_dim), b4=0.01 * jax.random.normal(ks[10], (out_dim,), jnp.float32),
    )


def fold_params(p, eps=1e-5, align=128):
    """Fold eval-mode BatchNorm + conv bias into the weights, split layer-1
    into point-part (in-kernel) and feature-part (per-batch shift outside),
    transpose to channels-major, zero-pad hidden dims to multiples of `align`,
    and cast the MXU weights (layers 2-4) to bf16.

    TODO(synk): real PyTorch Conv1d weights are (out_ch, in_ch, 1); porting a
    Total3D checkpoint requires squeezing + transposing to the (in, out)
    layout assumed by this synthetic init."""
    def bn_scale_shift(bn, bias):
        gamma, beta, mean, var = bn
        s = gamma / jnp.sqrt(var + eps)
        t = (bias - mean) * s + beta
        return s, t

    s1, t1 = bn_scale_shift(p["bn1"], p["b1"])
    s2, t2 = bn_scale_shift(p["bn2"], p["b2"])
    s3, t3 = bn_scale_shift(p["bn3"], p["b3"])

    w1, w2, w3, w4 = p["w1"], p["w2"], p["w3"], p["w4"]
    c1, c2, c4 = w1.shape[1], w2.shape[1], w3.shape[1]
    p1, p2, p3 = (_round_up(c, align) for c in (c1, c2, c4))

    def pad_rows(a, rows):
        return jnp.pad(a, ((0, rows - a.shape[0]),) + ((0, 0),) * (a.ndim - 1))

    def pad_cols(a, cols):
        return jnp.pad(a, ((0, 0), (0, cols - a.shape[1])))

    # layer 1: point part (kernel) + feature part (per-batch shift outside)
    w1p = pad_rows((w1[:3, :] * s1[None, :]).T, p1)                  # (P1, 3)  f32
    w1f = pad_cols(w1[3:, :] * s1[None, :], p1)                      # (Cf, P1) f32
    t1p = jnp.pad(t1, (0, p1 - c1))                                  # (P1,)    f32

    w2t = pad_cols(pad_rows((w2 * s2[None, :]).T, p2), p1).astype(jnp.bfloat16)  # (P2, P1)
    t2p = jnp.pad(t2, (0, p2 - c2)).reshape(-1, 1)                               # (P2, 1)
    w3t = pad_cols(pad_rows((w3 * s3[None, :]).T, p3), p2).astype(jnp.bfloat16)  # (P3, P2)
    t3p = jnp.pad(t3, (0, p3 - c4)).reshape(-1, 1)                               # (P3, 1)
    w4t = pad_cols(w4.T, p3).astype(jnp.bfloat16)                                # (out, P3) MXU
    w4c = pad_rows(w4, p3).astype(jnp.float32)                                   # (P3, out) VPU
    b4 = p["b4"].reshape(-1, 1)                                                  # (out, 1)

    return dict(w1p=w1p, w1f=w1f, t1=t1p, w2=w2t, t2=t2p, w3=w3t, t3=t3p,
                w4=w4t, w4c=w4c, b4=b4)


# ---------------------------------------------------------------------------
# Glue: sphere template, edge sampling (test mode), forward pass
# ---------------------------------------------------------------------------
def build_template(key, num_points, n_edges, n_faces):
    kp, kf = jax.random.split(key, 2)
    pts = jax.random.normal(kp, (num_points, 6), jnp.float32)
    pts = pts / (jnp.linalg.norm(pts[:, :3], axis=1, keepdims=True) + 1e-6)

    i = jnp.arange(n_edges)
    e0 = i % num_points
    e1 = (e0 + 1 + (i * 3) % (num_points - 1)) % num_points
    edges = jnp.stack([e0 + 1, e1 + 1], axis=1).astype(jnp.int32)      # 1-indexed

    adjacency = jnp.zeros((num_points, num_points), jnp.int32)
    adjacency = adjacency.at[e0, e1].set(1).at[e1, e0].set(1)

    j = jnp.arange(n_faces)
    faces = (jnp.stack([j % num_points, (j + 1) % num_points, (j + 2) % num_points],
                       axis=1) + 1).astype(jnp.int32)
    edge2face = jax.random.bernoulli(kf, 0.05, (n_edges, n_faces)).astype(jnp.int32)
    return dict(points=pts, edges=edges, faces=faces,
                adjacency=adjacency, edge2face=edge2face)


def sample_points_on_edges_test(points, edges, quantity):
    """Test-mode sampling: all weights are 0.5 (edge midpoints).
    points: (B, 3, N); edges: (B, E, 2) 1-indexed -> (B, 3, E*quantity)."""
    B, _, _ = points.shape
    E = edges.shape[1]
    idx0 = jnp.broadcast_to((edges[:, :, 0] - 1)[:, None, :], (B, 3, E))
    idx1 = jnp.broadcast_to((edges[:, :, 1] - 1)[:, None, :], (B, 3, E))
    left = jnp.take_along_axis(points, idx0, axis=2)
    right = jnp.take_along_axis(points, idx1, axis=2)
    mid = 0.5 * left + 0.5 * right                                     # (B, 3, E)
    samp = jnp.repeat(mid[:, :, :, None], quantity, axis=3)            # (B, 3, E, q)
    return samp.reshape(B, 3, E * quantity)


def dens_tmnet_forward(params, image, size_cls, template, threshold=0.1, factor=1.0):
    """Test-mode (module.eval()) forward pass of DensTMNet."""
    sphere_points = template["points"]
    sphere_edges = template["edges"]
    sphere_faces = template["faces"]
    sphere_adjacency = template["adjacency"]
    sphere_edge2face = template["edge2face"]
    subnetworks = len(params["decoders"])
    face_samples = params["face_samples"]

    B = image.shape[0]
    N = sphere_points.shape[0]
    E = sphere_edges.shape[0]
    F = sphere_faces.shape[0]

    current_faces = jnp.broadcast_to(sphere_faces[None], (B, F, 3))
    current_edges = jnp.broadcast_to(sphere_edges[None], (B, E, 2))

    image = image[:, :3, :, :]
    # TODO(synk): resnet18_full pretrained encoder has no clean in-kernel
    # equivalent here; replaced by a deterministic global mean-pool + linear
    # projection producing the 1024-dim-equivalent feature.
    pooled = jnp.mean(image, axis=(2, 3))                              # (B, 3)
    feat = pooled @ params["enc_w"] + params["enc_b"]                  # (B, feat_dim)
    image_feat = jnp.concatenate([feat, size_cls], axis=1)             # (B, feat+ncls)

    # PyTorch Conv1d layout (B, 3, N) kept end-to-end (kernel is lane-dense).
    current_shape_grid = jnp.broadcast_to(sphere_points[:, :3].T[None], (B, 3, N))

    out_shape_points, out_sampled_mesh_points, out_indicators = [], [], []
    boundary_point_ids = jnp.zeros((B, N), dtype=jnp.uint8)
    removed_union = jnp.zeros((B, E), dtype=bool)

    for i in range(subnetworks):
        # Decoder: kernel stores x + tanh(mlp(x)) directly (fused residual).
        current_shape_grid = mlp_pallas(current_shape_grid, image_feat,
                                        params["decoders"][i],
                                        use_tanh=True, fuse_residual=True)
        out_shape_points.append(current_shape_grid)

        if i == subnetworks - 1 and subnetworks > 1:
            # boundary-point bookkeeping (mask formulation of torch unique/count)
            e0 = sphere_edges[:, 0] - 1
            e1 = sphere_edges[:, 1] - 1
            inc = (jax.nn.one_hot(e0, N, dtype=jnp.float32)
                   + jax.nn.one_hot(e1, N, dtype=jnp.float32))         # (E, N)
            counts = removed_union.astype(jnp.float32) @ inc           # (B, N)
            degree = sphere_adjacency.sum(axis=1).astype(jnp.float32)  # (N,)
            boundary = (counts > 0) & (counts < degree[None, :])
            boundary_point_ids = boundary.astype(jnp.uint8)
            return (out_shape_points, out_sampled_mesh_points, out_indicators,
                    current_edges, boundary_point_ids, current_faces)

        # ---- edge error estimation branch (train_e_e=True) ----
        sampled = sample_points_on_edges_test(current_shape_grid, current_edges,
                                              face_samples)            # (B, 3, E*q)
        out_sampled_mesh_points.append(sampled)
        ind = mlp_pallas(sampled, image_feat,
                         params["error_estimators"][i], use_tanh=False)  # (B, 1, E*q)
        indicators = ind.reshape(B, E, face_samples).mean(axis=2)      # (B, E)
        out_indicators.append(indicators)

        removed = jax.nn.sigmoid(indicators) < threshold               # (B, E) bool
        removed_union = removed_union | removed
        current_edges = jnp.where(removed[:, :, None],
                                  jnp.ones_like(current_edges), current_edges)
        touched = (removed.astype(jnp.float32)
                   @ sphere_edge2face.astype(jnp.float32)) > 0         # (B, F)
        current_faces = jnp.where(touched[:, :, None],
                                  jnp.ones_like(current_faces), current_faces)
        threshold = threshold * factor

    return (out_shape_points, out_sampled_mesh_points, out_indicators,
            current_edges, boundary_point_ids, current_faces)


# ---------------------------------------------------------------------------
if __name__ == "__main__":
    key = jax.random.PRNGKey(0)

    # small synthetic config (real model: bottleneck=1024, N=2562, pix3d n_classes=9)
    B, n_classes, feat_dim = 2, 9, 116          # 3 + 116 + 9 = 128 channels into MLPs
    num_points, n_edges, n_faces = 256, 128, 64
    face_samples, subnetworks = 2, 2
    c_in = 3 + feat_dim + n_classes

    k_img, k_cls, k_tpl, k_par = jax.random.split(key, 4)
    image = jax.random.normal(k_img, (B, 4, 16, 16), jnp.float32)
    size_cls = jax.nn.one_hot(
        jax.random.randint(k_cls, (B,), 0, n_classes), n_classes, dtype=jnp.float32)

    template = build_template(k_tpl, num_points, n_edges, n_faces)

    k_enc, k_dec, k_ee = jax.random.split(k_par, 3)
    params = {
        "enc_w": jax.random.normal(k_enc, (3, feat_dim), jnp.float32) / jnp.sqrt(3.0),
        "enc_b": jnp.zeros((feat_dim,), jnp.float32),
        "decoders": [fold_params(init_mlp_params(k, c_in, 3))
                     for k in jax.random.split(k_dec, subnetworks)],
        "error_estimators": [fold_params(init_mlp_params(k, c_in, 1))
                             for k in jax.random.split(k_ee, max(subnetworks - 1, 1))],
        "face_samples": face_samples,
    }

    outs = dens_tmnet_forward(params, image, size_cls, template,
                              threshold=0.5, factor=1.0)
    out_shape_points, out_sampled, out_indicators, cur_edges, bpids, cur_faces = outs

    jax.block_until_ready(out_shape_points[-1])
    jax.block_until_ready(out_indicators[0])
    jax.block_until_ready(bpids)
    jax.block_until_ready(cur_faces)
    print("KERNEL_OK")
</pallas_src>

<mosaic_0001>
module attributes {stable_mosaic.version = 11 : i64} {
  func.func @_mlp_kernel(%arg0: i32, %arg1: i32, %arg2: memref<1x3x256xf32, #tpu.memory_space<vmem>>, %arg3: memref<1x128x1xf32, #tpu.memory_space<vmem>>, %arg4: memref<128x3xf32, #tpu.memory_space<vmem>>, %arg5: memref<128x128xbf16, #tpu.memory_space<vmem>>, %arg6: memref<128x1xf32, #tpu.memory_space<vmem>>, %arg7: memref<128x128xbf16, #tpu.memory_space<vmem>>, %arg8: memref<128x1xf32, #tpu.memory_space<vmem>>, %arg9: memref<3x128xbf16, #tpu.memory_space<vmem>>, %arg10: memref<3x1xf32, #tpu.memory_space<vmem>>, %arg11: memref<1x3x256xf32, #tpu.memory_space<vmem>>) attributes {dimension_semantics = [#tpu.dimension_semantics<parallel>, #tpu.dimension_semantics<parallel>], iteration_bounds = array<i64: 2, 1>, scalar_prefetch = 0 : i64, scratch_operands = 0 : i64, tpu.core_type = #tpu.core_type<tc>, window_params = [{transform_indices = @transform_0, window_bounds = array<i64: 1, 3, 256>}, {pipeline_mode = #tpu.pipeline_mode<synchronous>, transform_indices = @transform_1, window_bounds = array<i64: 1, 128, 1>}, {pipeline_mode = #tpu.pipeline_mode<synchronous>, transform_indices = @transform_2, window_bounds = array<i64: 128, 3>}, {pipeline_mode = #tpu.pipeline_mode<synchronous>, transform_indices = @transform_3, window_bounds = array<i64: 128, 128>}, {pipeline_mode = #tpu.pipeline_mode<synchronous>, transform_indices = @transform_4, window_bounds = array<i64: 128, 1>}, {pipeline_mode = #tpu.pipeline_mode<synchronous>, transform_indices = @transform_5, window_bounds = array<i64: 128, 128>}, {pipeline_mode = #tpu.pipeline_mode<synchronous>, transform_indices = @transform_6, window_bounds = array<i64: 128, 1>}, {pipeline_mode = #tpu.pipeline_mode<synchronous>, transform_indices = @transform_7, window_bounds = array<i64: 3, 128>}, {pipeline_mode = #tpu.pipeline_mode<synchronous>, transform_indices = @transform_8, window_bounds = array<i64: 3, 1>}, {transform_indices = @transform_9, window_bounds = array<i64: 1, 3, 256>}]} {
    %c0 = arith.constant 0 : index
    %c0_0 = arith.constant 0 : index
    %c0_1 = arith.constant 0 : index
    %0 = vector.load %arg2[%c0, %c0_0, %c0_1] : memref<1x3x256xf32, #tpu.memory_space<vmem>>, vector<1x3x256xf32>
    %1 = vector.shape_cast %0 : vector<1x3x256xf32> to vector<3x256xf32>
    %c0_2 = arith.constant 0 : index
    %c0_3 = arith.constant 0 : index
    %2 = vector.load %arg4[%c0_2, %c0_3] : memref<128x3xf32, #tpu.memory_space<vmem>>, vector<128x3xf32>
    %3 = vector.extract_strided_slice %2 {offsets = [0, 0], sizes = [128, 1], strides = [1, 1]} : vector<128x3xf32> to vector<128x1xf32>
    %4 = vector.extract_strided_slice %1 {offsets = [0, 0], sizes = [1, 256], strides = [1, 1]} : vector<3x256xf32> to vector<1x256xf32>
    %5 = vector.broadcast %3 : vector<128x1xf32> to vector<128x256xf32>
    %6 = vector.broadcast %4 : vector<1x256xf32> to vector<128x256xf32>
    %7 = arith.mulf %5, %6 : vector<128x256xf32>
    %8 = vector.extract_strided_slice %2 {offsets = [0, 1], sizes = [128, 1], strides = [1, 1]} : vector<128x3xf32> to vector<128x1xf32>
    %9 = vector.extract_strided_slice %1 {offsets = [1, 0], sizes = [1, 256], strides = [1, 1]} : vector<3x256xf32> to vector<1x256xf32>
    %10 = vector.broadcast %8 : vector<128x1xf32> to vector<128x256xf32>
    %11 = vector.broadcast %9 : vector<1x256xf32> to vector<128x256xf32>
    %12 = arith.mulf %10, %11 : vector<128x256xf32>
    %13 = arith.addf %7, %12 : vector<128x256xf32>
    %14 = vector.extract_strided_slice %2 {offsets = [0, 2], sizes = [128, 1], strides = [1, 1]} : vector<128x3xf32> to vector<128x1xf32>
    %15 = vector.extract_strided_slice %1 {offsets = [2, 0], sizes = [1, 256], strides = [1, 1]} : vector<3x256xf32> to vector<1x256xf32>
    %16 = vector.broadcast %14 : vector<128x1xf32> to vector<128x256xf32>
    %17 = vector.broadcast %15 : vector<1x256xf32> to vector<128x256xf32>
    %18 = arith.mulf %16, %17 : vector<128x256xf32>
    %19 = arith.addf %13, %18 : vector<128x256xf32>
    %c0_4 = arith.constant 0 : index
    %c0_5 = arith.constant 0 : index
    %c0_6 = arith.constant 0 : index
    %20 = vector.load %arg3[%c0_4, %c0_5, %c0_6] : memref<1x128x1xf32, #tpu.memory_space<vmem>>, vector<1x128x1xf32>
    %21 = vector.shape_cast %20 : vector<1x128x1xf32> to vector<128x1xf32>
    %22 = vector.broadcast %21 : vector<128x1xf32> to vector<128x256xf32>
    %23 = arith.addf %19, %22 : vector<128x256xf32>
    %cst = arith.constant 0.000000e+00 : f32
    %24 = vector.broadcast %cst : f32 to vector<128x256xf32>
    %25 = arith.maximumf %23, %24 : vector<128x256xf32>
    %c0_7 = arith.constant 0 : index
    %c0_8 = arith.constant 0 : index
    %26 = vector.load %arg5[%c0_7, %c0_8] : memref<128x128xbf16, #tpu.memory_space<vmem>>, vector<128x128xbf16>
    %27 = arith.truncf %25 : vector<128x256xf32> to vector<128x256xbf16>
    %cst_9 = arith.constant dense<0.000000e+00> : vector<128x256xf32>
    %28 = tpu.matmul %26, %27, %cst_9 {dimension_numbers = #tpu.dot_dimension_numbers<[1], [0], [0], [1], [0, 0, 1, 1], [], []>} : vector<128x128xbf16>, vector<128x256xbf16>, vector<128x256xf32> -> vector<128x256xf32>
    %c0_10 = arith.constant 0 : index
    %c0_11 = arith.constant 0 : index
    %29 = vector.load %arg6[%c0_10, %c0_11] : memref<128x1xf32, #tpu.memory_space<vmem>>, vector<128x1xf32>
    %30 = vector.broadcast %29 : vector<128x1xf32> to vector<128x256xf32>
    %31 = arith.addf %28, %30 : vector<128x256xf32>
    %cst_12 = arith.constant 0.000000e+00 : f32
    %32 = vector.broadcast %cst_12 : f32 to vector<128x256xf32>
    %33 = arith.maximumf %31, %32 : vector<128x256xf32>
    %c0_13 = arith.constant 0 : index
    %c0_14 = arith.constant 0 : index
    %34 = vector.load %arg7[%c0_13, %c0_14] : memref<128x128xbf16, #tpu.memory_space<vmem>>, vector<128x128xbf16>
    %35 = arith.truncf %33 : vector<128x256xf32> to vector<128x256xbf16>
    %cst_15 = arith.constant dense<0.000000e+00> : vector<128x256xf32>
    %36 = tpu.matmul %34, %35, %cst_15 {dimension_numbers = #tpu.dot_dimension_numbers<[1], [0], [0], [1], [0, 0, 1, 1], [], []>} : vector<128x128xbf16>, vector<128x256xbf16>, vector<128x256xf32> -> vector<128x256xf32>
    %c0_16 = arith.constant 0 : index
    %c0_17 = arith.constant 0 : index
    %37 = vector.load %arg8[%c0_16, %c0_17] : memref<128x1xf32, #tpu.memory_space<vmem>>, vector<128x1xf32>
    %38 = vector.broadcast %37 : vector<128x1xf32> to vector<128x256xf32>
    %39 = arith.addf %36, %38 : vector<128x256xf32>
    %cst_18 = arith.constant 0.000000e+00 : f32
    %40 = vector.broadcast %cst_18 : f32 to vector<128x256xf32>
    %41 = arith.maximumf %39, %40 : vector<128x256xf32>
    %c0_19 = arith.constant 0 : index
    %c0_20 = arith.constant 0 : index
    %42 = vector.load %arg9[%c0_19, %c0_20] : memref<3x128xbf16, #tpu.memory_space<vmem>>, vector<3x128xbf16>
    %43 = arith.truncf %41 : vector<128x256xf32> to vector<128x256xbf16>
    %cst_21 = arith.constant dense<0.000000e+00> : vector<3x256xf32>
    %44 = tpu.matmul %42, %43, %cst_21 {dimension_numbers = #tpu.dot_dimension_numbers<[1], [0], [0], [1], [0, 0, 1, 1], [], []>} : vector<3x128xbf16>, vector<128x256xbf16>, vector<3x256xf32> -> vector<3x256xf32>
    %c0_22 = arith.constant 0 : index
    %c0_23 = arith.constant 0 : index
    %45 = vector.load %arg10[%c0_22, %c0_23] : memref<3x1xf32, #tpu.memory_space<vmem>>, vector<3x1xf32>
    %46 = vector.broadcast %45 : vector<3x1xf32> to vector<3x256xf32>
    %47 = arith.addf %44, %46 : vector<3x256xf32>
    %48 = math.tanh %47 : vector<3x256xf32>
    %49 = arith.addf %48, %1 : vector<3x256xf32>
    %c0_24 = arith.constant 0 : index
    %c0_25 = arith.constant 0 : index
    %c0_26 = arith.constant 0 : index
    %50 = vector.load %arg11[%c0_24, %c0_25, %c0_26] : memref<1x3x256xf32, #tpu.memory_space<vmem>>, vector<1x3x256xf32>
    %51 = vector.shape_cast %50 : vector<1x3x256xf32> to vector<3x256xf32>
    %52 = vector.shape_cast %49 : vector<3x256xf32> to vector<1x3x256xf32>
    tpu.vector_store %arg11[%c0_24, %c0_25, %c0_26], %52 {strides = array<i32>} : memref<1x3x256xf32, #tpu.memory_space<vmem>>, vector<1x3x256xf32>,
    return
  }
  func.func @transform_0(%arg0: i32, %arg1: i32) -> (i32, i32, i32) {
    %c0_i32 = arith.constant 0 : i32
    %c0_i32_0 = arith.constant 0 : i32
    return %arg0, %c0_i32, %arg1 : i32, i32, i32
  }
  func.func @transform_1(%arg0: i32, %arg1: i32) -> (i32, i32, i32) {
    %c0_i32 = arith.constant 0 : i32
    %c0_i32_0 = arith.constant 0 : i32
    %c0_i32_1 = arith.constant 0 : i32
    return %arg0, %c0_i32, %c0_i32_0 : i32, i32, i32
  }
  func.func @transform_2(%arg0: i32, %arg1: i32) -> (i32, i32) {
    %c0_i32 = arith.constant 0 : i32
    %c0_i32_0 = arith.constant 0 : i32
    %c0_i32_1 = arith.constant 0 : i32
    return %c0_i32, %c0_i32_0 : i32, i32
  }
  func.func @transform_3(%arg0: i32, %arg1: i32) -> (i32, i32) {
    %c0_i32 = arith.constant 0 : i32
    %c0_i32_0 = arith.constant 0 : i32
    %c0_i32_1 = arith.constant 0 : i32
    return %c0_i32, %c0_i32_0 : i32, i32
  }
  func.func @transform_4(%arg0: i32, %arg1: i32) -> (i32, i32) {
    %c0_i32 = arith.constant 0 : i32
    %c0_i32_0 = arith.constant 0 : i32
    %c0_i32_1 = arith.constant 0 : i32
    return %c0_i32, %c0_i32_0 : i32, i32
  }
  func.func @transform_5(%arg0: i32, %arg1: i32) -> (i32, i32) {
    %c0_i32 = arith.constant 0 : i32
    %c0_i32_0 = arith.constant 0 : i32
    %c0_i32_1 = arith.constant 0 : i32
    return %c0_i32, %c0_i32_0 : i32, i32
  }
  func.func @transform_6(%arg0: i32, %arg1: i32) -> (i32, i32) {
    %c0_i32 = arith.constant 0 : i32
    %c0_i32_0 = arith.constant 0 : i32
    %c0_i32_1 = arith.constant 0 : i32
    return %c0_i32, %c0_i32_0 : i32, i32
  }
  func.func @transform_7(%arg0: i32, %arg1: i32) -> (i32, i32) {
    %c0_i32 = arith.constant 0 : i32
    %c0_i32_0 = arith.constant 0 : i32
    %c0_i32_1 = arith.constant 0 : i32
    return %c0_i32, %c0_i32_0 : i32, i32
  }
  func.func @transform_8(%arg0: i32, %arg1: i32) -> (i32, i32) {
    %c0_i32 = arith.constant 0 : i32
    %c0_i32_0 = arith.constant 0 : i32
    %c0_i32_1 = arith.constant 0 : i32
    return %c0_i32, %c0_i32_0 : i32, i32
  }
  func.func @transform_9(%arg0: i32, %arg1: i32) -> (i32, i32, i32) {
    %c0_i32 = arith.constant 0 : i32
    %c0_i32_0 = arith.constant 0 : i32
    return %arg0, %c0_i32, %arg1 : i32, i32, i32
  }
}

module attributes {stable_mosaic.version = 11 : i64} {
  func.func @_mlp_kernel(%arg0: i32, %arg1: i32, %arg2: memref<1x3x256xf32, #tpu.memory_space<vmem>>, %arg3: memref<1x128x1xf32, #tpu.memory_space<vmem>>, %arg4: memref<128x3xf32, #tpu.memory_space<vmem>>, %arg5: memref<128x128xbf16, #tpu.memory_space<vmem>>, %arg6: memref<128x1xf32, #tpu.memory_space<vmem>>, %arg7: memref<128x128xbf16, #tpu.memory_space<vmem>>, %arg8: memref<128x1xf32, #tpu.memory_space<vmem>>, %arg9: memref<3x128xbf16, #tpu.memory_space<vmem>>, %arg10: memref<3x1xf32, #tpu.memory_space<vmem>>, %arg11: memref<1x3x256xf32, #tpu.memory_space<vmem>>) attributes {dimension_semantics = [#tpu.dimension_semantics<parallel>, #tpu.dimension_semantics<parallel>], iteration_bounds = array<i64: 2, 1>, scalar_prefetch = 0 : i64, scratch_operands = 0 : i64, tpu.core_type = #tpu.core_type<tc>, window_params = [{transform_indices = @transform_0, window_bounds = array<i64: 1, 3, 256>}, {transform_indices = @transform_1, window_bounds = array<i64: 1, 128, 1>}, {pipeline_mode = #tpu.pipeline_mode<synchronous>, transform_indices = @transform_2, window_bounds = array<i64: 128, 3>}, {pipeline_mode = #tpu.pipeline_mode<synchronous>, transform_indices = @transform_3, window_bounds = array<i64: 128, 128>}, {pipeline_mode = #tpu.pipeline_mode<synchronous>, transform_indices = @transform_4, window_bounds = array<i64: 128, 1>}, {pipeline_mode = #tpu.pipeline_mode<synchronous>, transform_indices = @transform_5, window_bounds = array<i64: 128, 128>}, {pipeline_mode = #tpu.pipeline_mode<synchronous>, transform_indices = @transform_6, window_bounds = array<i64: 128, 1>}, {pipeline_mode = #tpu.pipeline_mode<synchronous>, transform_indices = @transform_7, window_bounds = array<i64: 3, 128>}, {pipeline_mode = #tpu.pipeline_mode<synchronous>, transform_indices = @transform_8, window_bounds = array<i64: 3, 1>}, {transform_indices = @transform_9, window_bounds = array<i64: 1, 3, 256>}]} {
    %c0 = arith.constant 0 : index
    %c0_0 = arith.constant 0 : index
    %c0_1 = arith.constant 0 : index
    %0 = vector.load %arg2[%c0, %c0_0, %c0_1] : memref<1x3x256xf32, #tpu.memory_space<vmem>>, vector<1x3x256xf32>
    %1 = vector.shape_cast %0 : vector<1x3x256xf32> to vector<3x256xf32>
    %c0_2 = arith.constant 0 : index
    %c0_3 = arith.constant 0 : index
    %2 = vector.load %arg4[%c0_2, %c0_3] : memref<128x3xf32, #tpu.memory_space<vmem>>, vector<128x3xf32>
    %3 = vector.extract_strided_slice %2 {offsets = [0, 0], sizes = [128, 1], strides = [1, 1]} : vector<128x3xf32> to vector<128x1xf32>
    %4 = vector.extract_strided_slice %1 {offsets = [0, 0], sizes = [1, 256], strides = [1, 1]} : vector<3x256xf32> to vector<1x256xf32>
    %5 = vector.broadcast %3 : vector<128x1xf32> to vector<128x256xf32>
    %6 = vector.broadcast %4 : vector<1x256xf32> to vector<128x256xf32>
    %7 = arith.mulf %5, %6 : vector<128x256xf32>
    %8 = vector.extract_strided_slice %2 {offsets = [0, 1], sizes = [128, 1], strides = [1, 1]} : vector<128x3xf32> to vector<128x1xf32>
    %9 = vector.extract_strided_slice %1 {offsets = [1, 0], sizes = [1, 256], strides = [1, 1]} : vector<3x256xf32> to vector<1x256xf32>
    %10 = vector.broadcast %8 : vector<128x1xf32> to vector<128x256xf32>
    %11 = vector.broadcast %9 : vector<1x256xf32> to vector<128x256xf32>
    %12 = arith.mulf %10, %11 : vector<128x256xf32>
    %13 = arith.addf %7, %12 : vector<128x256xf32>
    %14 = vector.extract_strided_slice %2 {offsets = [0, 2], sizes = [128, 1], strides = [1, 1]} : vector<128x3xf32> to vector<128x1xf32>
    %15 = vector.extract_strided_slice %1 {offsets = [2, 0], sizes = [1, 256], strides = [1, 1]} : vector<3x256xf32> to vector<1x256xf32>
    %16 = vector.broadcast %14 : vector<128x1xf32> to vector<128x256xf32>
    %17 = vector.broadcast %15 : vector<1x256xf32> to vector<128x256xf32>
    %18 = arith.mulf %16, %17 : vector<128x256xf32>
    %19 = arith.addf %13, %18 : vector<128x256xf32>
    %c0_4 = arith.constant 0 : index
    %c0_5 = arith.constant 0 : index
    %c0_6 = arith.constant 0 : index
    %20 = vector.load %arg3[%c0_4, %c0_5, %c0_6] : memref<1x128x1xf32, #tpu.memory_space<vmem>>, vector<1x128x1xf32>
    %21 = vector.shape_cast %20 : vector<1x128x1xf32> to vector<128x1xf32>
    %22 = vector.broadcast %21 : vector<128x1xf32> to vector<128x256xf32>
    %23 = arith.addf %19, %22 : vector<128x256xf32>
    %cst = arith.constant 0.000000e+00 : f32
    %24 = vector.broadcast %cst : f32 to vector<128x256xf32>
    %25 = arith.maximumf %23, %24 : vector<128x256xf32>
    %c0_7 = arith.constant 0 : index
    %c0_8 = arith.constant 0 : index
    %26 = vector.load %arg5[%c0_7, %c0_8] : memref<128x128xbf16, #tpu.memory_space<vmem>>, vector<128x128xbf16>
    %27 = arith.truncf %25 : vector<128x256xf32> to vector<128x256xbf16>
    %cst_9 = arith.constant dense<0.000000e+00> : vector<128x256xf32>
    %28 = tpu.matmul %26, %27, %cst_9 {dimension_numbers = #tpu.dot_dimension_numbers<[1], [0], [0], [1], [0, 0, 1, 1], [], []>} : vector<128x128xbf16>, vector<128x256xbf16>, vector<128x256xf32> -> vector<128x256xf32>
    %c0_10 = arith.constant 0 : index
    %c0_11 = arith.constant 0 : index
    %29 = vector.load %arg6[%c0_10, %c0_11] : memref<128x1xf32, #tpu.memory_space<vmem>>, vector<128x1xf32>
    %30 = vector.broadcast %29 : vector<128x1xf32> to vector<128x256xf32>
    %31 = arith.addf %28, %30 : vector<128x256xf32>
    %cst_12 = arith.constant 0.000000e+00 : f32
    %32 = vector.broadcast %cst_12 : f32 to vector<128x256xf32>
    %33 = arith.maximumf %31, %32 : vector<128x256xf32>
    %c0_13 = arith.constant 0 : index
    %c0_14 = arith.constant 0 : index
    %34 = vector.load %arg7[%c0_13, %c0_14] : memref<128x128xbf16, #tpu.memory_space<vmem>>, vector<128x128xbf16>
    %35 = arith.truncf %33 : vector<128x256xf32> to vector<128x256xbf16>
    %cst_15 = arith.constant dense<0.000000e+00> : vector<128x256xf32>
    %36 = tpu.matmul %34, %35, %cst_15 {dimension_numbers = #tpu.dot_dimension_numbers<[1], [0], [0], [1], [0, 0, 1, 1], [], []>} : vector<128x128xbf16>, vector<128x256xbf16>, vector<128x256xf32> -> vector<128x256xf32>
    %c0_16 = arith.constant 0 : index
    %c0_17 = arith.constant 0 : index
    %37 = vector.load %arg8[%c0_16, %c0_17] : memref<128x1xf32, #tpu.memory_space<vmem>>, vector<128x1xf32>
    %38 = vector.broadcast %37 : vector<128x1xf32> to vector<128x256xf32>
    %39 = arith.addf %36, %38 : vector<128x256xf32>
    %cst_18 = arith.constant 0.000000e+00 : f32
    %40 = vector.broadcast %cst_18 : f32 to vector<128x256xf32>
    %41 = arith.maximumf %39, %40 : vector<128x256xf32>
    %c0_19 = arith.constant 0 : index
    %c0_20 = arith.constant 0 : index
    %42 = vector.load %arg9[%c0_19, %c0_20] : memref<3x128xbf16, #tpu.memory_space<vmem>>, vector<3x128xbf16>
    %43 = arith.truncf %41 : vector<128x256xf32> to vector<128x256xbf16>
    %cst_21 = arith.constant dense<0.000000e+00> : vector<3x256xf32>
    %44 = tpu.matmul %42, %43, %cst_21 {dimension_numbers = #tpu.dot_dimension_numbers<[1], [0], [0], [1], [0, 0, 1, 1], [], []>} : vector<3x128xbf16>, vector<128x256xbf16>, vector<3x256xf32> -> vector<3x256xf32>
    %c0_22 = arith.constant 0 : index
    %c0_23 = arith.constant 0 : index
    %45 = vector.load %arg10[%c0_22, %c0_23] : memref<3x1xf32, #tpu.memory_space<vmem>>, vector<3x1xf32>
    %46 = vector.broadcast %45 : vector<3x1xf32> to vector<3x256xf32>
    %47 = arith.addf %44, %46 : vector<3x256xf32>
    %48 = math.tanh %47 : vector<3x256xf32>
    %49 = arith.addf %48, %1 : vector<3x256xf32>
    %c0_24 = arith.constant 0 : index
    %c0_25 = arith.constant 0 : index
    %c0_26 = arith.constant 0 : index
    %50 = vector.load %arg11[%c0_24, %c0_25, %c0_26] : memref<1x3x256xf32, #tpu.memory_space<vmem>>, vector<1x3x256xf32>
    %51 = vector.shape_cast %50 : vector<1x3x256xf32> to vector<3x256xf32>
    %52 = vector.shape_cast %49 : vector<3x256xf32> to vector<1x3x256xf32>
    tpu.vector_store %arg11[%c0_24, %c0_25, %c0_26], %52 {strides = array<i32>} : memref<1x3x256xf32, #tpu.memory_space<vmem>>, vector<1x3x256xf32>,
    return
  }
  func.func @transform_0(%arg0: i32, %arg1: i32) -> (i32, i32, i32) {
    %c0_i32 = arith.constant 0 : i32
    %c0_i32_0 = arith.constant 0 : i32
    return %arg0, %c0_i32, %arg1 : i32, i32, i32
  }
  func.func @transform_1(%arg0: i32, %arg1: i32) -> (i32, i32, i32) {
    %c0_i32 = arith.constant 0 : i32
    %c0_i32_0 = arith.constant 0 : i32
    %c0_i32_1 = arith.constant 0 : i32
    return %arg0, %c0_i32, %c0_i32_0 : i32, i32, i32
  }
  func.func @transform_2(%arg0: i32, %arg1: i32) -> (i32, i32) {
    %c0_i32 = arith.constant 0 : i32
    %c0_i32_0 = arith.constant 0 : i32
    %c0_i32_1 = arith.constant 0 : i32
    return %c0_i32, %c0_i32_0 : i32, i32
  }
  func.func @transform_3(%arg0: i32, %arg1: i32) -> (i32, i32) {
    %c0_i32 = arith.constant 0 : i32
    %c0_i32_0 = arith.constant 0 : i32
    %c0_i32_1 = arith.constant 0 : i32
    return %c0_i32, %c0_i32_0 : i32, i32
  }
  func.func @transform_4(%arg0: i32, %arg1: i32) -> (i32, i32) {
    %c0_i32 = arith.constant 0 : i32
    %c0_i32_0 = arith.constant 0 : i32
    %c0_i32_1 = arith.constant 0 : i32
    return %c0_i32, %c0_i32_0 : i32, i32
  }
  func.func @transform_5(%arg0: i32, %arg1: i32) -> (i32, i32) {
    %c0_i32 = arith.constant 0 : i32
    %c0_i32_0 = arith.constant 0 : i32
    %c0_i32_1 = arith.constant 0 : i32
    return %c0_i32, %c0_i32_0 : i32, i32
  }
  func.func @transform_6(%arg0: i32, %arg1: i32) -> (i32, i32) {
    %c0_i32 = arith.constant 0 : i32
    %c0_i32_0 = arith.constant 0 : i32
    %c0_i32_1 = arith.constant 0 : i32
    return %c0_i32, %c0_i32_0 : i32, i32
  }
  func.func @transform_7(%arg0: i32, %arg1: i32) -> (i32, i32) {
    %c0_i32 = arith.constant 0 : i32
    %c0_i32_0 = arith.constant 0 : i32
    %c0_i32_1 = arith.constant 0 : i32
    return %c0_i32, %c0_i32_0 : i32, i32
  }
  func.func @transform_8(%arg0: i32, %arg1: i32) -> (i32, i32) {
    %c0_i32 = arith.constant 0 : i32
    %c0_i32_0 = arith.constant 0 : i32
    %c0_i32_1 = arith.constant 0 : i32
    return %c0_i32, %c0_i32_0 : i32, i32
  }
  func.func @transform_9(%arg0: i32, %arg1: i32) -> (i32, i32, i32) {
    %c0_i32 = arith.constant 0 : i32
    %c0_i32_0 = arith.constant 0 : i32
    return %arg0, %c0_i32, %arg1 : i32, i32, i32
  }
}

</mosaic_0001>

<llo_original>
// kernel: tpu_custom_call.1
$region0: #{tpu_custom_call.1}
  #allocation0 [shape = 'u32[]', space=smem, size = 0x4, offset = 0x4, fixed_abs, tag = 'smem constant byte address 0x4 - core index']
  #allocation1 [shape = 'u32[144,128]{1,0:T(1,128)}', space=vmem, size = 0x12000, scoped, tag = 'internal scratch']
  %s0 = inlined_call_operand.vmem [shape: f32[2,3,256], index: 0, kind: input, shape index: {}]
  %s1 = inlined_call_operand.vmem [shape: f32[2,128,1], index: 1, kind: input, shape index: {}]
  %s2 = inlined_call_operand.vmem [shape: f32[128,3], index: 2, kind: input, shape index: {}]
  %s3 = inlined_call_operand.vmem [shape: bf16[128,128], index: 3, kind: input, shape index: {}]
  %s4 = inlined_call_operand.vmem [shape: f32[128,1], index: 4, kind: input, shape index: {}]
  %s5 = inlined_call_operand.vmem [shape: bf16[128,128], index: 5, kind: input, shape index: {}]
  %s6 = inlined_call_operand.vmem [shape: f32[128,1], index: 6, kind: input, shape index: {}]
  %s7 = inlined_call_operand.vmem [shape: bf16[3,128], index: 7, kind: input, shape index: {}]
  %s8 = inlined_call_operand.vmem [shape: f32[3,1], index: 8, kind: input, shape index: {}]
  %s9 = inlined_call_operand.vmem [shape: f32[2,3,256], index: 9, kind: output, shape index: {}]
  %s10 = sld [smem:[#allocation0]]
  $region69: #{tpu_custom_call.1} parent=0
    _
  %s12 = ssub.s32 1, %s10
  %s13 = scalar_select 0, %s12, %s10
  loop: start=0, step=1, limit=4
  $region2: #{tpu_custom_call.1} parent=0 // loop_pre_header
    _
  $region3: #{tpu_custom_call.1} parent=0 // loop_header
    %s15 = sphi 0, %s19
    %p16 = scmp.ge.s32.totalorder %s15, 4
    %s22 = sphi 0, %s34
    %s23 = sphi 0, %s30
    %s24 = sphi 0, %s22
    %s25 = sphi 0, %s23
    %s26 = sphi 0, %s24
    %s27 = sphi 0, %s25
    %s39 = sphi 0, %s41
    %s42 = sphi 0, %s39
    %s43 = sphi 0, %s42
    %s59 = sphi 0, %s43
    %s65 = sphi 0, %s67
    %s68 = sphi 0, %s65
    %s69 = sphi 0, %s68
    %s85 = sphi 0, %s69
    %s89 = sphi 0, %s89
    %s91 = sphi 0, %s89
    %s92 = sphi 0, %s91
    %s106 = sphi 0, %s92
    %s110 = sphi 0, %s110
    %s112 = sphi 0, %s110
    %s113 = sphi 0, %s112
    %s127 = sphi 0, %s113
    %s131 = sphi 0, %s131
    %s133 = sphi 0, %s131
    %s134 = sphi 0, %s133
    %s148 = sphi 0, %s134
    %s152 = sphi 0, %s152
    %s154 = sphi 0, %s152
    %s155 = sphi 0, %s154
    %s169 = sphi 0, %s155
    %s173 = sphi 0, %s173
    %s175 = sphi 0, %s173
    %s176 = sphi 0, %s175
    %s190 = sphi 0, %s176
    %s194 = sphi 0, %s194
    %s196 = sphi 0, %s194
    %s197 = sphi 0, %s196
    %s211 = sphi 0, %s197
    %s215 = sphi 0, %s215
    %s217 = sphi 0, %s215
    %s218 = sphi 0, %s217
    %s232 = sphi 0, %s218
    %s240 = sphi 0, %s242
    %s243 = sphi 0, %s240
    %s244 = sphi 0, %s243
    %s260 = sphi 0, %s244
  $region4: #{tpu_custom_call.1} parent=0 // loop_header_branch
    %18 = sbr.rel (%p16) target = $region8
  $region5: #{tpu_custom_call.1} parent=0 // loop_body
    %s20 = ssub.s32 %s15, 1
    %s21 = ssub.s32 %s15, 2
    %s28 = sadd.s32 1, %s23
    %p29 = scmp.ge.s32.totalorder %s28, 1
    %s30 = scalar_select %p29, 0, %s28
    %s31 = sadd.s32 1, %s22
    %s32 = scalar_select %p29, %s31, %s22
    %p33 = scmp.ge.s32.totalorder %s32, 2
    %s34 = scalar_select %p33, 0, %s32
    %s35 = ssub.s32 %s22, %s34
    %s36 = ssub.s32 %s23, %s30
    %s37 = sor.u32 %s35, %s36
    %p38 = scmp.eq.s32.totalorder %s37, 0
    %s40 = sadd.s32 %s39, 1
    %s41 = scalar_select %p38, %s39, %s40
    %p44 = pneg %p38
    %p45 = scmp.eq.s32.totalorder %s15, 1
    %p46 = por %p44, %p45
    %p47 = scmp.ne.s32.totalorder %s39, %s42
    %p48 = scmp.eq.s32.totalorder %s15, 0
    %p49 = por %p47, %p48
    %p50 = scmp.ne.s32.totalorder %s39, %s42
    %p51 = scmp.eq.s32.totalorder %s20, 1
    %p52 = por %p50, %p51
    %p53 = scmp.ne.s32.totalorder %s42, %s43
    %p54 = scmp.eq.s32.totalorder %s20, 0
    %p55 = por %p53, %p54
    %p56 = scmp.ne.s32.totalorder %s42, %s43
    %p57 = scmp.eq.s32.totalorder %s21, 1
    %p58 = por %p56, %p57
    %p60 = scmp.ne.s32.totalorder %s43, %s59
    %p61 = scmp.eq.s32.totalorder %s21, 0
    %p62 = por %p60, %p61
    %s63 = ssub.s32 %s22, %s34
    %p64 = scmp.eq.s32.totalorder %s63, 0
    %s66 = sadd.s32 %s65, 1
    %s67 = scalar_select %p64, %s65, %s66
    %p70 = pneg %p64
    %p71 = scmp.eq.s32.totalorder %s15, 1
    %p72 = por %p70, %p71
    %p73 = scmp.ne.s32.totalorder %s65, %s68
    %p74 = scmp.eq.s32.totalorder %s15, 0
    %p75 = por %p73, %p74
    %p76 = scmp.ne.s32.totalorder %s65, %s68
    %p77 = scmp.eq.s32.totalorder %s20, 1
    %p78 = por %p76, %p77
    %p79 = scmp.ne.s32.totalorder %s68, %s69
    %p80 = scmp.eq.s32.totalorder %s20, 0
    %p81 = por %p79, %p80
    %p82 = scmp.ne.s32.totalorder %s68, %s69
    %p83 = scmp.eq.s32.totalorder %s21, 1
    %p84 = por %p82, %p83
    %p86 = scmp.ne.s32.totalorder %s69, %s85
    %p87 = scmp.eq.s32.totalorder %s21, 0
    %p88 = por %p86, %p87
    %s90 = sadd.s32 %s89, 1
    %p93 = scmp.eq.s32.totalorder %s15, 1
    %p94 = scmp.ne.s32.totalorder %s89, %s91
    %p95 = scmp.eq.s32.totalorder %s15, 0
    %p96 = por %p94, %p95
    %p97 = scmp.ne.s32.totalorder %s89, %s91
    %p98 = scmp.eq.s32.totalorder %s20, 1
    %p99 = por %p97, %p98
    %p100 = scmp.ne.s32.totalorder %s91, %s92
    %p101 = scmp.eq.s32.totalorder %s20, 0
    %p102 = por %p100, %p101
    %p103 = scmp.ne.s32.totalorder %s91, %s92
    %p104 = scmp.eq.s32.totalorder %s21, 1
    %p105 = por %p103, %p104
    %p107 = scmp.ne.s32.totalorder %s92, %s106
    %p108 = scmp.eq.s32.totalorder %s21, 0
    %p109 = por %p107, %p108
    %s111 = sadd.s32 %s110, 1
    %p114 = scmp.eq.s32.totalorder %s15, 1
    %p115 = scmp.ne.s32.totalorder %s110, %s112
    %p116 = scmp.eq.s32.totalorder %s15, 0
    %p117 = por %p115, %p116
    %p118 = scmp.ne.s32.totalorder %s110, %s112
    %p119 = scmp.eq.s32.totalorder %s20, 1
    %p120 = por %p118, %p119
    %p121 = scmp.ne.s32.totalorder %s112, %s113
    %p122 = scmp.eq.s32.totalorder %s20, 0
    %p123 = por %p121, %p122
    %p124 = scmp.ne.s32.totalorder %s112, %s113
    %p125 = scmp.eq.s32.totalorder %s21, 1
    %p126 = por %p124, %p125
    %p128 = scmp.ne.s32.totalorder %s113, %s127
    %p129 = scmp.eq.s32.totalorder %s21, 0
    %p130 = por %p128, %p129
    %s132 = sadd.s32 %s131, 1
    %p135 = scmp.eq.s32.totalorder %s15, 1
    %p136 = scmp.ne.s32.totalorder %s131, %s133
    %p137 = scmp.eq.s32.totalorder %s15, 0
    %p138 = por %p136, %p137
    %p139 = scmp.ne.s32.totalorder %s131, %s133
    %p140 = scmp.eq.s32.totalorder %s20, 1
    %p141 = por %p139, %p140
    %p142 = scmp.ne.s32.totalorder %s133, %s134
    %p143 = scmp.eq.s32.totalorder %s20, 0
    %p144 = por %p142, %p143
    %p145 = scmp.ne.s32.totalorder %s133, %s134
    %p146 = scmp.eq.s32.totalorder %s21, 1
    %p147 = por %p145, %p146
    %p149 = scmp.ne.s32.totalorder %s134, %s148
    %p150 = scmp.eq.s32.totalorder %s21, 0
    %p151 = por %p149, %p150
    %s153 = sadd.s32 %s152, 1
    %p156 = scmp.eq.s32.totalorder %s15, 1
    %p157 = scmp.ne.s32.totalorder %s152, %s154
    %p158 = scmp.eq.s32.totalorder %s15, 0
    %p159 = por %p157, %p158
    %p160 = scmp.ne.s32.totalorder %s152, %s154
    %p161 = scmp.eq.s32.totalorder %s20, 1
    %p162 = por %p160, %p161
    %p163 = scmp.ne.s32.totalorder %s154, %s155
    %p164 = scmp.eq.s32.totalorder %s20, 0
    %p165 = por %p163, %p164
    %p166 = scmp.ne.s32.totalorder %s154, %s155
    %p167 = scmp.eq.s32.totalorder %s21, 1
    %p168 = por %p166, %p167
    %p170 = scmp.ne.s32.totalorder %s155, %s169
    %p171 = scmp.eq.s32.totalorder %s21, 0
    %p172 = por %p170, %p171
    %s174 = sadd.s32 %s173, 1
    %p177 = scmp.eq.s32.totalorder %s15, 1
    %p178 = scmp.ne.s32.totalorder %s173, %s175
    %p179 = scmp.eq.s32.totalorder %s15, 0
    %p180 = por %p178, %p179
    %p181 = scmp.ne.s32.totalorder %s173, %s175
    %p182 = scmp.eq.s32.totalorder %s20, 1
    %p183 = por %p181, %p182
    %p184 = scmp.ne.s32.totalorder %s175, %s176
    %p185 = scmp.eq.s32.totalorder %s20, 0
    %p186 = por %p184, %p185
    %p187 = scmp.ne.s32.totalorder %s175, %s176
    %p188 = scmp.eq.s32.totalorder %s21, 1
    %p189 = por %p187, %p188
    %p191 = scmp.ne.s32.totalorder %s176, %s190
    %p192 = scmp.eq.s32.totalorder %s21, 0
    %p193 = por %p191, %p192
    %s195 = sadd.s32 %s194, 1
    %p198 = scmp.eq.s32.totalorder %s15, 1
    %p199 = scmp.ne.s32.totalorder %s194, %s196
    %p200 = scmp.eq.s32.totalorder %s15, 0
    %p201 = por %p199, %p200
    %p202 = scmp.ne.s32.totalorder %s194, %s196
    %p203 = scmp.eq.s32.totalorder %s20, 1
    %p204 = por %p202, %p203
    %p205 = scmp.ne.s32.totalorder %s196, %s197
    %p206 = scmp.eq.s32.totalorder %s20, 0
    %p207 = por %p205, %p206
    %p208 = scmp.ne.s32.totalorder %s196, %s197
    %p209 = scmp.eq.s32.totalorder %s21, 1
    %p210 = por %p208, %p209
    %p212 = scmp.ne.s32.totalorder %s197, %s211
    %p213 = scmp.eq.s32.totalorder %s21, 0
    %p214 = por %p212, %p213
    %s216 = sadd.s32 %s215, 1
    %p219 = scmp.eq.s32.totalorder %s15, 1
    %p220 = scmp.ne.s32.totalorder %s215, %s217
    %p221 = scmp.eq.s32.totalorder %s15, 0
    %p222 = por %p220, %p221
    %p223 = scmp.ne.s32.totalorder %s215, %s217
    %p224 = scmp.eq.s32.totalorder %s20, 1
    %p225 = por %p223, %p224
    %p226 = scmp.ne.s32.totalorder %s217, %s218
    %p227 = scmp.eq.s32.totalorder %s20, 0
    %p228 = por %p226, %p227
    %p229 = scmp.ne.s32.totalorder %s217, %s218
    %p230 = scmp.eq.s32.totalorder %s21, 1
    %p231 = por %p229, %p230
    %p233 = scmp.ne.s32.totalorder %s218, %s232
    %p234 = scmp.eq.s32.totalorder %s21, 0
    %p235 = por %p233, %p234
    %s236 = ssub.s32 %s22, %s34
    %s237 = ssub.s32 %s23, %s30
    %s238 = sor.u32 %s236, %s237
    %p239 = scmp.eq.s32.totalorder %s238, 0
    %s241 = sadd.s32 %s240, 1
    %s242 = scalar_select %p239, %s240, %s241
    %p245 = pneg %p239
    %p246 = scmp.eq.s32.totalorder %s15, 1
    %p247 = por %p245, %p246
    %p248 = scmp.ne.s32.totalorder %s240, %s243
    %p249 = scmp.eq.s32.totalorder %s15, 0
    %p250 = por %p248, %p249
    %p251 = scmp.ne.s32.totalorder %s240, %s243
    %p252 = scmp.eq.s32.totalorder %s20, 1
    %p253 = por %p251, %p252
    %p254 = scmp.ne.s32.totalorder %s243, %s244
    %p255 = scmp.eq.s32.totalorder %s20, 0
    %p256 = por %p254, %p255
    %p257 = scmp.ne.s32.totalorder %s243, %s244
    %p258 = scmp.eq.s32.totalorder %s21, 1
    %p259 = por %p257, %p258
    %p261 = scmp.ne.s32.totalorder %s244, %s260
    %p262 = scmp.eq.s32.totalorder %s21, 0
    %p263 = por %p261, %p262
    %p264 = scmp.le.s32.totalorder 1, %s15
    %p265 = scmp.lt.s32.totalorder %s15, 3
    %p266 = pnand %p264, %p265
    %p267 = pneg %p266
    // Predicated region
    $region9: #{tpu_custom_call.1} parent=5 // pred_check
      _
    $region10: #{tpu_custom_call.1} parent=5 // pred_check_branch
      %269 = sbr.rel (%p266) target = $region12
    $region11: #{tpu_custom_call.1} parent=5 // pred_region
      %s270 = ssub.s32 %s15, 1
      // Predicated region
      $region13: #{tpu_custom_call.1} parent=11 // pred_check
        %p271 = pneg %p81
      $region14: #{tpu_custom_call.1} parent=11 // pred_check_branch
        %273 = sbr.rel (%p271) target = $region16
      $region15: #{tpu_custom_call.1} parent=11 // pred_region
        %p274 = scmp.lt.s32.totalorder %s24, 1
        %s275 = scalar_select %p274, %s24, 1
        %s276 = smul.addr %s275, 16
        %s277 = smul.addr %s276, 8
        %s278 = scalar_lea.vmem %s1, %s277
      $region16: #{tpu_custom_call.1} parent=11 // pred_fallthru
        _
      // Predicated region
      $region17: #{tpu_custom_call.1} parent=11 // pred_check
        %p279 = pneg %p102
      $region18: #{tpu_custom_call.1} parent=11 // pred_check_branch
        %281 = sbr.rel (%p279) target = $region20
      $region19: #{tpu_custom_call.1} parent=11 // pred_region
        _
      $region20: #{tpu_custom_call.1} parent=11 // pred_fallthru
        _
      // Predicated region
      $region21: #{tpu_custom_call.1} parent=11 // pred_check
        %p282 = pneg %p123
      $region22: #{tpu_custom_call.1} parent=11 // pred_check_branch
        %284 = sbr.rel (%p282) target = $region24
      $region23: #{tpu_custom_call.1} parent=11 // pred_region
        _
      $region24: #{tpu_custom_call.1} parent=11 // pred_fallthru
        _
      // Predicated region
      $region25: #{tpu_custom_call.1} parent=11 // pred_check
        %p285 = pneg %p144
      $region26: #{tpu_custom_call.1} parent=11 // pred_check_branch
        %287 = sbr.rel (%p285) target = $region28
      $region27: #{tpu_custom_call.1} parent=11 // pred_region
        _
      $region28: #{tpu_custom_call.1} parent=11 // pred_fallthru
        _
      // Predicated region
      $region29: #{tpu_custom_call.1} parent=11 // pred_check
        %p288 = pneg %p165
      $region30: #{tpu_custom_call.1} parent=11 // pred_check_branch
        %290 = sbr.rel (%p288) target = $region32
      $region31: #{tpu_custom_call.1} parent=11 // pred_region
        _
      $region32: #{tpu_custom_call.1} parent=11 // pred_fallthru
        _
      // Predicated region
      $region33: #{tpu_custom_call.1} parent=11 // pred_check
        %p291 = pneg %p186
      $region34: #{tpu_custom_call.1} parent=11 // pred_check_branch
        %293 = sbr.rel (%p291) target = $region36
      $region35: #{tpu_custom_call.1} parent=11 // pred_region
        _
      $region36: #{tpu_custom_call.1} parent=11 // pred_fallthru
        _
      // Predicated region
      $region37: #{tpu_custom_call.1} parent=11 // pred_check
        %p294 = pneg %p207
      $region38: #{tpu_custom_call.1} parent=11 // pred_check_branch
        %296 = sbr.rel (%p294) target = $region40
      $region39: #{tpu_custom_call.1} parent=11 // pred_region
        _
      $region40: #{tpu_custom_call.1} parent=11 // pred_fallthru
        _
      // Predicated region
      $region41: #{tpu_custom_call.1} parent=11 // pred_check
        %p297 = pneg %p228
      $region42: #{tpu_custom_call.1} parent=11 // pred_check_branch
        %299 = sbr.rel (%p297) target = $region44
      $region43: #{tpu_custom_call.1} parent=11 // pred_region
        _
      $region44: #{tpu_custom_call.1} parent=11 // pred_fallthru
        _
    $region12: #{tpu_custom_call.1} parent=5 // pred_fallthru
      _
    %p300 = scmp.lt.s32.totalorder %s15, 2
    // Predicated region
    $region45: #{tpu_custom_call.1} parent=5 // pred_check
      %p301 = pneg %p300
    $region46: #{tpu_custom_call.1} parent=5 // pred_check_branch
      %303 = sbr.rel (%p301) target = $region48
    $region47: #{tpu_custom_call.1} parent=5 // pred_region
      // Predicated region
      $region49: #{tpu_custom_call.1} parent=47 // pred_check
        %p304 = pneg %p49
      $region50: #{tpu_custom_call.1} parent=47 // pred_check_branch
        %306 = sbr.rel (%p304) target = $region52
      $region51: #{tpu_custom_call.1} parent=47 // pred_region
        %s307 = smul.u32 2, %s23
        %p308 = scmp.lt.s32.totalorder %s22, 1
        %s309 = scalar_select %p308, %s22, 1
        %p310 = scmp.lt.s32.totalorder %s307, 1
        %s311 = scalar_select %p310, %s307, 1
        %s312 = smul.addr %s309, 2
        %s313 = sadd.s32 %s311, %s312
        %s314 = smul.addr %s313, 4
        %s315 = scalar_lea.vmem %s0, %s314
        %s316 = smul.u32 2, %s23
      $region52: #{tpu_custom_call.1} parent=47 // pred_fallthru
        _
    $region48: #{tpu_custom_call.1} parent=5 // pred_fallthru
      _
    %p317 = scmp.le.s32.totalorder 1, %s15
    %p318 = scmp.lt.s32.totalorder %s15, 3
    %p319 = pnand %p317, %p318
    %p320 = pneg %p319
    // Predicated region
    $region53: #{tpu_custom_call.1} parent=5 // pred_check
      _
    $region54: #{tpu_custom_call.1} parent=5 // pred_check_branch
      %322 = sbr.rel (%p319) target = $region56
    $region55: #{tpu_custom_call.1} parent=5 // pred_region
      %s323 = ssub.s32 %s15, 1
      %s324 = smul.u32 2, %s25
      %p325 = scmp.lt.s32.totalorder %s24, 1
      %s326 = scalar_select %p325, %s24, 1
      %p327 = scmp.lt.s32.totalorder %s324, 1
      %s328 = scalar_select %p327, %s324, 1
      %s329 = smul.addr %s326, 2
      %s330 = sadd.s32 %s328, %s329
      %s331 = smul.addr %s330, 4
      %s332 = scalar_lea.vmem %s0, %s331
      %p333 = pneg %p55
      %p334 = pneg %p52
      %p335 = scmp.lt.s32.totalorder %s24, 1
      %s336 = scalar_select %p335, %s24, 1
      %s337 = smul.addr %s336, 16
      %s338 = smul.addr %s337, 8
      %s339 = scalar_lea.vmem %s1, %s338
      %p340 = pneg %p81
      %p341 = pneg %p78
      %p342 = pneg %p102
      %p343 = pneg %p99
      %p344 = pneg %p123
      %p345 = pneg %p120
      %p346 = pneg %p144
      %p347 = pneg %p141
      %p348 = pneg %p165
      %p349 = pneg %p162
      %p350 = pneg %p186
      %p351 = pneg %p183
      %p352 = pneg %p207
      %p353 = pneg %p204
      %p354 = pneg %p228
      %p355 = pneg %p225
      %p356 = pneg %p256
      %p357 = pneg %p253
      %s358 = smul.u32 2, %s25
      %p359 = scmp.lt.s32.totalorder %s24, 1
      %s360 = scalar_select %p359, %s24, 1
      %p361 = scmp.lt.s32.totalorder %s358, 1
      %s362 = scalar_select %p361, %s358, 1
      %s363 = smul.addr %s360, 2
      %s364 = sadd.s32 %s362, %s363
      %s365 = smul.addr %s364, 4
      %s366 = scalar_lea.vmem %s9, %s365
      %s367 = smul.u32 2, %s25
      %p368 = scmp.lt.s32.totalorder %s24, 1
      %s369 = scalar_select %p368, %s24, 1
      %p370 = scmp.lt.s32.totalorder %s367, 1
      %s371 = scalar_select %p370, %s367, 1
      %s372 = smul.addr %s369, 2
      %s373 = sadd.s32 %s371, %s372
      %s374 = smul.addr %s373, 4
      %s375 = scalar_lea.vmem %s0, %s374
      %s376 = smul.u32 2, %s25
      %p377 = scmp.lt.s32.totalorder %s24, 1
      %s378 = scalar_select %p377, %s24, 1
      %s379 = smul.addr %s378, 16
      %s380 = smul.addr %s379, 8
      %s381 = scalar_lea.vmem %s1, %s380
      %s382 = smul.u32 2, %s25
      %p383 = scmp.lt.s32.totalorder %s24, 1
      %s384 = scalar_select %p383, %s24, 1
      %p385 = scmp.lt.s32.totalorder %s382, 1
      %s386 = scalar_select %p385, %s382, 1
      %s387 = smul.addr %s384, 2
      %s388 = sadd.s32 %s386, %s387
      %s389 = smul.addr %s388, 4
      %s390 = scalar_lea.vmem %s9, %s389
      %s391 = smul.u32 2, %s25
      %v393 = vld [vmem:[%s375] sm:$0x77]
      %v394 = vld [vmem:[%s2] sm:$0xff]
      %v395 = vld [vmem:[%s2 + $0x8] sm:$0xff]
      %v396 = vld [vmem:[%s2 + $0x10] sm:$0xff]
      %v397 = vld [vmem:[%s2 + $0x18] sm:$0xff]
      %v398 = vld [vmem:[%s2 + $0x20] sm:$0xff]
      %v399 = vld [vmem:[%s2 + $0x28] sm:$0xff]
      %v400 = vld [vmem:[%s2 + $0x30] sm:$0xff]
      %v401 = vld [vmem:[%s2 + $0x38] sm:$0xff]
      %v402 = vld [vmem:[%s2 + $0x40] sm:$0xff]
      %v403 = vld [vmem:[%s2 + $0x48] sm:$0xff]
      %v404 = vld [vmem:[%s2 + $0x50] sm:$0xff]
      %v405 = vld [vmem:[%s2 + $0x58] sm:$0xff]
      %v406 = vld [vmem:[%s2 + $0x60] sm:$0xff]
      %v407 = vld [vmem:[%s2 + $0x68] sm:$0xff]
      %v408 = vld [vmem:[%s2 + $0x70] sm:$0xff]
      %v409 = vld [vmem:[%s2 + $0x78] sm:$0xff]
      %411 = vset.pattern.permute.xlu0 0
      %412 = vperm.xlu0 %411, %v394
      %v413 = vpop.permute.xlu0 %412
      %416 = vset.pattern.permute.xlu0 0
      %417 = vperm.xlu0 %416, %v395
      %v418 = vpop.permute.xlu0 %417
      %421 = vset.pattern.permute.xlu0 0
      %422 = vperm.xlu0 %421, %v396
      %v423 = vpop.permute.xlu0 %422
      %426 = vset.pattern.permute.xlu0 0
      %427 = vperm.xlu0 %426, %v397
      %v428 = vpop.permute.xlu0 %427
      %431 = vset.pattern.permute.xlu0 0
      %432 = vperm.xlu0 %431, %v398
      %v433 = vpop.permute.xlu0 %432
      %436 = vset.pattern.permute.xlu0 0
      %437 = vperm.xlu0 %436, %v399
      %v438 = vpop.permute.xlu0 %437
      %441 = vset.pattern.permute.xlu0 0
      %442 = vperm.xlu0 %441, %v400
      %v443 = vpop.permute.xlu0 %442
      %446 = vset.pattern.permute.xlu0 0
      %447 = vperm.xlu0 %446, %v401
      %v448 = vpop.permute.xlu0 %447
      %451 = vset.pattern.permute.xlu0 0
      %452 = vperm.xlu0 %451, %v402
      %v453 = vpop.permute.xlu0 %452
      %456 = vset.pattern.permute.xlu0 0
      %457 = vperm.xlu0 %456, %v403
      %v458 = vpop.permute.xlu0 %457
      %461 = vset.pattern.permute.xlu0 0
      %462 = vperm.xlu0 %461, %v404
      %v463 = vpop.permute.xlu0 %462
      %466 = vset.pattern.permute.xlu0 0
      %467 = vperm.xlu0 %466, %v405
      %v468 = vpop.permute.xlu0 %467
      %471 = vset.pattern.permute.xlu0 0
      %472 = vperm.xlu0 %471, %v406
      %v473 = vpop.permute.xlu0 %472
      %476 = vset.pattern.permute.xlu0 0
      %477 = vperm.xlu0 %476, %v407
      %v478 = vpop.permute.xlu0 %477
      %481 = vset.pattern.permute.xlu0 0
      %482 = vperm.xlu0 %481, %v408
      %v483 = vpop.permute.xlu0 %482
      %486 = vset.pattern.permute.xlu0 0
      %487 = vperm.xlu0 %486, %v409
      %v488 = vpop.permute.xlu0 %487
      %v491 = vlaneseq
      %v492 = vshrl.u32 %v491, 7
      %v493 = vsub.s32 0, %v492
      %v494 = vrot.slane %v393, %v493
      %v495 = vlaneseq
      %v496 = vshrl.u32 %v495, 7
      %v497 = vsub.s32 4, %v496
      %v498 = vrot.slane %v393, %v497
      %v501 = vlaneseq
      %v502 = vshrl.u32 %v501, 7
      %v503 = vsub.s32 0, %v502
      %v504 = vrot.slane %v494, %v503
      %v505 = vlaneseq
      %v506 = vshrl.u32 %v505, 7
      %v507 = vsub.s32 0, %v506
      %v508 = vrot.slane %v498, %v507
      %v509 = vmul.f32 %v413, %v504
      %v510 = vmul.f32 %v413, %v508
      %v511 = vmul.f32 %v418, %v504
      %v512 = vmul.f32 %v418, %v508
      %v513 = vmul.f32 %v423, %v504
      %v514 = vmul.f32 %v423, %v508
      %v515 = vmul.f32 %v428, %v504
      %v516 = vmul.f32 %v428, %v508
      %v517 = vmul.f32 %v433, %v504
      %v518 = vmul.f32 %v433, %v508
      %v519 = vmul.f32 %v438, %v504
      %v520 = vmul.f32 %v438, %v508
      %v521 = vmul.f32 %v443, %v504
      %v522 = vmul.f32 %v443, %v508
      %v523 = vmul.f32 %v448, %v504
      %v524 = vmul.f32 %v448, %v508
      %v525 = vmul.f32 %v453, %v504
      %v526 = vmul.f32 %v453, %v508
      %v527 = vmul.f32 %v458, %v504
      %v528 = vmul.f32 %v458, %v508
      %v529 = vmul.f32 %v463, %v504
      %v530 = vmul.f32 %v463, %v508
      %v531 = vmul.f32 %v468, %v504
      %v532 = vmul.f32 %v468, %v508
      %v533 = vmul.f32 %v473, %v504
      %v534 = vmul.f32 %v473, %v508
      %v535 = vmul.f32 %v478, %v504
      %v536 = vmul.f32 %v478, %v508
      %v537 = vmul.f32 %v483, %v504
      %v538 = vmul.f32 %v483, %v508
      %v539 = vmul.f32 %v488, %v504
      %v540 = vmul.f32 %v488, %v508
      %541 = vset.pattern.permute.xlu0 1
      %542 = vperm.xlu0 %541, %v394
      %v543 = vpop.permute.xlu0 %542
      %545 = vset.pattern.permute.xlu0 1
      %546 = vperm.xlu0 %545, %v395
      %v547 = vpop.permute.xlu0 %546
      %549 = vset.pattern.permute.xlu0 1
      %550 = vperm.xlu0 %549, %v396
      %v551 = vpop.permute.xlu0 %550
      %553 = vset.pattern.permute.xlu0 1
      %554 = vperm.xlu0 %553, %v397
      %v555 = vpop.permute.xlu0 %554
      %557 = vset.pattern.permute.xlu0 1
      %558 = vperm.xlu0 %557, %v398
      %v559 = vpop.permute.xlu0 %558
      %561 = vset.pattern.permute.xlu0 1
      %562 = vperm.xlu0 %561, %v399
      %v563 = vpop.permute.xlu0 %562
      %565 = vset.pattern.permute.xlu0 1
      %566 = vperm.xlu0 %565, %v400
      %v567 = vpop.permute.xlu0 %566
      %569 = vset.pattern.permute.xlu0 1
      %570 = vperm.xlu0 %569, %v401
      %v571 = vpop.permute.xlu0 %570
      %573 = vset.pattern.permute.xlu0 1
      %574 = vperm.xlu0 %573, %v402
      %v575 = vpop.permute.xlu0 %574
      %577 = vset.pattern.permute.xlu0 1
      %578 = vperm.xlu0 %577, %v403
      %v579 = vpop.permute.xlu0 %578
      %581 = vset.pattern.permute.xlu0 1
      %582 = vperm.xlu0 %581, %v404
      %v583 = vpop.permute.xlu0 %582
      %585 = vset.pattern.permute.xlu0 1
      %586 = vperm.xlu0 %585, %v405
      %v587 = vpop.permute.xlu0 %586
      %589 = vset.pattern.permute.xlu0 1
      %590 = vperm.xlu0 %589, %v406
      %v591 = vpop.permute.xlu0 %590
      %593 = vset.pattern.permute.xlu0 1
      %594 = vperm.xlu0 %593, %v407
      %v595 = vpop.permute.xlu0 %594
      %597 = vset.pattern.permute.xlu0 1
      %598 = vperm.xlu0 %597, %v408
      %v599 = vpop.permute.xlu0 %598
      %601 = vset.pattern.permute.xlu0 1
      %602 = vperm.xlu0 %601, %v409
      %v603 = vpop.permute.xlu0 %602
      %v605 = vlaneseq
      %v606 = vshrl.u32 %v605, 7
      %v607 = vsub.s32 1, %v606
      %v608 = vrot.slane %v393, %v607
      %v609 = vlaneseq
      %v610 = vshrl.u32 %v609, 7
      %v611 = vsub.s32 5, %v610
      %v612 = vrot.slane %v393, %v611
      %v615 = vlaneseq
      %v616 = vshrl.u32 %v615, 7
      %v617 = vsub.s32 1, %v616
      %v618 = vrot.slane %v608, %v617
      %v619 = vlaneseq
      %v620 = vshrl.u32 %v619, 7
      %v621 = vsub.s32 1, %v620
      %v622 = vrot.slane %v612, %v621
      %v623 = vmul.f32 %v543, %v618
      %v624 = vmul.f32 %v543, %v622
      %v625 = vmul.f32 %v547, %v618
      %v626 = vmul.f32 %v547, %v622
      %v627 = vmul.f32 %v551, %v618
      %v628 = vmul.f32 %v551, %v622
      %v629 = vmul.f32 %v555, %v618
      %v630 = vmul.f32 %v555, %v622
      %v631 = vmul.f32 %v559, %v618
      %v632 = vmul.f32 %v559, %v622
      %v633 = vmul.f32 %v563, %v618
      %v634 = vmul.f32 %v563, %v622
      %v635 = vmul.f32 %v567, %v618
      %v636 = vmul.f32 %v567, %v622
      %v637 = vmul.f32 %v571, %v618
      %v638 = vmul.f32 %v571, %v622
      %v639 = vmul.f32 %v575, %v618
      %v640 = vmul.f32 %v575, %v622
      %v641 = vmul.f32 %v579, %v618
      %v642 = vmul.f32 %v579, %v622
      %v643 = vmul.f32 %v583, %v618
      %v644 = vmul.f32 %v583, %v622
      %v645 = vmul.f32 %v587, %v618
      %v646 = vmul.f32 %v587, %v622
      %v647 = vmul.f32 %v591, %v618
      %v648 = vmul.f32 %v591, %v622
      %v649 = vmul.f32 %v595, %v618
      %v650 = vmul.f32 %v595, %v622
      %v651 = vmul.f32 %v599, %v618
      %v652 = vmul.f32 %v599, %v622
      %v653 = vmul.f32 %v603, %v618
      %v654 = vmul.f32 %v603, %v622
      %v655 = vadd.f32 %v509, %v623
      %v656 = vadd.f32 %v510, %v624
      %v657 = vadd.f32 %v511, %v625
      %v658 = vadd.f32 %v512, %v626
      %v659 = vadd.f32 %v513, %v627
      %v660 = vadd.f32 %v514, %v628
      %v661 = vadd.f32 %v515, %v629
      %v662 = vadd.f32 %v516, %v630
      %v663 = vadd.f32 %v517, %v631
      %v664 = vadd.f32 %v518, %v632
      %v665 = vadd.f32 %v519, %v633
      %v666 = vadd.f32 %v520, %v634
      %v667 = vadd.f32 %v521, %v635
      %v668 = vadd.f32 %v522, %v636
      %v669 = vadd.f32 %v523, %v637
      %v670 = vadd.f32 %v524, %v638
      %v671 = vadd.f32 %v525, %v639
      %v672 = vadd.f32 %v526, %v640
      %v673 = vadd.f32 %v527, %v641
      %v674 = vadd.f32 %v528, %v642
      %v675 = vadd.f32 %v529, %v643
      %v676 = vadd.f32 %v530, %v644
      %v677 = vadd.f32 %v531, %v645
      %v678 = vadd.f32 %v532, %v646
      %v679 = vadd.f32 %v533, %v647
      %v680 = vadd.f32 %v534, %v648
      %v681 = vadd.f32 %v535, %v649
      %v682 = vadd.f32 %v536, %v650
      %v683 = vadd.f32 %v537, %v651
      %v684 = vadd.f32 %v538, %v652
      %v685 = vadd.f32 %v539, %v653
      %v686 = vadd.f32 %v540, %v654
      %687 = vset.pattern.permute.xlu0 2
      %688 = vperm.xlu0 %687, %v394
      %v689 = vpop.permute.xlu0 %688
      %691 = vset.pattern.permute.xlu0 2
      %692 = vperm.xlu0 %691, %v395
      %v693 = vpop.permute.xlu0 %692
      %695 = vset.pattern.permute.xlu0 2
      %696 = vperm.xlu0 %695, %v396
      %v697 = vpop.permute.xlu0 %696
      %699 = vset.pattern.permute.xlu0 2
      %700 = vperm.xlu0 %699, %v397
      %v701 = vpop.permute.xlu0 %700
      %703 = vset.pattern.permute.xlu0 2
      %704 = vperm.xlu0 %703, %v398
      %v705 = vpop.permute.xlu0 %704
      %707 = vset.pattern.permute.xlu0 2
      %708 = vperm.xlu0 %707, %v399
      %v709 = vpop.permute.xlu0 %708
      %711 = vset.pattern.permute.xlu0 2
      %712 = vperm.xlu0 %711, %v400
      %v713 = vpop.permute.xlu0 %712
      %715 = vset.pattern.permute.xlu0 2
      %716 = vperm.xlu0 %715, %v401
      %v717 = vpop.permute.xlu0 %716
      %719 = vset.pattern.permute.xlu0 2
      %720 = vperm.xlu0 %719, %v402
      %v721 = vpop.permute.xlu0 %720
      %723 = vset.pattern.permute.xlu0 2
      %724 = vperm.xlu0 %723, %v403
      %v725 = vpop.permute.xlu0 %724
      %727 = vset.pattern.permute.xlu0 2
      %728 = vperm.xlu0 %727, %v404
      %v729 = vpop.permute.xlu0 %728
      %731 = vset.pattern.permute.xlu0 2
      %732 = vperm.xlu0 %731, %v405
      %v733 = vpop.permute.xlu0 %732
      %735 = vset.pattern.permute.xlu0 2
      %736 = vperm.xlu0 %735, %v406
      %v737 = vpop.permute.xlu0 %736
      %739 = vset.pattern.permute.xlu0 2
      %740 = vperm.xlu0 %739, %v407
      %v741 = vpop.permute.xlu0 %740
      %743 = vset.pattern.permute.xlu0 2
      %744 = vperm.xlu0 %743, %v408
      %v745 = vpop.permute.xlu0 %744
      %747 = vset.pattern.permute.xlu0 2
      %748 = vperm.xlu0 %747, %v409
      %v749 = vpop.permute.xlu0 %748
      %v751 = vlaneseq
      %v752 = vshrl.u32 %v751, 7
      %v753 = vsub.s32 2, %v752
      %v754 = vrot.slane %v393, %v753
      %v755 = vlaneseq
      %v756 = vshrl.u32 %v755, 7
      %v757 = vsub.s32 6, %v756
      %v758 = vrot.slane %v393, %v757
      %v761 = vlaneseq
      %v762 = vshrl.u32 %v761, 7
      %v763 = vsub.s32 2, %v762
      %v764 = vrot.slane %v754, %v763
      %v765 = vlaneseq
      %v766 = vshrl.u32 %v765, 7
      %v767 = vsub.s32 2, %v766
      %v768 = vrot.slane %v758, %v767
      %v769 = vmul.f32 %v689, %v764
      %v770 = vmul.f32 %v689, %v768
      %v771 = vmul.f32 %v693, %v764
      %v772 = vmul.f32 %v693, %v768
      %v773 = vmul.f32 %v697, %v764
      %v774 = vmul.f32 %v697, %v768
      %v775 = vmul.f32 %v701, %v764
      %v776 = vmul.f32 %v701, %v768
      %v777 = vmul.f32 %v705, %v764
      %v778 = vmul.f32 %v705, %v768
      %v779 = vmul.f32 %v709, %v764
      %v780 = vmul.f32 %v709, %v768
      %v781 = vmul.f32 %v713, %v764
      %v782 = vmul.f32 %v713, %v768
      %v783 = vmul.f32 %v717, %v764
      %v784 = vmul.f32 %v717, %v768
      %v785 = vmul.f32 %v721, %v764
      %v786 = vmul.f32 %v721, %v768
      %v787 = vmul.f32 %v725, %v764
      %v788 = vmul.f32 %v725, %v768
      %v789 = vmul.f32 %v729, %v764
      %v790 = vmul.f32 %v729, %v768
      %v791 = vmul.f32 %v733, %v764
      %v792 = vmul.f32 %v733, %v768
      %v793 = vmul.f32 %v737, %v764
      %v794 = vmul.f32 %v737, %v768
      %v795 = vmul.f32 %v741, %v764
      %v796 = vmul.f32 %v741, %v768
      %v797 = vmul.f32 %v745, %v764
      %v798 = vmul.f32 %v745, %v768
      %v799 = vmul.f32 %v749, %v764
      %v800 = vmul.f32 %v749, %v768
      %v801 = vadd.f32 %v655, %v769
      %v802 = vadd.f32 %v656, %v770
      %v803 = vadd.f32 %v657, %v771
      %v804 = vadd.f32 %v658, %v772
      %v805 = vadd.f32 %v659, %v773
      %v806 = vadd.f32 %v660, %v774
      %v807 = vadd.f32 %v661, %v775
      %v808 = vadd.f32 %v662, %v776
      %v809 = vadd.f32 %v663, %v777
      %v810 = vadd.f32 %v664, %v778
      %v811 = vadd.f32 %v665, %v779
      %v812 = vadd.f32 %v666, %v780
      %v813 = vadd.f32 %v667, %v781
      %v814 = vadd.f32 %v668, %v782
      %v815 = vadd.f32 %v669, %v783
      %v816 = vadd.f32 %v670, %v784
      %v817 = vadd.f32 %v671, %v785
      %v818 = vadd.f32 %v672, %v786
      %v819 = vadd.f32 %v673, %v787
      %v820 = vadd.f32 %v674, %v788
      %v821 = vadd.f32 %v675, %v789
      %v822 = vadd.f32 %v676, %v790
      %v823 = vadd.f32 %v677, %v791
      %v824 = vadd.f32 %v678, %v792
      %v825 = vadd.f32 %v679, %v793
      %v826 = vadd.f32 %v680, %v794
      %v827 = vadd.f32 %v681, %v795
      %v828 = vadd.f32 %v682, %v796
      %v829 = vadd.f32 %v683, %v797
      %v830 = vadd.f32 %v684, %v798
      %v831 = vadd.f32 %v685, %v799
      %v832 = vadd.f32 %v686, %v800
      %v833 = vld [vmem:[%s381] sm:$0xff]
      %v834 = vld [vmem:[%s381 + $0x8] sm:$0xff]
      %v835 = vld [vmem:[%s381 + $0x10] sm:$0xff]
      %v836 = vld [vmem:[%s381 + $0x18] sm:$0xff]
      %v837 = vld [vmem:[%s381 + $0x20] sm:$0xff]
      %v838 = vld [vmem:[%s381 + $0x28] sm:$0xff]
      %v839 = vld [vmem:[%s381 + $0x30] sm:$0xff]
      %v840 = vld [vmem:[%s381 + $0x38] sm:$0xff]
      %v841 = vld [vmem:[%s381 + $0x40] sm:$0xff]
      %v842 = vld [vmem:[%s381 + $0x48] sm:$0xff]
      %v843 = vld [vmem:[%s381 + $0x50] sm:$0xff]
      %v844 = vld [vmem:[%s381 + $0x58] sm:$0xff]
      %v845 = vld [vmem:[%s381 + $0x60] sm:$0xff]
      %v846 = vld [vmem:[%s381 + $0x68] sm:$0xff]
      %v847 = vld [vmem:[%s381 + $0x70] sm:$0xff]
      %v848 = vld [vmem:[%s381 + $0x78] sm:$0xff]
      %850 = vset.pattern.permute.xlu0 0
      %851 = vperm.xlu0 %850, %v833
      %v852 = vpop.permute.xlu0 %851
      %855 = vset.pattern.permute.xlu0 0
      %856 = vperm.xlu0 %855, %v834
      %v857 = vpop.permute.xlu0 %856
      %860 = vset.pattern.permute.xlu0 0
      %861 = vperm.xlu0 %860, %v835
      %v862 = vpop.permute.xlu0 %861
      %865 = vset.pattern.permute.xlu0 0
      %866 = vperm.xlu0 %865, %v836
      %v867 = vpop.permute.xlu0 %866
      %870 = vset.pattern.permute.xlu0 0
      %871 = vperm.xlu0 %870, %v837
      %v872 = vpop.permute.xlu0 %871
      %875 = vset.pattern.permute.xlu0 0
      %876 = vperm.xlu0 %875, %v838
      %v877 = vpop.permute.xlu0 %876
      %880 = vset.pattern.permute.xlu0 0
      %881 = vperm.xlu0 %880, %v839
      %v882 = vpop.permute.xlu0 %881
      %885 = vset.pattern.permute.xlu0 0
      %886 = vperm.xlu0 %885, %v840
      %v887 = vpop.permute.xlu0 %886
      %890 = vset.pattern.permute.xlu0 0
      %891 = vperm.xlu0 %890, %v841
      %v892 = vpop.permute.xlu0 %891
      %895 = vset.pattern.permute.xlu0 0
      %896 = vperm.xlu0 %895, %v842
      %v897 = vpop.permute.xlu0 %896
      %900 = vset.pattern.permute.xlu0 0
      %901 = vperm.xlu0 %900, %v843
      %v902 = vpop.permute.xlu0 %901
      %905 = vset.pattern.permute.xlu0 0
      %906 = vperm.xlu0 %905, %v844
      %v907 = vpop.permute.xlu0 %906
      %910 = vset.pattern.permute.xlu0 0
      %911 = vperm.xlu0 %910, %v845
      %v912 = vpop.permute.xlu0 %911
      %915 = vset.pattern.permute.xlu0 0
      %916 = vperm.xlu0 %915, %v846
      %v917 = vpop.permute.xlu0 %916
      %920 = vset.pattern.permute.xlu0 0
      %921 = vperm.xlu0 %920, %v847
      %v922 = vpop.permute.xlu0 %921
      %925 = vset.pattern.permute.xlu0 0
      %926 = vperm.xlu0 %925, %v848
      %v927 = vpop.permute.xlu0 %926
      %v929 = vadd.f32 %v801, %v852
      %v930 = vadd.f32 %v802, %v852
      %v931 = vadd.f32 %v803, %v857
      %v932 = vadd.f32 %v804, %v857
      %v933 = vadd.f32 %v805, %v862
      %v934 = vadd.f32 %v806, %v862
      %v935 = vadd.f32 %v807, %v867
      %v936 = vadd.f32 %v808, %v867
      %v937 = vadd.f32 %v809, %v872
      %v938 = vadd.f32 %v810, %v872
      %v939 = vadd.f32 %v811, %v877
      %v940 = vadd.f32 %v812, %v877
      %v941 = vadd.f32 %v813, %v882
      %v942 = vadd.f32 %v814, %v882
      %v943 = vadd.f32 %v815, %v887
      %v944 = vadd.f32 %v816, %v887
      %v945 = vadd.f32 %v817, %v892
      %v946 = vadd.f32 %v818, %v892
      %v947 = vadd.f32 %v819, %v897
      %v948 = vadd.f32 %v820, %v897
      %v949 = vadd.f32 %v821, %v902
      %v950 = vadd.f32 %v822, %v902
      %v951 = vadd.f32 %v823, %v907
      %v952 = vadd.f32 %v824, %v907
      %v953 = vadd.f32 %v825, %v912
      %v954 = vadd.f32 %v826, %v912
      %v955 = vadd.f32 %v827, %v917
      %v956 = vadd.f32 %v828, %v917
      %v957 = vadd.f32 %v829, %v922
      %v958 = vadd.f32 %v830, %v922
      %v959 = vadd.f32 %v831, %v927
      %v960 = vadd.f32 %v832, %v927
      %v961 = vmax.f32 %v929, 0.0
      %v962 = vmax.f32 %v930, 0.0
      %v963 = vmax.f32 %v931, 0.0
      %v964 = vmax.f32 %v932, 0.0
      %v965 = vmax.f32 %v933, 0.0
      %v966 = vmax.f32 %v934, 0.0
      %v967 = vmax.f32 %v935, 0.0
      %v968 = vmax.f32 %v936, 0.0
      %v969 = vmax.f32 %v937, 0.0
      %v970 = vmax.f32 %v938, 0.0
      %v971 = vmax.f32 %v939, 0.0
      %v972 = vmax.f32 %v940, 0.0
      %v973 = vmax.f32 %v941, 0.0
      %v974 = vmax.f32 %v942, 0.0
      %v975 = vmax.f32 %v943, 0.0
      %v976 = vmax.f32 %v944, 0.0
      %v977 = vmax.f32 %v945, 0.0
      %v978 = vmax.f32 %v946, 0.0
      %v979 = vmax.f32 %v947, 0.0
      %v980 = vmax.f32 %v948, 0.0
      %v981 = vmax.f32 %v949, 0.0
      %v982 = vmax.f32 %v950, 0.0
      %v983 = vmax.f32 %v951, 0.0
      %v984 = vmax.f32 %v952, 0.0
      %v985 = vmax.f32 %v953, 0.0
      %v986 = vmax.f32 %v954, 0.0
      %v987 = vmax.f32 %v955, 0.0
      %v988 = vmax.f32 %v956, 0.0
      %v989 = vmax.f32 %v957, 0.0
      %v990 = vmax.f32 %v958, 0.0
      %v991 = vmax.f32 %v959, 0.0
      %v992 = vmax.f32 %v960, 0.0
      %v993 = vld [vmem:[%s3] sm:$0xf]
      %v994 = vld [vmem:[%s3 + $0x4] sm:$0xf]
      %v995 = vld [vmem:[%s3 + $0x8] sm:$0xf]
      %v996 = vld [vmem:[%s3 + $0xc] sm:$0xf]
      %v997 = vld [vmem:[%s3 + $0x10] sm:$0xf]
      %v998 = vld [vmem:[%s3 + $0x14] sm:$0xf]
      %v999 = vld [vmem:[%s3 + $0x18] sm:$0xf]
      %v1000 = vld [vmem:[%s3 + $0x1c] sm:$0xf]
      %v1001 = vld [vmem:[%s3 + $0x20] sm:$0xf]
      %v1002 = vld [vmem:[%s3 + $0x24] sm:$0xf]
      %v1003 = vld [vmem:[%s3 + $0x28] sm:$0xf]
      %v1004 = vld [vmem:[%s3 + $0x2c] sm:$0xf]
      %v1005 = vld [vmem:[%s3 + $0x30] sm:$0xf]
      %v1006 = vld [vmem:[%s3 + $0x34] sm:$0xf]
      %v1007 = vld [vmem:[%s3 + $0x38] sm:$0xf]
      %v1008 = vld [vmem:[%s3 + $0x3c] sm:$0xf]
      %v1009 = vpack.c.bf16 %v963, %v961
      %v1010 = vpack.c.bf16 %v964, %v962
      %v1011 = vpack.c.bf16 %v967, %v965
      %v1012 = vpack.c.bf16 %v968, %v966
      %v1013 = vpack.c.bf16 %v971, %v969
      %v1014 = vpack.c.bf16 %v972, %v970
      %v1015 = vpack.c.bf16 %v975, %v973
      %v1016 = vpack.c.bf16 %v976, %v974
      %v1017 = vpack.c.bf16 %v979, %v977
      %v1018 = vpack.c.bf16 %v980, %v978
      %v1019 = vpack.c.bf16 %v983, %v981
      %v1020 = vpack.c.bf16 %v984, %v982
      %v1021 = vpack.c.bf16 %v987, %v985
      %v1022 = vpack.c.bf16 %v988, %v986
      %v1023 = vpack.c.bf16 %v991, %v989
      %v1024 = vpack.c.bf16 %v992, %v990
      %v1025 = vld [vmem:[%s4] sm:$0xff]
      %v1026 = vld [vmem:[%s4 + $0x8] sm:$0xff]
      %v1027 = vld [vmem:[%s4 + $0x10] sm:$0xff]
      %v1028 = vld [vmem:[%s4 + $0x18] sm:$0xff]
      %v1029 = vld [vmem:[%s4 + $0x20] sm:$0xff]
      %v1030 = vld [vmem:[%s4 + $0x28] sm:$0xff]
      %v1031 = vld [vmem:[%s4 + $0x30] sm:$0xff]
      %v1032 = vld [vmem:[%s4 + $0x38] sm:$0xff]
      %v1033 = vld [vmem:[%s4 + $0x40] sm:$0xff]
      %v1034 = vld [vmem:[%s4 + $0x48] sm:$0xff]
      %v1035 = vld [vmem:[%s4 + $0x50] sm:$0xff]
      %v1036 = vld [vmem:[%s4 + $0x58] sm:$0xff]
      %v1037 = vld [vmem:[%s4 + $0x60] sm:$0xff]
      %v1038 = vld [vmem:[%s4 + $0x68] sm:$0xff]
      %v1039 = vld [vmem:[%s4 + $0x70] sm:$0xff]
      %v1040 = vld [vmem:[%s4 + $0x78] sm:$0xff]
      %1042 = vset.pattern.permute.xlu0 0
      %1043 = vperm.xlu0 %1042, %v1025
      %v1044 = vpop.permute.xlu0 %1043
      %1047 = vset.pattern.permute.xlu0 0
      %1048 = vperm.xlu0 %1047, %v1026
      %v1049 = vpop.permute.xlu0 %1048
      %1052 = vset.pattern.permute.xlu0 0
      %1053 = vperm.xlu0 %1052, %v1027
      %v1054 = vpop.permute.xlu0 %1053
      %1057 = vset.pattern.permute.xlu0 0
      %1058 = vperm.xlu0 %1057, %v1028
      %v1059 = vpop.permute.xlu0 %1058
      %1062 = vset.pattern.permute.xlu0 0
      %1063 = vperm.xlu0 %1062, %v1029
      %v1064 = vpop.permute.xlu0 %1063
      %1067 = vset.pattern.permute.xlu0 0
      %1068 = vperm.xlu0 %1067, %v1030
      %v1069 = vpop.permute.xlu0 %1068
      %1072 = vset.pattern.permute.xlu0 0
      %1073 = vperm.xlu0 %1072, %v1031
      %v1074 = vpop.permute.xlu0 %1073
      %1077 = vset.pattern.permute.xlu0 0
      %1078 = vperm.xlu0 %1077, %v1032
      %v1079 = vpop.permute.xlu0 %1078
      %1082 = vset.pattern.permute.xlu0 0
      %1083 = vperm.xlu0 %1082, %v1033
      %v1084 = vpop.permute.xlu0 %1083
      %1087 = vset.pattern.permute.xlu0 0
      %1088 = vperm.xlu0 %1087, %v1034
      %v1089 = vpop.permute.xlu0 %1088
      %1092 = vset.pattern.permute.xlu0 0
      %1093 = vperm.xlu0 %1092, %v1035
      %v1094 = vpop.permute.xlu0 %1093
      %1097 = vset.pattern.permute.xlu0 0
      %1098 = vperm.xlu0 %1097, %v1036
      %v1099 = vpop.permute.xlu0 %1098
      %1102 = vset.pattern.permute.xlu0 0
      %1103 = vperm.xlu0 %1102, %v1037
      %v1104 = vpop.permute.xlu0 %1103
      %1107 = vset.pattern.permute.xlu0 0
      %1108 = vperm.xlu0 %1107, %v1038
      %v1109 = vpop.permute.xlu0 %1108
      %1112 = vset.pattern.permute.xlu0 0
      %1113 = vperm.xlu0 %1112, %v1039
      %v1114 = vpop.permute.xlu0 %1113
      %1117 = vset.pattern.permute.xlu0 0
      %1118 = vperm.xlu0 %1117, %v1040
      %v1119 = vpop.permute.xlu0 %1118
      %v1137 = vunpack.c.l.b16 %v993
      %v1138 = vunpack.c.l.b16 %v994
      %v1139 = vunpack.c.l.b16 %v995
      %v1140 = vunpack.c.l.b16 %v996
      %v1141 = vunpack.c.l.b16 %v997
      %v1142 = vunpack.c.l.b16 %v998
      %v1143 = vunpack.c.l.b16 %v999
      %v1144 = vunpack.c.l.b16 %v1000
      %v1145 = vunpack.c.l.b16 %v1001
      %v1146 = vunpack.c.l.b16 %v1002
      %v1147 = vunpack.c.l.b16 %v1003
      %v1148 = vunpack.c.l.b16 %v1004
      %v1149 = vunpack.c.l.b16 %v1005
      %v1150 = vunpack.c.l.b16 %v1006
      %v1151 = vunpack.c.l.b16 %v1007
      %v1152 = vunpack.c.l.b16 %v1008
      %v1153 = vpack.c.b16 %v1138, %v1137
      %v1154 = vpack.c.b16 %v1140, %v1139
      %v1155 = vpack.c.b16 %v1142, %v1141
      %v1156 = vpack.c.b16 %v1144, %v1143
      %v1157 = vpack.c.b16 %v1146, %v1145
      %v1158 = vpack.c.b16 %v1148, %v1147
      %v1159 = vpack.c.b16 %v1150, %v1149
      %v1160 = vpack.c.b16 %v1152, %v1151
      %1169 = vmatprep.subr.bf16.mxu0 %v1024
      %1170 = vmatpush1.bf16.msra.mxu0 %v1023
      %1171 = vmatprep.subr.bf16.mxu0 %v1022
      %1172 = vmatpush1.bf16.msra.mxu0 %v1021
      %1173 = vmatprep.subr.bf16.mxu0 %v1020
      %1174 = vmatpush1.bf16.msra.mxu0 %v1019
      %1175 = vmatprep.subr.bf16.mxu0 %v1018
      %1176 = vmatpush1.bf16.msra.mxu0 %v1017
      %1177 = vmatprep.subr.bf16.mxu0 %v1016
      %1178 = vmatpush1.bf16.msra.mxu0 %v1015
      %1179 = vmatprep.subr.bf16.mxu0 %v1014
      %1180 = vmatpush1.bf16.msra.mxu0 %v1013
      %1181 = vmatprep.subr.bf16.mxu0 %v1012
      %1182 = vmatpush1.bf16.msra.mxu0 %v1011
      %1183 = vmatprep.subr.bf16.mxu0 %v1010
      %1184 = vmatpush1.bf16.msra.mxu0 %v1009
      %1185 = vmatprep.subr.bf16.mxu0 0
      %1186 = vmatpush2.bf16.msra.mxu0 0
      %1187 = vmatprep.subr.bf16.mxu0 0
      %1188 = vmatpush2.bf16.msra.mxu0 0
      %1189 = vmatprep.subr.bf16.mxu0 0
      %1190 = vmatpush2.bf16.msra.mxu0 0
      %1191 = vmatprep.subr.bf16.mxu0 0
      %1192 = vmatpush2.bf16.msra.mxu0 0
      %1193 = vmatprep.subr.bf16.mxu0 0
      %1194 = vmatpush2.bf16.msra.mxu0 0
      %1195 = vmatprep.subr.bf16.mxu0 0
      %1196 = vmatpush2.bf16.msra.mxu0 0
      %1197 = vmatprep.subr.bf16.mxu0 0
      %1198 = vmatpush2.bf16.msra.mxu0 0
      %1199 = vmatprep.subr.bf16.mxu0 0
      %1200 = vmatpush2.bf16.msra.mxu0 0
      %1201 = vmatprep.mubr.bf16.mxu0 0
      %1202 = vmatmul.mubr.bf16.gmra.mxu0 %v1153
      %v1203 = vpop.f32.mrf.mxu0
      %v1204 = vadd.f32 %v1044, %v1203
      %v1205 = vpop.f32.mrf.mxu0
      %v1206 = vadd.f32 %v1044, %v1205
      %v1207 = vpop.f32.mrf.mxu0
      %v1208 = vadd.f32 %v1049, %v1207
      %v1209 = vpop.f32.mrf.mxu0
      %v1210 = vadd.f32 %v1049, %v1209
      %1211 = vmatprep.mubr.bf16.mxu0 0
      %1212 = vmatmul.mubr.bf16.gmra.mxu0 %v1154
      %v1213 = vpop.f32.mrf.mxu0
      %v1214 = vadd.f32 %v1054, %v1213
      %v1215 = vpop.f32.mrf.mxu0
      %v1216 = vadd.f32 %v1054, %v1215
      %v1217 = vpop.f32.mrf.mxu0
      %v1218 = vadd.f32 %v1059, %v1217
      %v1219 = vpop.f32.mrf.mxu0
      %v1220 = vadd.f32 %v1059, %v1219
      %1221 = vmatprep.mubr.bf16.mxu0 0
      %1222 = vmatmul.mubr.bf16.gmra.mxu0 %v1155
      %v1223 = vpop.f32.mrf.mxu0
      %v1224 = vadd.f32 %v1064, %v1223
      %v1225 = vpop.f32.mrf.mxu0
      %v1226 = vadd.f32 %v1064, %v1225
      %v1227 = vpop.f32.mrf.mxu0
      %v1228 = vadd.f32 %v1069, %v1227
      %v1229 = vpop.f32.mrf.mxu0
      %v1230 = vadd.f32 %v1069, %v1229
      %1231 = vmatprep.mubr.bf16.mxu0 0
      %1232 = vmatmul.mubr.bf16.gmra.mxu0 %v1156
      %v1233 = vpop.f32.mrf.mxu0
      %v1234 = vadd.f32 %v1074, %v1233
      %v1235 = vpop.f32.mrf.mxu0
      %v1236 = vadd.f32 %v1074, %v1235
      %v1237 = vpop.f32.mrf.mxu0
      %v1238 = vadd.f32 %v1079, %v1237
      %v1239 = vpop.f32.mrf.mxu0
      %v1240 = vadd.f32 %v1079, %v1239
      %1241 = vmatprep.mubr.bf16.mxu0 0
      %1242 = vmatmul.mubr.bf16.gmra.mxu0 %v1157
      %v1243 = vpop.f32.mrf.mxu0
      %v1244 = vadd.f32 %v1084, %v1243
      %v1245 = vpop.f32.mrf.mxu0
      %v1246 = vadd.f32 %v1084, %v1245
      %v1247 = vpop.f32.mrf.mxu0
      %v1248 = vadd.f32 %v1089, %v1247
      %v1249 = vpop.f32.mrf.mxu0
      %v1250 = vadd.f32 %v1089, %v1249
      %1251 = vmatprep.mubr.bf16.mxu0 0
      %1252 = vmatmul.mubr.bf16.gmra.mxu0 %v1158
      %v1253 = vpop.f32.mrf.mxu0
      %v1254 = vadd.f32 %v1094, %v1253
      %v1255 = vpop.f32.mrf.mxu0
      %v1256 = vadd.f32 %v1094, %v1255
      %v1257 = vpop.f32.mrf.mxu0
      %v1258 = vadd.f32 %v1099, %v1257
      %v1259 = vpop.f32.mrf.mxu0
      %v1260 = vadd.f32 %v1099, %v1259
      %1261 = vmatprep.mubr.bf16.mxu0 0
      %1262 = vmatmul.mubr.bf16.gmra.mxu0 %v1159
      %v1263 = vpop.f32.mrf.mxu0
      %v1264 = vadd.f32 %v1104, %v1263
      %v1265 = vpop.f32.mrf.mxu0
      %v1266 = vadd.f32 %v1104, %v1265
      %v1267 = vpop.f32.mrf.mxu0
      %v1268 = vadd.f32 %v1109, %v1267
      %v1269 = vpop.f32.mrf.mxu0
      %v1270 = vadd.f32 %v1109, %v1269
      %1271 = vmatprep.mubr.bf16.mxu0 0
      %1272 = vmatmul.mubr.bf16.gmra.mxu0 %v1160
      %v1273 = vpop.f32.mrf.mxu0
      %v1274 = vadd.f32 %v1114, %v1273
      %v1275 = vpop.f32.mrf.mxu0
      %v1276 = vadd.f32 %v1114, %v1275
      %v1277 = vpop.f32.mrf.mxu0
      %v1278 = vadd.f32 %v1119, %v1277
      %v1279 = vpop.f32.mrf.mxu0
      %v1280 = vadd.f32 %v1119, %v1279
      %1281 = vdwg.mxu0
      %v1282 = vmax.f32 %v1204, 0.0
      %v1283 = vmax.f32 %v1206, 0.0
      %v1284 = vmax.f32 %v1208, 0.0
      %v1285 = vmax.f32 %v1210, 0.0
      %v1286 = vmax.f32 %v1214, 0.0
      %v1287 = vmax.f32 %v1216, 0.0
      %v1288 = vmax.f32 %v1218, 0.0
      %v1289 = vmax.f32 %v1220, 0.0
      %v1290 = vmax.f32 %v1224, 0.0
      %v1291 = vmax.f32 %v1226, 0.0
      %v1292 = vmax.f32 %v1228, 0.0
      %v1293 = vmax.f32 %v1230, 0.0
      %v1294 = vmax.f32 %v1234, 0.0
      %v1295 = vmax.f32 %v1236, 0.0
      %v1296 = vmax.f32 %v1238, 0.0
      %v1297 = vmax.f32 %v1240, 0.0
      %v1298 = vmax.f32 %v1244, 0.0
      %v1299 = vmax.f32 %v1246, 0.0
      %v1300 = vmax.f32 %v1248, 0.0
      %v1301 = vmax.f32 %v1250, 0.0
      %v1302 = vmax.f32 %v1254, 0.0
      %v1303 = vmax.f32 %v1256, 0.0
      %v1304 = vmax.f32 %v1258, 0.0
      %v1305 = vmax.f32 %v1260, 0.0
      %v1306 = vmax.f32 %v1264, 0.0
      %v1307 = vmax.f32 %v1266, 0.0
      %v1308 = vmax.f32 %v1268, 0.0
      %v1309 = vmax.f32 %v1270, 0.0
      %v1310 = vmax.f32 %v1274, 0.0
      %v1311 = vmax.f32 %v1276, 0.0
      %v1312 = vmax.f32 %v1278, 0.0
      %v1313 = vmax.f32 %v1280, 0.0
      %v1314 = vld [vmem:[%s5] sm:$0xf]
      %v1315 = vld [vmem:[%s5 + $0x4] sm:$0xf]
      %v1316 = vld [vmem:[%s5 + $0x8] sm:$0xf]
      %v1317 = vld [vmem:[%s5 + $0xc] sm:$0xf]
      %v1318 = vld [vmem:[%s5 + $0x10] sm:$0xf]
      %v1319 = vld [vmem:[%s5 + $0x14] sm:$0xf]
      %v1320 = vld [vmem:[%s5 + $0x18] sm:$0xf]
      %v1321 = vld [vmem:[%s5 + $0x1c] sm:$0xf]
      %v1322 = vld [vmem:[%s5 + $0x20] sm:$0xf]
      %v1323 = vld [vmem:[%s5 + $0x24] sm:$0xf]
      %v1324 = vld [vmem:[%s5 + $0x28] sm:$0xf]
      %v1325 = vld [vmem:[%s5 + $0x2c] sm:$0xf]
      %v1326 = vld [vmem:[%s5 + $0x30] sm:$0xf]
      %v1327 = vld [vmem:[%s5 + $0x34] sm:$0xf]
      %v1328 = vld [vmem:[%s5 + $0x38] sm:$0xf]
      %v1329 = vld [vmem:[%s5 + $0x3c] sm:$0xf]
      %v1330 = vpack.c.bf16 %v1284, %v1282
      %v1331 = vpack.c.bf16 %v1285, %v1283
      %v1332 = vpack.c.bf16 %v1288, %v1286
      %v1333 = vpack.c.bf16 %v1289, %v1287
      %v1334 = vpack.c.bf16 %v1292, %v1290
      %v1335 = vpack.c.bf16 %v1293, %v1291
      %v1336 = vpack.c.bf16 %v1296, %v1294
      %v1337 = vpack.c.bf16 %v1297, %v1295
      %v1338 = vpack.c.bf16 %v1300, %v1298
      %v1339 = vpack.c.bf16 %v1301, %v1299
      %v1340 = vpack.c.bf16 %v1304, %v1302
      %v1341 = vpack.c.bf16 %v1305, %v1303
      %v1342 = vpack.c.bf16 %v1308, %v1306
      %v1343 = vpack.c.bf16 %v1309, %v1307
      %v1344 = vpack.c.bf16 %v1312, %v1310
      %v1345 = vpack.c.bf16 %v1313, %v1311
      %v1346 = vld [vmem:[%s6] sm:$0xff]
      %v1347 = vld [vmem:[%s6 + $0x8] sm:$0xff]
      %v1348 = vld [vmem:[%s6 + $0x10] sm:$0xff]
      %v1349 = vld [vmem:[%s6 + $0x18] sm:$0xff]
      %v1350 = vld [vmem:[%s6 + $0x20] sm:$0xff]
      %v1351 = vld [vmem:[%s6 + $0x28] sm:$0xff]
      %v1352 = vld [vmem:[%s6 + $0x30] sm:$0xff]
      %v1353 = vld [vmem:[%s6 + $0x38] sm:$0xff]
      %v1354 = vld [vmem:[%s6 + $0x40] sm:$0xff]
      %v1355 = vld [vmem:[%s6 + $0x48] sm:$0xff]
      %v1356 = vld [vmem:[%s6 + $0x50] sm:$0xff]
      %v1357 = vld [vmem:[%s6 + $0x58] sm:$0xff]
      %v1358 = vld [vmem:[%s6 + $0x60] sm:$0xff]
      %v1359 = vld [vmem:[%s6 + $0x68] sm:$0xff]
      %v1360 = vld [vmem:[%s6 + $0x70] sm:$0xff]
      %v1361 = vld [vmem:[%s6 + $0x78] sm:$0xff]
      %1363 = vset.pattern.permute.xlu0 0
      %1364 = vperm.xlu0 %1363, %v1346
      %v1365 = vpop.permute.xlu0 %1364
      %1368 = vset.pattern.permute.xlu0 0
      %1369 = vperm.xlu0 %1368, %v1347
      %v1370 = vpop.permute.xlu0 %1369
      %1373 = vset.pattern.permute.xlu0 0
      %1374 = vperm.xlu0 %1373, %v1348
      %v1375 = vpop.permute.xlu0 %1374
      %1378 = vset.pattern.permute.xlu0 0
      %1379 = vperm.xlu0 %1378, %v1349
      %v1380 = vpop.permute.xlu0 %1379
      %1383 = vset.pattern.permute.xlu0 0
      %1384 = vperm.xlu0 %1383, %v1350
      %v1385 = vpop.permute.xlu0 %1384
      %1388 = vset.pattern.permute.xlu0 0
      %1389 = vperm.xlu0 %1388, %v1351
      %v1390 = vpop.permute.xlu0 %1389
      %1393 = vset.pattern.permute.xlu0 0
      %1394 = vperm.xlu0 %1393, %v1352
      %v1395 = vpop.permute.xlu0 %1394
      %1398 = vset.pattern.permute.xlu0 0
      %1399 = vperm.xlu0 %1398, %v1353
      %v1400 = vpop.permute.xlu0 %1399
      %1403 = vset.pattern.permute.xlu0 0
      %1404 = vperm.xlu0 %1403, %v1354
      %v1405 = vpop.permute.xlu0 %1404
      %1408 = vset.pattern.permute.xlu0 0
      %1409 = vperm.xlu0 %1408, %v1355
      %v1410 = vpop.permute.xlu0 %1409
      %1413 = vset.pattern.permute.xlu0 0
      %1414 = vperm.xlu0 %1413, %v1356
      %v1415 = vpop.permute.xlu0 %1414
      %1418 = vset.pattern.permute.xlu0 0
      %1419 = vperm.xlu0 %1418, %v1357
      %v1420 = vpop.permute.xlu0 %1419
      %1423 = vset.pattern.permute.xlu0 0
      %1424 = vperm.xlu0 %1423, %v1358
      %v1425 = vpop.permute.xlu0 %1424
      %1428 = vset.pattern.permute.xlu0 0
      %1429 = vperm.xlu0 %1428, %v1359
      %v1430 = vpop.permute.xlu0 %1429
      %1433 = vset.pattern.permute.xlu0 0
      %1434 = vperm.xlu0 %1433, %v1360
      %v1435 = vpop.permute.xlu0 %1434
      %1438 = vset.pattern.permute.xlu0 0
      %1439 = vperm.xlu0 %1438, %v1361
      %v1440 = vpop.permute.xlu0 %1439
      %v1458 = vunpack.c.l.b16 %v1314
      %v1459 = vunpack.c.l.b16 %v1315
      %v1460 = vunpack.c.l.b16 %v1316
      %v1461 = vunpack.c.l.b16 %v1317
      %v1462 = vunpack.c.l.b16 %v1318
      %v1463 = vunpack.c.l.b16 %v1319
      %v1464 = vunpack.c.l.b16 %v1320
      %v1465 = vunpack.c.l.b16 %v1321
      %v1466 = vunpack.c.l.b16 %v1322
      %v1467 = vunpack.c.l.b16 %v1323
      %v1468 = vunpack.c.l.b16 %v1324
      %v1469 = vunpack.c.l.b16 %v1325
      %v1470 = vunpack.c.l.b16 %v1326
      %v1471 = vunpack.c.l.b16 %v1327
      %v1472 = vunpack.c.l.b16 %v1328
      %v1473 = vunpack.c.l.b16 %v1329
      %v1474 = vpack.c.b16 %v1459, %v1458
      %v1475 = vpack.c.b16 %v1461, %v1460
      %v1476 = vpack.c.b16 %v1463, %v1462
      %v1477 = vpack.c.b16 %v1465, %v1464
      %v1478 = vpack.c.b16 %v1467, %v1466
      %v1479 = vpack.c.b16 %v1469, %v1468
      %v1480 = vpack.c.b16 %v1471, %v1470
      %v1481 = vpack.c.b16 %v1473, %v1472
      %1490 = vmatprep.subr.bf16.mxu0 %v1345
      %1491 = vmatpush1.bf16.msra.mxu0 %v1344
      %1492 = vmatprep.subr.bf16.mxu0 %v1343
      %1493 = vmatpush1.bf16.msra.mxu0 %v1342
      %1494 = vmatprep.subr.bf16.mxu0 %v1341
      %1495 = vmatpush1.bf16.msra.mxu0 %v1340
      %1496 = vmatprep.subr.bf16.mxu0 %v1339
      %1497 = vmatpush1.bf16.msra.mxu0 %v1338
      %1498 = vmatprep.subr.bf16.mxu0 %v1337
      %1499 = vmatpush1.bf16.msra.mxu0 %v1336
      %1500 = vmatprep.subr.bf16.mxu0 %v1335
      %1501 = vmatpush1.bf16.msra.mxu0 %v1334
      %1502 = vmatprep.subr.bf16.mxu0 %v1333
      %1503 = vmatpush1.bf16.msra.mxu0 %v1332
      %1504 = vmatprep.subr.bf16.mxu0 %v1331
      %1505 = vmatpush1.bf16.msra.mxu0 %v1330
      %1506 = vmatprep.subr.bf16.mxu0 0
      %1507 = vmatpush2.bf16.msra.mxu0 0
      %1508 = vmatprep.subr.bf16.mxu0 0
      %1509 = vmatpush2.bf16.msra.mxu0 0
      %1510 = vmatprep.subr.bf16.mxu0 0
      %1511 = vmatpush2.bf16.msra.mxu0 0
      %1512 = vmatprep.subr.bf16.mxu0 0
      %1513 = vmatpush2.bf16.msra.mxu0 0
      %1514 = vmatprep.subr.bf16.mxu0 0
      %1515 = vmatpush2.bf16.msra.mxu0 0
      %1516 = vmatprep.subr.bf16.mxu0 0
      %1517 = vmatpush2.bf16.msra.mxu0 0
      %1518 = vmatprep.subr.bf16.mxu0 0
      %1519 = vmatpush2.bf16.msra.mxu0 0
      %1520 = vmatprep.subr.bf16.mxu0 0
      %1521 = vmatpush2.bf16.msra.mxu0 0
      %1522 = vmatprep.mubr.bf16.mxu0 0
      %1523 = vmatmul.mubr.bf16.gmra.mxu0 %v1474
      %v1524 = vpop.f32.mrf.mxu0
      %v1525 = vadd.f32 %v1365, %v1524
      %v1526 = vpop.f32.mrf.mxu0
      %v1527 = vadd.f32 %v1365, %v1526
      %v1528 = vpop.f32.mrf.mxu0
      %v1529 = vadd.f32 %v1370, %v1528
      %v1530 = vpop.f32.mrf.mxu0
      %v1531 = vadd.f32 %v1370, %v1530
      %1532 = vmatprep.mubr.bf16.mxu0 0
      %1533 = vmatmul.mubr.bf16.gmra.mxu0 %v1475
      %v1534 = vpop.f32.mrf.mxu0
      %v1535 = vadd.f32 %v1375, %v1534
      %v1536 = vpop.f32.mrf.mxu0
      %v1537 = vadd.f32 %v1375, %v1536
      %v1538 = vpop.f32.mrf.mxu0
      %v1539 = vadd.f32 %v1380, %v1538
      %v1540 = vpop.f32.mrf.mxu0
      %v1541 = vadd.f32 %v1380, %v1540
      %1542 = vmatprep.mubr.bf16.mxu0 0
      %1543 = vmatmul.mubr.bf16.gmra.mxu0 %v1476
      %v1544 = vpop.f32.mrf.mxu0
      %v1545 = vadd.f32 %v1385, %v1544
      %v1546 = vpop.f32.mrf.mxu0
      %v1547 = vadd.f32 %v1385, %v1546
      %v1548 = vpop.f32.mrf.mxu0
      %v1549 = vadd.f32 %v1390, %v1548
      %v1550 = vpop.f32.mrf.mxu0
      %v1551 = vadd.f32 %v1390, %v1550
      %1552 = vmatprep.mubr.bf16.mxu0 0
      %1553 = vmatmul.mubr.bf16.gmra.mxu0 %v1477
      %v1554 = vpop.f32.mrf.mxu0
      %v1555 = vadd.f32 %v1395, %v1554
      %v1556 = vpop.f32.mrf.mxu0
      %v1557 = vadd.f32 %v1395, %v1556
      %v1558 = vpop.f32.mrf.mxu0
      %v1559 = vadd.f32 %v1400, %v1558
      %v1560 = vpop.f32.mrf.mxu0
      %v1561 = vadd.f32 %v1400, %v1560
      %1562 = vmatprep.mubr.bf16.mxu0 0
      %1563 = vmatmul.mubr.bf16.gmra.mxu0 %v1478
      %v1564 = vpop.f32.mrf.mxu0
      %v1565 = vadd.f32 %v1405, %v1564
      %v1566 = vpop.f32.mrf.mxu0
      %v1567 = vadd.f32 %v1405, %v1566
      %v1568 = vpop.f32.mrf.mxu0
      %v1569 = vadd.f32 %v1410, %v1568
      %v1570 = vpop.f32.mrf.mxu0
      %v1571 = vadd.f32 %v1410, %v1570
      %1572 = vmatprep.mubr.bf16.mxu0 0
      %1573 = vmatmul.mubr.bf16.gmra.mxu0 %v1479
      %v1574 = vpop.f32.mrf.mxu0
      %v1575 = vadd.f32 %v1415, %v1574
      %v1576 = vpop.f32.mrf.mxu0
      %v1577 = vadd.f32 %v1415, %v1576
      %v1578 = vpop.f32.mrf.mxu0
      %v1579 = vadd.f32 %v1420, %v1578
      %v1580 = vpop.f32.mrf.mxu0
      %v1581 = vadd.f32 %v1420, %v1580
      %1582 = vmatprep.mubr.bf16.mxu0 0
      %1583 = vmatmul.mubr.bf16.gmra.mxu0 %v1480
      %v1584 = vpop.f32.mrf.mxu0
      %v1585 = vadd.f32 %v1425, %v1584
      %v1586 = vpop.f32.mrf.mxu0
      %v1587 = vadd.f32 %v1425, %v1586
      %v1588 = vpop.f32.mrf.mxu0
      %v1589 = vadd.f32 %v1430, %v1588
      %v1590 = vpop.f32.mrf.mxu0
      %v1591 = vadd.f32 %v1430, %v1590
      %1592 = vmatprep.mubr.bf16.mxu0 0
      %1593 = vmatmul.mubr.bf16.gmra.mxu0 %v1481
      %v1594 = vpop.f32.mrf.mxu0
      %v1595 = vadd.f32 %v1435, %v1594
      %v1596 = vpop.f32.mrf.mxu0
      %v1597 = vadd.f32 %v1435, %v1596
      %v1598 = vpop.f32.mrf.mxu0
      %v1599 = vadd.f32 %v1440, %v1598
      %v1600 = vpop.f32.mrf.mxu0
      %v1601 = vadd.f32 %v1440, %v1600
      %1602 = vdwg.mxu0
      %v1603 = vmax.f32 %v1525, 0.0
      %v1604 = vmax.f32 %v1527, 0.0
      %v1605 = vmax.f32 %v1529, 0.0
      %v1606 = vmax.f32 %v1531, 0.0
      %v1607 = vmax.f32 %v1535, 0.0
      %v1608 = vmax.f32 %v1537, 0.0
      %v1609 = vmax.f32 %v1539, 0.0
      %v1610 = vmax.f32 %v1541, 0.0
      %v1611 = vmax.f32 %v1545, 0.0
      %v1612 = vmax.f32 %v1547, 0.0
      %v1613 = vmax.f32 %v1549, 0.0
      %v1614 = vmax.f32 %v1551, 0.0
      %v1615 = vmax.f32 %v1555, 0.0
      %v1616 = vmax.f32 %v1557, 0.0
      %v1617 = vmax.f32 %v1559, 0.0
      %v1618 = vmax.f32 %v1561, 0.0
      %v1619 = vmax.f32 %v1565, 0.0
      %v1620 = vmax.f32 %v1567, 0.0
      %v1621 = vmax.f32 %v1569, 0.0
      %v1622 = vmax.f32 %v1571, 0.0
      %v1623 = vmax.f32 %v1575, 0.0
      %v1624 = vmax.f32 %v1577, 0.0
      %v1625 = vmax.f32 %v1579, 0.0
      %v1626 = vmax.f32 %v1581, 0.0
      %v1627 = vmax.f32 %v1585, 0.0
      %v1628 = vmax.f32 %v1587, 0.0
      %v1629 = vmax.f32 %v1589, 0.0
      %v1630 = vmax.f32 %v1591, 0.0
      %v1631 = vmax.f32 %v1595, 0.0
      %v1632 = vmax.f32 %v1597, 0.0
      %v1633 = vmax.f32 %v1599, 0.0
      %v1634 = vmax.f32 %v1601, 0.0
      %v1635 = vld [vmem:[%s7] sm:$0x3]
      %v1636 = vpack.c.bf16 %v1605, %v1603
      %v1637 = vpack.c.bf16 %v1606, %v1604
      %v1638 = vpack.c.bf16 %v1609, %v1607
      %v1639 = vpack.c.bf16 %v1610, %v1608
      %v1640 = vpack.c.bf16 %v1613, %v1611
      %v1641 = vpack.c.bf16 %v1614, %v1612
      %v1642 = vpack.c.bf16 %v1617, %v1615
      %v1643 = vpack.c.bf16 %v1618, %v1616
      %v1644 = vpack.c.bf16 %v1621, %v1619
      %v1645 = vpack.c.bf16 %v1622, %v1620
      %v1646 = vpack.c.bf16 %v1625, %v1623
      %v1647 = vpack.c.bf16 %v1626, %v1624
      %v1648 = vpack.c.bf16 %v1629, %v1627
      %v1649 = vpack.c.bf16 %v1630, %v1628
      %v1650 = vpack.c.bf16 %v1633, %v1631
      %v1651 = vpack.c.bf16 %v1634, %v1632
      %v1652 = vld [vmem:[%s8] sm:$0x7]
      %1654 = vset.pattern.permute.xlu0 0
      %1655 = vperm.xlu0 %1654, %v1652
      %v1656 = vpop.permute.xlu0 %1655
      %1658 = vmatprep.subr.bf16.mxu0 %v1651
      %1659 = vmatpush1.bf16.msra.mxu0 %v1650
      %1660 = vmatprep.subr.bf16.mxu0 %v1649
      %1661 = vmatpush1.bf16.msra.mxu0 %v1648
      %1662 = vmatprep.subr.bf16.mxu0 %v1647
      %1663 = vmatpush1.bf16.msra.mxu0 %v1646
      %1664 = vmatprep.subr.bf16.mxu0 %v1645
      %1665 = vmatpush1.bf16.msra.mxu0 %v1644
      %1666 = vmatprep.subr.bf16.mxu0 %v1643
      %1667 = vmatpush1.bf16.msra.mxu0 %v1642
      %1668 = vmatprep.subr.bf16.mxu0 %v1641
      %1669 = vmatpush1.bf16.msra.mxu0 %v1640
      %1670 = vmatprep.subr.bf16.mxu0 %v1639
      %1671 = vmatpush1.bf16.msra.mxu0 %v1638
      %1672 = vmatprep.subr.bf16.mxu0 %v1637
      %1673 = vmatpush1.bf16.msra.mxu0 %v1636
      %1674 = vmatprep.subr.bf16.mxu0 0
      %1675 = vmatpush2.bf16.msra.mxu0 0
      %1676 = vmatprep.subr.bf16.mxu0 0
      %1677 = vmatpush2.bf16.msra.mxu0 0
      %1678 = vmatprep.subr.bf16.mxu0 0
      %1679 = vmatpush2.bf16.msra.mxu0 0
      %1680 = vmatprep.subr.bf16.mxu0 0
      %1681 = vmatpush2.bf16.msra.mxu0 0
      %1682 = vmatprep.subr.bf16.mxu0 0
      %1683 = vmatpush2.bf16.msra.mxu0 0
      %1684 = vmatprep.subr.bf16.mxu0 0
      %1685 = vmatpush2.bf16.msra.mxu0 0
      %1686 = vmatprep.subr.bf16.mxu0 0
      %1687 = vmatpush2.bf16.msra.mxu0 0
      %1688 = vmatprep.subr.bf16.mxu0 0
      %1689 = vmatpush2.bf16.msra.mxu0 0
      %1690 = vmatprep.mubr.bf16.mxu0 0
      %1691 = vmatmul.mubr.bf16.gmra.mxu0 %v1635
      %v1692 = vpop.f32.mrf.mxu0
      %v1693 = vadd.f32 %v1656, %v1692
      %v1694 = vpop.f32.mrf.mxu0
      %v1695 = vadd.f32 %v1656, %v1694
      %v1696 = vpop.f32.mrf.mxu0
      %v1697 = vpop.f32.mrf.mxu0
      %1698 = vdwg.mxu0
      %v1699 = vtanh.pop %v1693
      %v1700 = vtanh.pop %v1695
      %v1701 = vcombine.high %v393, %v393
      %v1703 = vadd.f32 %v1699, %v393
      %v1704 = vadd.f32 %v1700, %v1701
      %v1707 = vcombine.low %v1703, %v1704
      %1709 = vst [vmem:[%s390] sm:$0x77] %v1707
      %s1710 = smul.u32 2, %s25
      %p1711 = scmp.lt.s32.totalorder %s24, 1
      %s1712 = scalar_select %p1711, %s24, 1
      %p1713 = scmp.lt.s32.totalorder %s1710, 1
      %s1714 = scalar_select %p1713, %s1710, 1
      %s1715 = smul.addr %s1712, 2
      %s1716 = sadd.s32 %s1714, %s1715
      %s1717 = smul.addr %s1716, 4
      %s1718 = scalar_lea.vmem %s9, %s1717
      // Predicated region
      $region57: #{tpu_custom_call.1} parent=55 // pred_check
        %p1719 = pneg %p253
      $region58: #{tpu_custom_call.1} parent=55 // pred_check_branch
        %1721 = sbr.rel (%p1719) target = $region60
      $region59: #{tpu_custom_call.1} parent=55 // pred_region
        %s1722 = smul.u32 2, %s25
      $region60: #{tpu_custom_call.1} parent=55 // pred_fallthru
        _
    $region56: #{tpu_custom_call.1} parent=5 // pred_fallthru
      _
    %p1723 = scmp.le.s32.totalorder 2, %s15
    // Predicated region
    $region61: #{tpu_custom_call.1} parent=5 // pred_check
      %p1724 = pneg %p1723
    $region62: #{tpu_custom_call.1} parent=5 // pred_check_branch
      %1726 = sbr.rel (%p1724) target = $region64
    $region63: #{tpu_custom_call.1} parent=5 // pred_region
      %s1727 = ssub.s32 %s15, 2
      // Predicated region
      $region65: #{tpu_custom_call.1} parent=63 // pred_check
        %p1728 = pneg %p259
      $region66: #{tpu_custom_call.1} parent=63 // pred_check_branch
        %1730 = sbr.rel (%p1728) target = $region68
      $region67: #{tpu_custom_call.1} parent=63 // pred_region
        %s1731 = smul.u32 2, %s27
        %p1732 = scmp.lt.s32.totalorder %s26, 1
        %s1733 = scalar_select %p1732, %s26, 1
        %p1734 = scmp.lt.s32.totalorder %s1731, 1
        %s1735 = scalar_select %p1734, %s1731, 1
        %s1736 = smul.addr %s1733, 2
        %s1737 = sadd.s32 %s1735, %s1736
        %s1738 = smul.addr %s1737, 4
        %s1739 = scalar_lea.vmem %s9, %s1738
      $region68: #{tpu_custom_call.1} parent=63 // pred_fallthru
        _
    $region64: #{tpu_custom_call.1} parent=5 // pred_fallthru
      _
  $region6: #{tpu_custom_call.1} parent=0 // loop_footer
    %s19 = sadd.s32 1, %s15
  $region7: #{tpu_custom_call.1} parent=0 // loop_footer_branch
    %14 = sbr.rel target = $region3
  $region8: #{tpu_custom_call.1} parent=0 // loop_exit
    _

// kernel: tpu_custom_call.1
$region0: #{tpu_custom_call.1}
  #allocation0 [shape = 'u32[]', space=smem, size = 0x4, offset = 0x4, fixed_abs, tag = 'smem constant byte address 0x4 - core index']
  #allocation1 [shape = 'u32[144,128]{1,0:T(1,128)}', space=vmem, size = 0x12000, scoped, tag = 'internal scratch']
  %s0 = inlined_call_operand.vmem [shape: f32[2,3,256], index: 0, kind: input, shape index: {}]
  %s1 = inlined_call_operand.vmem [shape: f32[2,128,1], index: 1, kind: input, shape index: {}]
  %s2 = inlined_call_operand.vmem [shape: f32[128,3], index: 2, kind: input, shape index: {}]
  %s3 = inlined_call_operand.vmem [shape: bf16[128,128], index: 3, kind: input, shape index: {}]
  %s4 = inlined_call_operand.vmem [shape: f32[128,1], index: 4, kind: input, shape index: {}]
  %s5 = inlined_call_operand.vmem [shape: bf16[128,128], index: 5, kind: input, shape index: {}]
  %s6 = inlined_call_operand.vmem [shape: f32[128,1], index: 6, kind: input, shape index: {}]
  %s7 = inlined_call_operand.vmem [shape: bf16[3,128], index: 7, kind: input, shape index: {}]
  %s8 = inlined_call_operand.vmem [shape: f32[3,1], index: 8, kind: input, shape index: {}]
  %s9 = inlined_call_operand.vmem [shape: f32[2,3,256], index: 9, kind: output, shape index: {}]
  %s10 = sld [smem:[#allocation0]]
  $region69: #{tpu_custom_call.1} parent=0
    _
  %s12 = ssub.s32 1, %s10
  %s13 = scalar_select 0, %s12, %s10
  loop: start=0, step=1, limit=4
  $region2: #{tpu_custom_call.1} parent=0 // loop_pre_header
    _
  $region3: #{tpu_custom_call.1} parent=0 // loop_header
    %s15 = sphi 0, %s19
    %p16 = scmp.ge.s32.totalorder %s15, 4
    %s22 = sphi 0, %s34
    %s23 = sphi 0, %s30
    %s24 = sphi 0, %s22
    %s25 = sphi 0, %s23
    %s26 = sphi 0, %s24
    %s27 = sphi 0, %s25
    %s39 = sphi 0, %s41
    %s42 = sphi 0, %s39
    %s43 = sphi 0, %s42
    %s59 = sphi 0, %s43
    %s65 = sphi 0, %s67
    %s68 = sphi 0, %s65
    %s69 = sphi 0, %s68
    %s85 = sphi 0, %s69
    %s89 = sphi 0, %s89
    %s91 = sphi 0, %s89
    %s92 = sphi 0, %s91
    %s106 = sphi 0, %s92
    %s110 = sphi 0, %s110
    %s112 = sphi 0, %s110
    %s113 = sphi 0, %s112
    %s127 = sphi 0, %s113
    %s131 = sphi 0, %s131
    %s133 = sphi 0, %s131
    %s134 = sphi 0, %s133
    %s148 = sphi 0, %s134
    %s152 = sphi 0, %s152
    %s154 = sphi 0, %s152
    %s155 = sphi 0, %s154
    %s169 = sphi 0, %s155
    %s173 = sphi 0, %s173
    %s175 = sphi 0, %s173
    %s176 = sphi 0, %s175
    %s190 = sphi 0, %s176
    %s194 = sphi 0, %s194
    %s196 = sphi 0, %s194
    %s197 = sphi 0, %s196
    %s211 = sphi 0, %s197
    %s215 = sphi 0, %s215
    %s217 = sphi 0, %s215
    %s218 = sphi 0, %s217
    %s232 = sphi 0, %s218
    %s240 = sphi 0, %s242
    %s243 = sphi 0, %s240
    %s244 = sphi 0, %s243
    %s260 = sphi 0, %s244
  $region4: #{tpu_custom_call.1} parent=0 // loop_header_branch
    %18 = sbr.rel (%p16) target = $region8
  $region5: #{tpu_custom_call.1} parent=0 // loop_body
    %s20 = ssub.s32 %s15, 1
    %s21 = ssub.s32 %s15, 2
    %s28 = sadd.s32 1, %s23
    %p29 = scmp.ge.s32.totalorder %s28, 1
    %s30 = scalar_select %p29, 0, %s28
    %s31 = sadd.s32 1, %s22
    %s32 = scalar_select %p29, %s31, %s22
    %p33 = scmp.ge.s32.totalorder %s32, 2
    %s34 = scalar_select %p33, 0, %s32
    %s35 = ssub.s32 %s22, %s34
    %s36 = ssub.s32 %s23, %s30
    %s37 = sor.u32 %s35, %s36
    %p38 = scmp.eq.s32.totalorder %s37, 0
    %s40 = sadd.s32 %s39, 1
    %s41 = scalar_select %p38, %s39, %s40
    %p44 = pneg %p38
    %p45 = scmp.eq.s32.totalorder %s15, 1
    %p46 = por %p44, %p45
    %p47 = scmp.ne.s32.totalorder %s39, %s42
    %p48 = scmp.eq.s32.totalorder %s15, 0
    %p49 = por %p47, %p48
    %p50 = scmp.ne.s32.totalorder %s39, %s42
    %p51 = scmp.eq.s32.totalorder %s20, 1
    %p52 = por %p50, %p51
    %p53 = scmp.ne.s32.totalorder %s42, %s43
    %p54 = scmp.eq.s32.totalorder %s20, 0
    %p55 = por %p53, %p54
    %p56 = scmp.ne.s32.totalorder %s42, %s43
    %p57 = scmp.eq.s32.totalorder %s21, 1
    %p58 = por %p56, %p57
    %p60 = scmp.ne.s32.totalorder %s43, %s59
    %p61 = scmp.eq.s32.totalorder %s21, 0
    %p62 = por %p60, %p61
    %s63 = ssub.s32 %s22, %s34
    %p64 = scmp.eq.s32.totalorder %s63, 0
    %s66 = sadd.s32 %s65, 1
    %s67 = scalar_select %p64, %s65, %s66
    %p70 = pneg %p64
    %p71 = scmp.eq.s32.totalorder %s15, 1
    %p72 = por %p70, %p71
    %p73 = scmp.ne.s32.totalorder %s65, %s68
    %p74 = scmp.eq.s32.totalorder %s15, 0
    %p75 = por %p73, %p74
    %p76 = scmp.ne.s32.totalorder %s65, %s68
    %p77 = scmp.eq.s32.totalorder %s20, 1
    %p78 = por %p76, %p77
    %p79 = scmp.ne.s32.totalorder %s68, %s69
    %p80 = scmp.eq.s32.totalorder %s20, 0
    %p81 = por %p79, %p80
    %p82 = scmp.ne.s32.totalorder %s68, %s69
    %p83 = scmp.eq.s32.totalorder %s21, 1
    %p84 = por %p82, %p83
    %p86 = scmp.ne.s32.totalorder %s69, %s85
    %p87 = scmp.eq.s32.totalorder %s21, 0
    %p88 = por %p86, %p87
    %s90 = sadd.s32 %s89, 1
    %p93 = scmp.eq.s32.totalorder %s15, 1
    %p94 = scmp.ne.s32.totalorder %s89, %s91
    %p95 = scmp.eq.s32.totalorder %s15, 0
    %p96 = por %p94, %p95
    %p97 = scmp.ne.s32.totalorder %s89, %s91
    %p98 = scmp.eq.s32.totalorder %s20, 1
    %p99 = por %p97, %p98
    %p100 = scmp.ne.s32.totalorder %s91, %s92
    %p101 = scmp.eq.s32.totalorder %s20, 0
    %p102 = por %p100, %p101
    %p103 = scmp.ne.s32.totalorder %s91, %s92
    %p104 = scmp.eq.s32.totalorder %s21, 1
    %p105 = por %p103, %p104
    %p107 = scmp.ne.s32.totalorder %s92, %s106
    %p108 = scmp.eq.s32.totalorder %s21, 0
    %p109 = por %p107, %p108
    %s111 = sadd.s32 %s110, 1
    %p114 = scmp.eq.s32.totalorder %s15, 1
    %p115 = scmp.ne.s32.totalorder %s110, %s112
    %p116 = scmp.eq.s32.totalorder %s15, 0
    %p117 = por %p115, %p116
    %p118 = scmp.ne.s32.totalorder %s110, %s112
    %p119 = scmp.eq.s32.totalorder %s20, 1
    %p120 = por %p118, %p119
    %p121 = scmp.ne.s32.totalorder %s112, %s113
    %p122 = scmp.eq.s32.totalorder %s20, 0
    %p123 = por %p121, %p122
    %p124 = scmp.ne.s32.totalorder %s112, %s113
    %p125 = scmp.eq.s32.totalorder %s21, 1
    %p126 = por %p124, %p125
    %p128 = scmp.ne.s32.totalorder %s113, %s127
    %p129 = scmp.eq.s32.totalorder %s21, 0
    %p130 = por %p128, %p129
    %s132 = sadd.s32 %s131, 1
    %p135 = scmp.eq.s32.totalorder %s15, 1
    %p136 = scmp.ne.s32.totalorder %s131, %s133
    %p137 = scmp.eq.s32.totalorder %s15, 0
    %p138 = por %p136, %p137
    %p139 = scmp.ne.s32.totalorder %s131, %s133
    %p140 = scmp.eq.s32.totalorder %s20, 1
    %p141 = por %p139, %p140
    %p142 = scmp.ne.s32.totalorder %s133, %s134
    %p143 = scmp.eq.s32.totalorder %s20, 0
    %p144 = por %p142, %p143
    %p145 = scmp.ne.s32.totalorder %s133, %s134
    %p146 = scmp.eq.s32.totalorder %s21, 1
    %p147 = por %p145, %p146
    %p149 = scmp.ne.s32.totalorder %s134, %s148
    %p150 = scmp.eq.s32.totalorder %s21, 0
    %p151 = por %p149, %p150
    %s153 = sadd.s32 %s152, 1
    %p156 = scmp.eq.s32.totalorder %s15, 1
    %p157 = scmp.ne.s32.totalorder %s152, %s154
    %p158 = scmp.eq.s32.totalorder %s15, 0
    %p159 = por %p157, %p158
    %p160 = scmp.ne.s32.totalorder %s152, %s154
    %p161 = scmp.eq.s32.totalorder %s20, 1
    %p162 = por %p160, %p161
    %p163 = scmp.ne.s32.totalorder %s154, %s155
    %p164 = scmp.eq.s32.totalorder %s20, 0
    %p165 = por %p163, %p164
    %p166 = scmp.ne.s32.totalorder %s154, %s155
    %p167 = scmp.eq.s32.totalorder %s21, 1
    %p168 = por %p166, %p167
    %p170 = scmp.ne.s32.totalorder %s155, %s169
    %p171 = scmp.eq.s32.totalorder %s21, 0
    %p172 = por %p170, %p171
    %s174 = sadd.s32 %s173, 1
    %p177 = scmp.eq.s32.totalorder %s15, 1
    %p178 = scmp.ne.s32.totalorder %s173, %s175
    %p179 = scmp.eq.s32.totalorder %s15, 0
    %p180 = por %p178, %p179
    %p181 = scmp.ne.s32.totalorder %s173, %s175
    %p182 = scmp.eq.s32.totalorder %s20, 1
    %p183 = por %p181, %p182
    %p184 = scmp.ne.s32.totalorder %s175, %s176
    %p185 = scmp.eq.s32.totalorder %s20, 0
    %p186 = por %p184, %p185
    %p187 = scmp.ne.s32.totalorder %s175, %s176
    %p188 = scmp.eq.s32.totalorder %s21, 1
    %p189 = por %p187, %p188
    %p191 = scmp.ne.s32.totalorder %s176, %s190
    %p192 = scmp.eq.s32.totalorder %s21, 0
    %p193 = por %p191, %p192
    %s195 = sadd.s32 %s194, 1
    %p198 = scmp.eq.s32.totalorder %s15, 1
    %p199 = scmp.ne.s32.totalorder %s194, %s196
    %p200 = scmp.eq.s32.totalorder %s15, 0
    %p201 = por %p199, %p200
    %p202 = scmp.ne.s32.totalorder %s194, %s196
    %p203 = scmp.eq.s32.totalorder %s20, 1
    %p204 = por %p202, %p203
    %p205 = scmp.ne.s32.totalorder %s196, %s197
    %p206 = scmp.eq.s32.totalorder %s20, 0
    %p207 = por %p205, %p206
    %p208 = scmp.ne.s32.totalorder %s196, %s197
    %p209 = scmp.eq.s32.totalorder %s21, 1
    %p210 = por %p208, %p209
    %p212 = scmp.ne.s32.totalorder %s197, %s211
    %p213 = scmp.eq.s32.totalorder %s21, 0
    %p214 = por %p212, %p213
    %s216 = sadd.s32 %s215, 1
    %p219 = scmp.eq.s32.totalorder %s15, 1
    %p220 = scmp.ne.s32.totalorder %s215, %s217
    %p221 = scmp.eq.s32.totalorder %s15, 0
    %p222 = por %p220, %p221
    %p223 = scmp.ne.s32.totalorder %s215, %s217
    %p224 = scmp.eq.s32.totalorder %s20, 1
    %p225 = por %p223, %p224
    %p226 = scmp.ne.s32.totalorder %s217, %s218
    %p227 = scmp.eq.s32.totalorder %s20, 0
    %p228 = por %p226, %p227
    %p229 = scmp.ne.s32.totalorder %s217, %s218
    %p230 = scmp.eq.s32.totalorder %s21, 1
    %p231 = por %p229, %p230
    %p233 = scmp.ne.s32.totalorder %s218, %s232
    %p234 = scmp.eq.s32.totalorder %s21, 0
    %p235 = por %p233, %p234
    %s236 = ssub.s32 %s22, %s34
    %s237 = ssub.s32 %s23, %s30
    %s238 = sor.u32 %s236, %s237
    %p239 = scmp.eq.s32.totalorder %s238, 0
    %s241 = sadd.s32 %s240, 1
    %s242 = scalar_select %p239, %s240, %s241
    %p245 = pneg %p239
    %p246 = scmp.eq.s32.totalorder %s15, 1
    %p247 = por %p245, %p246
    %p248 = scmp.ne.s32.totalorder %s240, %s243
    %p249 = scmp.eq.s32.totalorder %s15, 0
    %p250 = por %p248, %p249
    %p251 = scmp.ne.s32.totalorder %s240, %s243
    %p252 = scmp.eq.s32.totalorder %s20, 1
    %p253 = por %p251, %p252
    %p254 = scmp.ne.s32.totalorder %s243, %s244
    %p255 = scmp.eq.s32.totalorder %s20, 0
    %p256 = por %p254, %p255
    %p257 = scmp.ne.s32.totalorder %s243, %s244
    %p258 = scmp.eq.s32.totalorder %s21, 1
    %p259 = por %p257, %p258
    %p261 = scmp.ne.s32.totalorder %s244, %s260
    %p262 = scmp.eq.s32.totalorder %s21, 0
    %p263 = por %p261, %p262
    %p264 = scmp.le.s32.totalorder 1, %s15
    %p265 = scmp.lt.s32.totalorder %s15, 3
    %p266 = pnand %p264, %p265
    %p267 = pneg %p266
    // Predicated region
    $region9: #{tpu_custom_call.1} parent=5 // pred_check
      _
    $region10: #{tpu_custom_call.1} parent=5 // pred_check_branch
      %269 = sbr.rel (%p266) target = $region12
    $region11: #{tpu_custom_call.1} parent=5 // pred_region
      %s270 = ssub.s32 %s15, 1
      // Predicated region
      $region13: #{tpu_custom_call.1} parent=11 // pred_check
        %p271 = pneg %p102
      $region14: #{tpu_custom_call.1} parent=11 // pred_check_branch
        %273 = sbr.rel (%p271) target = $region16
      $region15: #{tpu_custom_call.1} parent=11 // pred_region
        _
      $region16: #{tpu_custom_call.1} parent=11 // pred_fallthru
        _
      // Predicated region
      $region17: #{tpu_custom_call.1} parent=11 // pred_check
        %p274 = pneg %p123
      $region18: #{tpu_custom_call.1} parent=11 // pred_check_branch
        %276 = sbr.rel (%p274) target = $region20
      $region19: #{tpu_custom_call.1} parent=11 // pred_region
        _
      $region20: #{tpu_custom_call.1} parent=11 // pred_fallthru
        _
      // Predicated region
      $region21: #{tpu_custom_call.1} parent=11 // pred_check
        %p277 = pneg %p144
      $region22: #{tpu_custom_call.1} parent=11 // pred_check_branch
        %279 = sbr.rel (%p277) target = $region24
      $region23: #{tpu_custom_call.1} parent=11 // pred_region
        _
      $region24: #{tpu_custom_call.1} parent=11 // pred_fallthru
        _
      // Predicated region
      $region25: #{tpu_custom_call.1} parent=11 // pred_check
        %p280 = pneg %p165
      $region26: #{tpu_custom_call.1} parent=11 // pred_check_branch
        %282 = sbr.rel (%p280) target = $region28
      $region27: #{tpu_custom_call.1} parent=11 // pred_region
        _
      $region28: #{tpu_custom_call.1} parent=11 // pred_fallthru
        _
      // Predicated region
      $region29: #{tpu_custom_call.1} parent=11 // pred_check
        %p283 = pneg %p186
      $region30: #{tpu_custom_call.1} parent=11 // pred_check_branch
        %285 = sbr.rel (%p283) target = $region32
      $region31: #{tpu_custom_call.1} parent=11 // pred_region
        _
      $region32: #{tpu_custom_call.1} parent=11 // pred_fallthru
        _
      // Predicated region
      $region33: #{tpu_custom_call.1} parent=11 // pred_check
        %p286 = pneg %p207
      $region34: #{tpu_custom_call.1} parent=11 // pred_check_branch
        %288 = sbr.rel (%p286) target = $region36
      $region35: #{tpu_custom_call.1} parent=11 // pred_region
        _
      $region36: #{tpu_custom_call.1} parent=11 // pred_fallthru
        _
      // Predicated region
      $region37: #{tpu_custom_call.1} parent=11 // pred_check
        %p289 = pneg %p228
      $region38: #{tpu_custom_call.1} parent=11 // pred_check_branch
        %291 = sbr.rel (%p289) target = $region40
      $region39: #{tpu_custom_call.1} parent=11 // pred_region
        _
      $region40: #{tpu_custom_call.1} parent=11 // pred_fallthru
        _
    $region12: #{tpu_custom_call.1} parent=5 // pred_fallthru
      _
    %p292 = scmp.lt.s32.totalorder %s15, 2
    // Predicated region
    $region41: #{tpu_custom_call.1} parent=5 // pred_check
      %p293 = pneg %p292
    $region42: #{tpu_custom_call.1} parent=5 // pred_check_branch
      %295 = sbr.rel (%p293) target = $region44
    $region43: #{tpu_custom_call.1} parent=5 // pred_region
      // Predicated region
      $region45: #{tpu_custom_call.1} parent=43 // pred_check
        %p296 = pneg %p49
      $region46: #{tpu_custom_call.1} parent=43 // pred_check_branch
        %298 = sbr.rel (%p296) target = $region48
      $region47: #{tpu_custom_call.1} parent=43 // pred_region
        %s299 = smul.u32 2, %s23
        %p300 = scmp.lt.s32.totalorder %s22, 1
        %s301 = scalar_select %p300, %s22, 1
        %p302 = scmp.lt.s32.totalorder %s299, 1
        %s303 = scalar_select %p302, %s299, 1
        %s304 = smul.addr %s301, 2
        %s305 = sadd.s32 %s303, %s304
        %s306 = smul.addr %s305, 4
        %s307 = scalar_lea.vmem %s0, %s306
        %s308 = smul.u32 2, %s23
      $region48: #{tpu_custom_call.1} parent=43 // pred_fallthru
        _
      // Predicated region
      $region49: #{tpu_custom_call.1} parent=43 // pred_check
        %p309 = pneg %p75
      $region50: #{tpu_custom_call.1} parent=43 // pred_check_branch
        %311 = sbr.rel (%p309) target = $region52
      $region51: #{tpu_custom_call.1} parent=43 // pred_region
        %p312 = scmp.lt.s32.totalorder %s22, 1
        %s313 = scalar_select %p312, %s22, 1
        %s314 = smul.addr %s313, 16
        %s315 = smul.addr %s314, 8
        %s316 = scalar_lea.vmem %s1, %s315
      $region52: #{tpu_custom_call.1} parent=43 // pred_fallthru
        _
    $region44: #{tpu_custom_call.1} parent=5 // pred_fallthru
      _
    %p317 = scmp.le.s32.totalorder 1, %s15
    %p318 = scmp.lt.s32.totalorder %s15, 3
    %p319 = pnand %p317, %p318
    %p320 = pneg %p319
    // Predicated region
    $region53: #{tpu_custom_call.1} parent=5 // pred_check
      _
    $region54: #{tpu_custom_call.1} parent=5 // pred_check_branch
      %322 = sbr.rel (%p319) target = $region56
    $region55: #{tpu_custom_call.1} parent=5 // pred_region
      %s323 = ssub.s32 %s15, 1
      %s324 = smul.u32 2, %s25
      %p325 = scmp.lt.s32.totalorder %s24, 1
      %s326 = scalar_select %p325, %s24, 1
      %p327 = scmp.lt.s32.totalorder %s324, 1
      %s328 = scalar_select %p327, %s324, 1
      %s329 = smul.addr %s326, 2
      %s330 = sadd.s32 %s328, %s329
      %s331 = smul.addr %s330, 4
      %s332 = scalar_lea.vmem %s0, %s331
      %p333 = pneg %p55
      %p334 = pneg %p52
      %p335 = scmp.lt.s32.totalorder %s24, 1
      %s336 = scalar_select %p335, %s24, 1
      %s337 = smul.addr %s336, 16
      %s338 = smul.addr %s337, 8
      %s339 = scalar_lea.vmem %s1, %s338
      %p340 = pneg %p81
      %p341 = pneg %p78
      %p342 = pneg %p102
      %p343 = pneg %p99
      %p344 = pneg %p123
      %p345 = pneg %p120
      %p346 = pneg %p144
      %p347 = pneg %p141
      %p348 = pneg %p165
      %p349 = pneg %p162
      %p350 = pneg %p186
      %p351 = pneg %p183
      %p352 = pneg %p207
      %p353 = pneg %p204
      %p354 = pneg %p228
      %p355 = pneg %p225
      %p356 = pneg %p256
      %p357 = pneg %p253
      %s358 = smul.u32 2, %s25
      %p359 = scmp.lt.s32.totalorder %s24, 1
      %s360 = scalar_select %p359, %s24, 1
      %p361 = scmp.lt.s32.totalorder %s358, 1
      %s362 = scalar_select %p361, %s358, 1
      %s363 = smul.addr %s360, 2
      %s364 = sadd.s32 %s362, %s363
      %s365 = smul.addr %s364, 4
      %s366 = scalar_lea.vmem %s9, %s365
      %s367 = smul.u32 2, %s25
      %p368 = scmp.lt.s32.totalorder %s24, 1
      %s369 = scalar_select %p368, %s24, 1
      %p370 = scmp.lt.s32.totalorder %s367, 1
      %s371 = scalar_select %p370, %s367, 1
      %s372 = smul.addr %s369, 2
      %s373 = sadd.s32 %s371, %s372
      %s374 = smul.addr %s373, 4
      %s375 = scalar_lea.vmem %s0, %s374
      %s376 = smul.u32 2, %s25
      %p377 = scmp.lt.s32.totalorder %s24, 1
      %s378 = scalar_select %p377, %s24, 1
      %s379 = smul.addr %s378, 16
      %s380 = smul.addr %s379, 8
      %s381 = scalar_lea.vmem %s1, %s380
      %s382 = smul.u32 2, %s25
      %p383 = scmp.lt.s32.totalorder %s24, 1
      %s384 = scalar_select %p383, %s24, 1
      %p385 = scmp.lt.s32.totalorder %s382, 1
      %s386 = scalar_select %p385, %s382, 1
      %s387 = smul.addr %s384, 2
      %s388 = sadd.s32 %s386, %s387
      %s389 = smul.addr %s388, 4
      %s390 = scalar_lea.vmem %s9, %s389
      %s391 = smul.u32 2, %s25
      %v393 = vld [vmem:[%s375] sm:$0x77]
      %v394 = vld [vmem:[%s2] sm:$0xff]
      %v395 = vld [vmem:[%s2 + $0x8] sm:$0xff]
      %v396 = vld [vmem:[%s2 + $0x10] sm:$0xff]
      %v397 = vld [vmem:[%s2 + $0x18] sm:$0xff]
      %v398 = vld [vmem:[%s2 + $0x20] sm:$0xff]
      %v399 = vld [vmem:[%s2 + $0x28] sm:$0xff]
      %v400 = vld [vmem:[%s2 + $0x30] sm:$0xff]
      %v401 = vld [vmem:[%s2 + $0x38] sm:$0xff]
      %v402 = vld [vmem:[%s2 + $0x40] sm:$0xff]
      %v403 = vld [vmem:[%s2 + $0x48] sm:$0xff]
      %v404 = vld [vmem:[%s2 + $0x50] sm:$0xff]
      %v405 = vld [vmem:[%s2 + $0x58] sm:$0xff]
      %v406 = vld [vmem:[%s2 + $0x60] sm:$0xff]
      %v407 = vld [vmem:[%s2 + $0x68] sm:$0xff]
      %v408 = vld [vmem:[%s2 + $0x70] sm:$0xff]
      %v409 = vld [vmem:[%s2 + $0x78] sm:$0xff]
      %411 = vset.pattern.permute.xlu0 0
      %412 = vperm.xlu0 %411, %v394
      %v413 = vpop.permute.xlu0 %412
      %416 = vset.pattern.permute.xlu0 0
      %417 = vperm.xlu0 %416, %v395
      %v418 = vpop.permute.xlu0 %417
      %421 = vset.pattern.permute.xlu0 0
      %422 = vperm.xlu0 %421, %v396
      %v423 = vpop.permute.xlu0 %422
      %426 = vset.pattern.permute.xlu0 0
      %427 = vperm.xlu0 %426, %v397
      %v428 = vpop.permute.xlu0 %427
      %431 = vset.pattern.permute.xlu0 0
      %432 = vperm.xlu0 %431, %v398
      %v433 = vpop.permute.xlu0 %432
      %436 = vset.pattern.permute.xlu0 0
      %437 = vperm.xlu0 %436, %v399
      %v438 = vpop.permute.xlu0 %437
      %441 = vset.pattern.permute.xlu0 0
      %442 = vperm.xlu0 %441, %v400
      %v443 = vpop.permute.xlu0 %442
      %446 = vset.pattern.permute.xlu0 0
      %447 = vperm.xlu0 %446, %v401
      %v448 = vpop.permute.xlu0 %447
      %451 = vset.pattern.permute.xlu0 0
      %452 = vperm.xlu0 %451, %v402
      %v453 = vpop.permute.xlu0 %452
      %456 = vset.pattern.permute.xlu0 0
      %457 = vperm.xlu0 %456, %v403
      %v458 = vpop.permute.xlu0 %457
      %461 = vset.pattern.permute.xlu0 0
      %462 = vperm.xlu0 %461, %v404
      %v463 = vpop.permute.xlu0 %462
      %466 = vset.pattern.permute.xlu0 0
      %467 = vperm.xlu0 %466, %v405
      %v468 = vpop.permute.xlu0 %467
      %471 = vset.pattern.permute.xlu0 0
      %472 = vperm.xlu0 %471, %v406
      %v473 = vpop.permute.xlu0 %472
      %476 = vset.pattern.permute.xlu0 0
      %477 = vperm.xlu0 %476, %v407
      %v478 = vpop.permute.xlu0 %477
      %481 = vset.pattern.permute.xlu0 0
      %482 = vperm.xlu0 %481, %v408
      %v483 = vpop.permute.xlu0 %482
      %486 = vset.pattern.permute.xlu0 0
      %487 = vperm.xlu0 %486, %v409
      %v488 = vpop.permute.xlu0 %487
      %v491 = vlaneseq
      %v492 = vshrl.u32 %v491, 7
      %v493 = vsub.s32 0, %v492
      %v494 = vrot.slane %v393, %v493
      %v495 = vlaneseq
      %v496 = vshrl.u32 %v495, 7
      %v497 = vsub.s32 4, %v496
      %v498 = vrot.slane %v393, %v497
      %v501 = vlaneseq
      %v502 = vshrl.u32 %v501, 7
      %v503 = vsub.s32 0, %v502
      %v504 = vrot.slane %v494, %v503
      %v505 = vlaneseq
      %v506 = vshrl.u32 %v505, 7
      %v507 = vsub.s32 0, %v506
      %v508 = vrot.slane %v498, %v507
      %v509 = vmul.f32 %v413, %v504
      %v510 = vmul.f32 %v413, %v508
      %v511 = vmul.f32 %v418, %v504
      %v512 = vmul.f32 %v418, %v508
      %v513 = vmul.f32 %v423, %v504
      %v514 = vmul.f32 %v423, %v508
      %v515 = vmul.f32 %v428, %v504
      %v516 = vmul.f32 %v428, %v508
      %v517 = vmul.f32 %v433, %v504
      %v518 = vmul.f32 %v433, %v508
      %v519 = vmul.f32 %v438, %v504
      %v520 = vmul.f32 %v438, %v508
      %v521 = vmul.f32 %v443, %v504
      %v522 = vmul.f32 %v443, %v508
      %v523 = vmul.f32 %v448, %v504
      %v524 = vmul.f32 %v448, %v508
      %v525 = vmul.f32 %v453, %v504
      %v526 = vmul.f32 %v453, %v508
      %v527 = vmul.f32 %v458, %v504
      %v528 = vmul.f32 %v458, %v508
      %v529 = vmul.f32 %v463, %v504
      %v530 = vmul.f32 %v463, %v508
      %v531 = vmul.f32 %v468, %v504
      %v532 = vmul.f32 %v468, %v508
      %v533 = vmul.f32 %v473, %v504
      %v534 = vmul.f32 %v473, %v508
      %v535 = vmul.f32 %v478, %v504
      %v536 = vmul.f32 %v478, %v508
      %v537 = vmul.f32 %v483, %v504
      %v538 = vmul.f32 %v483, %v508
      %v539 = vmul.f32 %v488, %v504
      %v540 = vmul.f32 %v488, %v508
      %541 = vset.pattern.permute.xlu0 1
      %542 = vperm.xlu0 %541, %v394
      %v543 = vpop.permute.xlu0 %542
      %545 = vset.pattern.permute.xlu0 1
      %546 = vperm.xlu0 %545, %v395
      %v547 = vpop.permute.xlu0 %546
      %549 = vset.pattern.permute.xlu0 1
      %550 = vperm.xlu0 %549, %v396
      %v551 = vpop.permute.xlu0 %550
      %553 = vset.pattern.permute.xlu0 1
      %554 = vperm.xlu0 %553, %v397
      %v555 = vpop.permute.xlu0 %554
      %557 = vset.pattern.permute.xlu0 1
      %558 = vperm.xlu0 %557, %v398
      %v559 = vpop.permute.xlu0 %558
      %561 = vset.pattern.permute.xlu0 1
      %562 = vperm.xlu0 %561, %v399
      %v563 = vpop.permute.xlu0 %562
      %565 = vset.pattern.permute.xlu0 1
      %566 = vperm.xlu0 %565, %v400
      %v567 = vpop.permute.xlu0 %566
      %569 = vset.pattern.permute.xlu0 1
      %570 = vperm.xlu0 %569, %v401
      %v571 = vpop.permute.xlu0 %570
      %573 = vset.pattern.permute.xlu0 1
      %574 = vperm.xlu0 %573, %v402
      %v575 = vpop.permute.xlu0 %574
      %577 = vset.pattern.permute.xlu0 1
      %578 = vperm.xlu0 %577, %v403
      %v579 = vpop.permute.xlu0 %578
      %581 = vset.pattern.permute.xlu0 1
      %582 = vperm.xlu0 %581, %v404
      %v583 = vpop.permute.xlu0 %582
      %585 = vset.pattern.permute.xlu0 1
      %586 = vperm.xlu0 %585, %v405
      %v587 = vpop.permute.xlu0 %586
      %589 = vset.pattern.permute.xlu0 1
      %590 = vperm.xlu0 %589, %v406
      %v591 = vpop.permute.xlu0 %590
      %593 = vset.pattern.permute.xlu0 1
      %594 = vperm.xlu0 %593, %v407
      %v595 = vpop.permute.xlu0 %594
      %597 = vset.pattern.permute.xlu0 1
      %598 = vperm.xlu0 %597, %v408
      %v599 = vpop.permute.xlu0 %598
      %601 = vset.pattern.permute.xlu0 1
      %602 = vperm.xlu0 %601, %v409
      %v603 = vpop.permute.xlu0 %602
      %v605 = vlaneseq
      %v606 = vshrl.u32 %v605, 7
      %v607 = vsub.s32 1, %v606
      %v608 = vrot.slane %v393, %v607
      %v609 = vlaneseq
      %v610 = vshrl.u32 %v609, 7
      %v611 = vsub.s32 5, %v610
      %v612 = vrot.slane %v393, %v611
      %v615 = vlaneseq
      %v616 = vshrl.u32 %v615, 7
      %v617 = vsub.s32 1, %v616
      %v618 = vrot.slane %v608, %v617
      %v619 = vlaneseq
      %v620 = vshrl.u32 %v619, 7
      %v621 = vsub.s32 1, %v620
      %v622 = vrot.slane %v612, %v621
      %v623 = vmul.f32 %v543, %v618
      %v624 = vmul.f32 %v543, %v622
      %v625 = vmul.f32 %v547, %v618
      %v626 = vmul.f32 %v547, %v622
      %v627 = vmul.f32 %v551, %v618
      %v628 = vmul.f32 %v551, %v622
      %v629 = vmul.f32 %v555, %v618
      %v630 = vmul.f32 %v555, %v622
      %v631 = vmul.f32 %v559, %v618
      %v632 = vmul.f32 %v559, %v622
      %v633 = vmul.f32 %v563, %v618
      %v634 = vmul.f32 %v563, %v622
      %v635 = vmul.f32 %v567, %v618
      %v636 = vmul.f32 %v567, %v622
      %v637 = vmul.f32 %v571, %v618
      %v638 = vmul.f32 %v571, %v622
      %v639 = vmul.f32 %v575, %v618
      %v640 = vmul.f32 %v575, %v622
      %v641 = vmul.f32 %v579, %v618
      %v642 = vmul.f32 %v579, %v622
      %v643 = vmul.f32 %v583, %v618
      %v644 = vmul.f32 %v583, %v622
      %v645 = vmul.f32 %v587, %v618
      %v646 = vmul.f32 %v587, %v622
      %v647 = vmul.f32 %v591, %v618
      %v648 = vmul.f32 %v591, %v622
      %v649 = vmul.f32 %v595, %v618
      %v650 = vmul.f32 %v595, %v622
      %v651 = vmul.f32 %v599, %v618
      %v652 = vmul.f32 %v599, %v622
      %v653 = vmul.f32 %v603, %v618
      %v654 = vmul.f32 %v603, %v622
      %v655 = vadd.f32 %v509, %v623
      %v656 = vadd.f32 %v510, %v624
      %v657 = vadd.f32 %v511, %v625
      %v658 = vadd.f32 %v512, %v626
      %v659 = vadd.f32 %v513, %v627
      %v660 = vadd.f32 %v514, %v628
      %v661 = vadd.f32 %v515, %v629
      %v662 = vadd.f32 %v516, %v630
      %v663 = vadd.f32 %v517, %v631
      %v664 = vadd.f32 %v518, %v632
      %v665 = vadd.f32 %v519, %v633
      %v666 = vadd.f32 %v520, %v634
      %v667 = vadd.f32 %v521, %v635
      %v668 = vadd.f32 %v522, %v636
      %v669 = vadd.f32 %v523, %v637
      %v670 = vadd.f32 %v524, %v638
      %v671 = vadd.f32 %v525, %v639
      %v672 = vadd.f32 %v526, %v640
      %v673 = vadd.f32 %v527, %v641
      %v674 = vadd.f32 %v528, %v642
      %v675 = vadd.f32 %v529, %v643
      %v676 = vadd.f32 %v530, %v644
      %v677 = vadd.f32 %v531, %v645
      %v678 = vadd.f32 %v532, %v646
      %v679 = vadd.f32 %v533, %v647
      %v680 = vadd.f32 %v534, %v648
      %v681 = vadd.f32 %v535, %v649
      %v682 = vadd.f32 %v536, %v650
      %v683 = vadd.f32 %v537, %v651
      %v684 = vadd.f32 %v538, %v652
      %v685 = vadd.f32 %v539, %v653
      %v686 = vadd.f32 %v540, %v654
      %687 = vset.pattern.permute.xlu0 2
      %688 = vperm.xlu0 %687, %v394
      %v689 = vpop.permute.xlu0 %688
      %691 = vset.pattern.permute.xlu0 2
      %692 = vperm.xlu0 %691, %v395
      %v693 = vpop.permute.xlu0 %692
      %695 = vset.pattern.permute.xlu0 2
      %696 = vperm.xlu0 %695, %v396
      %v697 = vpop.permute.xlu0 %696
      %699 = vset.pattern.permute.xlu0 2
      %700 = vperm.xlu0 %699, %v397
      %v701 = vpop.permute.xlu0 %700
      %703 = vset.pattern.permute.xlu0 2
      %704 = vperm.xlu0 %703, %v398
      %v705 = vpop.permute.xlu0 %704
      %707 = vset.pattern.permute.xlu0 2
      %708 = vperm.xlu0 %707, %v399
      %v709 = vpop.permute.xlu0 %708
      %711 = vset.pattern.permute.xlu0 2
      %712 = vperm.xlu0 %711, %v400
      %v713 = vpop.permute.xlu0 %712
      %715 = vset.pattern.permute.xlu0 2
      %716 = vperm.xlu0 %715, %v401
      %v717 = vpop.permute.xlu0 %716
      %719 = vset.pattern.permute.xlu0 2
      %720 = vperm.xlu0 %719, %v402
      %v721 = vpop.permute.xlu0 %720
      %723 = vset.pattern.permute.xlu0 2
      %724 = vperm.xlu0 %723, %v403
      %v725 = vpop.permute.xlu0 %724
      %727 = vset.pattern.permute.xlu0 2
      %728 = vperm.xlu0 %727, %v404
      %v729 = vpop.permute.xlu0 %728
      %731 = vset.pattern.permute.xlu0 2
      %732 = vperm.xlu0 %731, %v405
      %v733 = vpop.permute.xlu0 %732
      %735 = vset.pattern.permute.xlu0 2
      %736 = vperm.xlu0 %735, %v406
      %v737 = vpop.permute.xlu0 %736
      %739 = vset.pattern.permute.xlu0 2
      %740 = vperm.xlu0 %739, %v407
      %v741 = vpop.permute.xlu0 %740
      %743 = vset.pattern.permute.xlu0 2
      %744 = vperm.xlu0 %743, %v408
      %v745 = vpop.permute.xlu0 %744
      %747 = vset.pattern.permute.xlu0 2
      %748 = vperm.xlu0 %747, %v409
      %v749 = vpop.permute.xlu0 %748
      %v751 = vlaneseq
      %v752 = vshrl.u32 %v751, 7
      %v753 = vsub.s32 2, %v752
      %v754 = vrot.slane %v393, %v753
      %v755 = vlaneseq
      %v756 = vshrl.u32 %v755, 7
      %v757 = vsub.s32 6, %v756
      %v758 = vrot.slane %v393, %v757
      %v761 = vlaneseq
      %v762 = vshrl.u32 %v761, 7
      %v763 = vsub.s32 2, %v762
      %v764 = vrot.slane %v754, %v763
      %v765 = vlaneseq
      %v766 = vshrl.u32 %v765, 7
      %v767 = vsub.s32 2, %v766
      %v768 = vrot.slane %v758, %v767
      %v769 = vmul.f32 %v689, %v764
      %v770 = vmul.f32 %v689, %v768
      %v771 = vmul.f32 %v693, %v764
      %v772 = vmul.f32 %v693, %v768
      %v773 = vmul.f32 %v697, %v764
      %v774 = vmul.f32 %v697, %v768
      %v775 = vmul.f32 %v701, %v764
      %v776 = vmul.f32 %v701, %v768
      %v777 = vmul.f32 %v705, %v764
      %v778 = vmul.f32 %v705, %v768
      %v779 = vmul.f32 %v709, %v764
      %v780 = vmul.f32 %v709, %v768
      %v781 = vmul.f32 %v713, %v764
      %v782 = vmul.f32 %v713, %v768
      %v783 = vmul.f32 %v717, %v764
      %v784 = vmul.f32 %v717, %v768
      %v785 = vmul.f32 %v721, %v764
      %v786 = vmul.f32 %v721, %v768
      %v787 = vmul.f32 %v725, %v764
      %v788 = vmul.f32 %v725, %v768
      %v789 = vmul.f32 %v729, %v764
      %v790 = vmul.f32 %v729, %v768
      %v791 = vmul.f32 %v733, %v764
      %v792 = vmul.f32 %v733, %v768
      %v793 = vmul.f32 %v737, %v764
      %v794 = vmul.f32 %v737, %v768
      %v795 = vmul.f32 %v741, %v764
      %v796 = vmul.f32 %v741, %v768
      %v797 = vmul.f32 %v745, %v764
      %v798 = vmul.f32 %v745, %v768
      %v799 = vmul.f32 %v749, %v764
      %v800 = vmul.f32 %v749, %v768
      %v801 = vadd.f32 %v655, %v769
      %v802 = vadd.f32 %v656, %v770
      %v803 = vadd.f32 %v657, %v771
      %v804 = vadd.f32 %v658, %v772
      %v805 = vadd.f32 %v659, %v773
      %v806 = vadd.f32 %v660, %v774
      %v807 = vadd.f32 %v661, %v775
      %v808 = vadd.f32 %v662, %v776
      %v809 = vadd.f32 %v663, %v777
      %v810 = vadd.f32 %v664, %v778
      %v811 = vadd.f32 %v665, %v779
      %v812 = vadd.f32 %v666, %v780
      %v813 = vadd.f32 %v667, %v781
      %v814 = vadd.f32 %v668, %v782
      %v815 = vadd.f32 %v669, %v783
      %v816 = vadd.f32 %v670, %v784
      %v817 = vadd.f32 %v671, %v785
      %v818 = vadd.f32 %v672, %v786
      %v819 = vadd.f32 %v673, %v787
      %v820 = vadd.f32 %v674, %v788
      %v821 = vadd.f32 %v675, %v789
      %v822 = vadd.f32 %v676, %v790
      %v823 = vadd.f32 %v677, %v791
      %v824 = vadd.f32 %v678, %v792
      %v825 = vadd.f32 %v679, %v793
      %v826 = vadd.f32 %v680, %v794
      %v827 = vadd.f32 %v681, %v795
      %v828 = vadd.f32 %v682, %v796
      %v829 = vadd.f32 %v683, %v797
      %v830 = vadd.f32 %v684, %v798
      %v831 = vadd.f32 %v685, %v799
      %v832 = vadd.f32 %v686, %v800
      %v833 = vld [vmem:[%s381] sm:$0xff]
      %v834 = vld [vmem:[%s381 + $0x8] sm:$0xff]
      %v835 = vld [vmem:[%s381 + $0x10] sm:$0xff]
      %v836 = vld [vmem:[%s381 + $0x18] sm:$0xff]
      %v837 = vld [vmem:[%s381 + $0x20] sm:$0xff]
      %v838 = vld [vmem:[%s381 + $0x28] sm:$0xff]
      %v839 = vld [vmem:[%s381 + $0x30] sm:$0xff]
      %v840 = vld [vmem:[%s381 + $0x38] sm:$0xff]
      %v841 = vld [vmem:[%s381 + $0x40] sm:$0xff]
      %v842 = vld [vmem:[%s381 + $0x48] sm:$0xff]
      %v843 = vld [vmem:[%s381 + $0x50] sm:$0xff]
      %v844 = vld [vmem:[%s381 + $0x58] sm:$0xff]
      %v845 = vld [vmem:[%s381 + $0x60] sm:$0xff]
      %v846 = vld [vmem:[%s381 + $0x68] sm:$0xff]
      %v847 = vld [vmem:[%s381 + $0x70] sm:$0xff]
      %v848 = vld [vmem:[%s381 + $0x78] sm:$0xff]
      %850 = vset.pattern.permute.xlu0 0
      %851 = vperm.xlu0 %850, %v833
      %v852 = vpop.permute.xlu0 %851
      %855 = vset.pattern.permute.xlu0 0
      %856 = vperm.xlu0 %855, %v834
      %v857 = vpop.permute.xlu0 %856
      %860 = vset.pattern.permute.xlu0 0
      %861 = vperm.xlu0 %860, %v835
      %v862 = vpop.permute.xlu0 %861
      %865 = vset.pattern.permute.xlu0 0
      %866 = vperm.xlu0 %865, %v836
      %v867 = vpop.permute.xlu0 %866
      %870 = vset.pattern.permute.xlu0 0
      %871 = vperm.xlu0 %870, %v837
      %v872 = vpop.permute.xlu0 %871
      %875 = vset.pattern.permute.xlu0 0
      %876 = vperm.xlu0 %875, %v838
      %v877 = vpop.permute.xlu0 %876
      %880 = vset.pattern.permute.xlu0 0
      %881 = vperm.xlu0 %880, %v839
      %v882 = vpop.permute.xlu0 %881
      %885 = vset.pattern.permute.xlu0 0
      %886 = vperm.xlu0 %885, %v840
      %v887 = vpop.permute.xlu0 %886
      %890 = vset.pattern.permute.xlu0 0
      %891 = vperm.xlu0 %890, %v841
      %v892 = vpop.permute.xlu0 %891
      %895 = vset.pattern.permute.xlu0 0
      %896 = vperm.xlu0 %895, %v842
      %v897 = vpop.permute.xlu0 %896
      %900 = vset.pattern.permute.xlu0 0
      %901 = vperm.xlu0 %900, %v843
      %v902 = vpop.permute.xlu0 %901
      %905 = vset.pattern.permute.xlu0 0
      %906 = vperm.xlu0 %905, %v844
      %v907 = vpop.permute.xlu0 %906
      %910 = vset.pattern.permute.xlu0 0
      %911 = vperm.xlu0 %910, %v845
      %v912 = vpop.permute.xlu0 %911
      %915 = vset.pattern.permute.xlu0 0
      %916 = vperm.xlu0 %915, %v846
      %v917 = vpop.permute.xlu0 %916
      %920 = vset.pattern.permute.xlu0 0
      %921 = vperm.xlu0 %920, %v847
      %v922 = vpop.permute.xlu0 %921
      %925 = vset.pattern.permute.xlu0 0
      %926 = vperm.xlu0 %925, %v848
      %v927 = vpop.permute.xlu0 %926
      %v929 = vadd.f32 %v801, %v852
      %v930 = vadd.f32 %v802, %v852
      %v931 = vadd.f32 %v803, %v857
      %v932 = vadd.f32 %v804, %v857
      %v933 = vadd.f32 %v805, %v862
      %v934 = vadd.f32 %v806, %v862
      %v935 = vadd.f32 %v807, %v867
      %v936 = vadd.f32 %v808, %v867
      %v937 = vadd.f32 %v809, %v872
      %v938 = vadd.f32 %v810, %v872
      %v939 = vadd.f32 %v811, %v877
      %v940 = vadd.f32 %v812, %v877
      %v941 = vadd.f32 %v813, %v882
      %v942 = vadd.f32 %v814, %v882
      %v943 = vadd.f32 %v815, %v887
      %v944 = vadd.f32 %v816, %v887
      %v945 = vadd.f32 %v817, %v892
      %v946 = vadd.f32 %v818, %v892
      %v947 = vadd.f32 %v819, %v897
      %v948 = vadd.f32 %v820, %v897
      %v949 = vadd.f32 %v821, %v902
      %v950 = vadd.f32 %v822, %v902
      %v951 = vadd.f32 %v823, %v907
      %v952 = vadd.f32 %v824, %v907
      %v953 = vadd.f32 %v825, %v912
      %v954 = vadd.f32 %v826, %v912
      %v955 = vadd.f32 %v827, %v917
      %v956 = vadd.f32 %v828, %v917
      %v957 = vadd.f32 %v829, %v922
      %v958 = vadd.f32 %v830, %v922
      %v959 = vadd.f32 %v831, %v927
      %v960 = vadd.f32 %v832, %v927
      %v961 = vmax.f32 %v929, 0.0
      %v962 = vmax.f32 %v930, 0.0
      %v963 = vmax.f32 %v931, 0.0
      %v964 = vmax.f32 %v932, 0.0
      %v965 = vmax.f32 %v933, 0.0
      %v966 = vmax.f32 %v934, 0.0
      %v967 = vmax.f32 %v935, 0.0
      %v968 = vmax.f32 %v936, 0.0
      %v969 = vmax.f32 %v937, 0.0
      %v970 = vmax.f32 %v938, 0.0
      %v971 = vmax.f32 %v939, 0.0
      %v972 = vmax.f32 %v940, 0.0
      %v973 = vmax.f32 %v941, 0.0
      %v974 = vmax.f32 %v942, 0.0
      %v975 = vmax.f32 %v943, 0.0
      %v976 = vmax.f32 %v944, 0.0
      %v977 = vmax.f32 %v945, 0.0
      %v978 = vmax.f32 %v946, 0.0
      %v979 = vmax.f32 %v947, 0.0
      %v980 = vmax.f32 %v948, 0.0
      %v981 = vmax.f32 %v949, 0.0
      %v982 = vmax.f32 %v950, 0.0
      %v983 = vmax.f32 %v951, 0.0
      %v984 = vmax.f32 %v952, 0.0
      %v985 = vmax.f32 %v953, 0.0
      %v986 = vmax.f32 %v954, 0.0
      %v987 = vmax.f32 %v955, 0.0
      %v988 = vmax.f32 %v956, 0.0
      %v989 = vmax.f32 %v957, 0.0
      %v990 = vmax.f32 %v958, 0.0
      %v991 = vmax.f32 %v959, 0.0
      %v992 = vmax.f32 %v960, 0.0
      %v993 = vld [vmem:[%s3] sm:$0xf]
      %v994 = vld [vmem:[%s3 + $0x4] sm:$0xf]
      %v995 = vld [vmem:[%s3 + $0x8] sm:$0xf]
      %v996 = vld [vmem:[%s3 + $0xc] sm:$0xf]
      %v997 = vld [vmem:[%s3 + $0x10] sm:$0xf]
      %v998 = vld [vmem:[%s3 + $0x14] sm:$0xf]
      %v999 = vld [vmem:[%s3 + $0x18] sm:$0xf]
      %v1000 = vld [vmem:[%s3 + $0x1c] sm:$0xf]
      %v1001 = vld [vmem:[%s3 + $0x20] sm:$0xf]
      %v1002 = vld [vmem:[%s3 + $0x24] sm:$0xf]
      %v1003 = vld [vmem:[%s3 + $0x28] sm:$0xf]
      %v1004 = vld [vmem:[%s3 + $0x2c] sm:$0xf]
      %v1005 = vld [vmem:[%s3 + $0x30] sm:$0xf]
      %v1006 = vld [vmem:[%s3 + $0x34] sm:$0xf]
      %v1007 = vld [vmem:[%s3 + $0x38] sm:$0xf]
      %v1008 = vld [vmem:[%s3 + $0x3c] sm:$0xf]
      %v1009 = vpack.c.bf16 %v963, %v961
      %v1010 = vpack.c.bf16 %v964, %v962
      %v1011 = vpack.c.bf16 %v967, %v965
      %v1012 = vpack.c.bf16 %v968, %v966
      %v1013 = vpack.c.bf16 %v971, %v969
      %v1014 = vpack.c.bf16 %v972, %v970
      %v1015 = vpack.c.bf16 %v975, %v973
      %v1016 = vpack.c.bf16 %v976, %v974
      %v1017 = vpack.c.bf16 %v979, %v977
      %v1018 = vpack.c.bf16 %v980, %v978
      %v1019 = vpack.c.bf16 %v983, %v981
      %v1020 = vpack.c.bf16 %v984, %v982
      %v1021 = vpack.c.bf16 %v987, %v985
      %v1022 = vpack.c.bf16 %v988, %v986
      %v1023 = vpack.c.bf16 %v991, %v989
      %v1024 = vpack.c.bf16 %v992, %v990
      %v1025 = vld [vmem:[%s4] sm:$0xff]
      %v1026 = vld [vmem:[%s4 + $0x8] sm:$0xff]
      %v1027 = vld [vmem:[%s4 + $0x10] sm:$0xff]
      %v1028 = vld [vmem:[%s4 + $0x18] sm:$0xff]
      %v1029 = vld [vmem:[%s4 + $0x20] sm:$0xff]
      %v1030 = vld [vmem:[%s4 + $0x28] sm:$0xff]
      %v1031 = vld [vmem:[%s4 + $0x30] sm:$0xff]
      %v1032 = vld [vmem:[%s4 + $0x38] sm:$0xff]
      %v1033 = vld [vmem:[%s4 + $0x40] sm:$0xff]
      %v1034 = vld [vmem:[%s4 + $0x48] sm:$0xff]
      %v1035 = vld [vmem:[%s4 + $0x50] sm:$0xff]
      %v1036 = vld [vmem:[%s4 + $0x58] sm:$0xff]
      %v1037 = vld [vmem:[%s4 + $0x60] sm:$0xff]
      %v1038 = vld [vmem:[%s4 + $0x68] sm:$0xff]
      %v1039 = vld [vmem:[%s4 + $0x70] sm:$0xff]
      %v1040 = vld [vmem:[%s4 + $0x78] sm:$0xff]
      %1042 = vset.pattern.permute.xlu0 0
      %1043 = vperm.xlu0 %1042, %v1025
      %v1044 = vpop.permute.xlu0 %1043
      %1047 = vset.pattern.permute.xlu0 0
      %1048 = vperm.xlu0 %1047, %v1026
      %v1049 = vpop.permute.xlu0 %1048
      %1052 = vset.pattern.permute.xlu0 0
      %1053 = vperm.xlu0 %1052, %v1027
      %v1054 = vpop.permute.xlu0 %1053
      %1057 = vset.pattern.permute.xlu0 0
      %1058 = vperm.xlu0 %1057, %v1028
      %v1059 = vpop.permute.xlu0 %1058
      %1062 = vset.pattern.permute.xlu0 0
      %1063 = vperm.xlu0 %1062, %v1029
      %v1064 = vpop.permute.xlu0 %1063
      %1067 = vset.pattern.permute.xlu0 0
      %1068 = vperm.xlu0 %1067, %v1030
      %v1069 = vpop.permute.xlu0 %1068
      %1072 = vset.pattern.permute.xlu0 0
      %1073 = vperm.xlu0 %1072, %v1031
      %v1074 = vpop.permute.xlu0 %1073
      %1077 = vset.pattern.permute.xlu0 0
      %1078 = vperm.xlu0 %1077, %v1032
      %v1079 = vpop.permute.xlu0 %1078
      %1082 = vset.pattern.permute.xlu0 0
      %1083 = vperm.xlu0 %1082, %v1033
      %v1084 = vpop.permute.xlu0 %1083
      %1087 = vset.pattern.permute.xlu0 0
      %1088 = vperm.xlu0 %1087, %v1034
      %v1089 = vpop.permute.xlu0 %1088
      %1092 = vset.pattern.permute.xlu0 0
      %1093 = vperm.xlu0 %1092, %v1035
      %v1094 = vpop.permute.xlu0 %1093
      %1097 = vset.pattern.permute.xlu0 0
      %1098 = vperm.xlu0 %1097, %v1036
      %v1099 = vpop.permute.xlu0 %1098
      %1102 = vset.pattern.permute.xlu0 0
      %1103 = vperm.xlu0 %1102, %v1037
      %v1104 = vpop.permute.xlu0 %1103
      %1107 = vset.pattern.permute.xlu0 0
      %1108 = vperm.xlu0 %1107, %v1038
      %v1109 = vpop.permute.xlu0 %1108
      %1112 = vset.pattern.permute.xlu0 0
      %1113 = vperm.xlu0 %1112, %v1039
      %v1114 = vpop.permute.xlu0 %1113
      %1117 = vset.pattern.permute.xlu0 0
      %1118 = vperm.xlu0 %1117, %v1040
      %v1119 = vpop.permute.xlu0 %1118
      %v1137 = vunpack.c.l.b16 %v993
      %v1138 = vunpack.c.l.b16 %v994
      %v1139 = vunpack.c.l.b16 %v995
      %v1140 = vunpack.c.l.b16 %v996
      %v1141 = vunpack.c.l.b16 %v997
      %v1142 = vunpack.c.l.b16 %v998
      %v1143 = vunpack.c.l.b16 %v999
      %v1144 = vunpack.c.l.b16 %v1000
      %v1145 = vunpack.c.l.b16 %v1001
      %v1146 = vunpack.c.l.b16 %v1002
      %v1147 = vunpack.c.l.b16 %v1003
      %v1148 = vunpack.c.l.b16 %v1004
      %v1149 = vunpack.c.l.b16 %v1005
      %v1150 = vunpack.c.l.b16 %v1006
      %v1151 = vunpack.c.l.b16 %v1007
      %v1152 = vunpack.c.l.b16 %v1008
      %v1153 = vpack.c.b16 %v1138, %v1137
      %v1154 = vpack.c.b16 %v1140, %v1139
      %v1155 = vpack.c.b16 %v1142, %v1141
      %v1156 = vpack.c.b16 %v1144, %v1143
      %v1157 = vpack.c.b16 %v1146, %v1145
      %v1158 = vpack.c.b16 %v1148, %v1147
      %v1159 = vpack.c.b16 %v1150, %v1149
      %v1160 = vpack.c.b16 %v1152, %v1151
      %1169 = vmatprep.subr.bf16.mxu0 %v1024
      %1170 = vmatpush1.bf16.msra.mxu0 %v1023
      %1171 = vmatprep.subr.bf16.mxu0 %v1022
      %1172 = vmatpush1.bf16.msra.mxu0 %v1021
      %1173 = vmatprep.subr.bf16.mxu0 %v1020
      %1174 = vmatpush1.bf16.msra.mxu0 %v1019
      %1175 = vmatprep.subr.bf16.mxu0 %v1018
      %1176 = vmatpush1.bf16.msra.mxu0 %v1017
      %1177 = vmatprep.subr.bf16.mxu0 %v1016
      %1178 = vmatpush1.bf16.msra.mxu0 %v1015
      %1179 = vmatprep.subr.bf16.mxu0 %v1014
      %1180 = vmatpush1.bf16.msra.mxu0 %v1013
      %1181 = vmatprep.subr.bf16.mxu0 %v1012
      %1182 = vmatpush1.bf16.msra.mxu0 %v1011
      %1183 = vmatprep.subr.bf16.mxu0 %v1010
      %1184 = vmatpush1.bf16.msra.mxu0 %v1009
      %1185 = vmatprep.subr.bf16.mxu0 0
      %1186 = vmatpush2.bf16.msra.mxu0 0
      %1187 = vmatprep.subr.bf16.mxu0 0
      %1188 = vmatpush2.bf16.msra.mxu0 0
      %1189 = vmatprep.subr.bf16.mxu0 0
      %1190 = vmatpush2.bf16.msra.mxu0 0
      %1191 = vmatprep.subr.bf16.mxu0 0
      %1192 = vmatpush2.bf16.msra.mxu0 0
      %1193 = vmatprep.subr.bf16.mxu0 0
      %1194 = vmatpush2.bf16.msra.mxu0 0
      %1195 = vmatprep.subr.bf16.mxu0 0
      %1196 = vmatpush2.bf16.msra.mxu0 0
      %1197 = vmatprep.subr.bf16.mxu0 0
      %1198 = vmatpush2.bf16.msra.mxu0 0
      %1199 = vmatprep.subr.bf16.mxu0 0
      %1200 = vmatpush2.bf16.msra.mxu0 0
      %1201 = vmatprep.mubr.bf16.mxu0 0
      %1202 = vmatmul.mubr.bf16.gmra.mxu0 %v1153
      %v1203 = vpop.f32.mrf.mxu0
      %v1204 = vadd.f32 %v1044, %v1203
      %v1205 = vpop.f32.mrf.mxu0
      %v1206 = vadd.f32 %v1044, %v1205
      %v1207 = vpop.f32.mrf.mxu0
      %v1208 = vadd.f32 %v1049, %v1207
      %v1209 = vpop.f32.mrf.mxu0
      %v1210 = vadd.f32 %v1049, %v1209
      %1211 = vmatprep.mubr.bf16.mxu0 0
      %1212 = vmatmul.mubr.bf16.gmra.mxu0 %v1154
      %v1213 = vpop.f32.mrf.mxu0
      %v1214 = vadd.f32 %v1054, %v1213
      %v1215 = vpop.f32.mrf.mxu0
      %v1216 = vadd.f32 %v1054, %v1215
      %v1217 = vpop.f32.mrf.mxu0
      %v1218 = vadd.f32 %v1059, %v1217
      %v1219 = vpop.f32.mrf.mxu0
      %v1220 = vadd.f32 %v1059, %v1219
      %1221 = vmatprep.mubr.bf16.mxu0 0
      %1222 = vmatmul.mubr.bf16.gmra.mxu0 %v1155
      %v1223 = vpop.f32.mrf.mxu0
      %v1224 = vadd.f32 %v1064, %v1223
      %v1225 = vpop.f32.mrf.mxu0
      %v1226 = vadd.f32 %v1064, %v1225
      %v1227 = vpop.f32.mrf.mxu0
      %v1228 = vadd.f32 %v1069, %v1227
      %v1229 = vpop.f32.mrf.mxu0
      %v1230 = vadd.f32 %v1069, %v1229
      %1231 = vmatprep.mubr.bf16.mxu0 0
      %1232 = vmatmul.mubr.bf16.gmra.mxu0 %v1156
      %v1233 = vpop.f32.mrf.mxu0
      %v1234 = vadd.f32 %v1074, %v1233
      %v1235 = vpop.f32.mrf.mxu0
      %v1236 = vadd.f32 %v1074, %v1235
      %v1237 = vpop.f32.mrf.mxu0
      %v1238 = vadd.f32 %v1079, %v1237
      %v1239 = vpop.f32.mrf.mxu0
      %v1240 = vadd.f32 %v1079, %v1239
      %1241 = vmatprep.mubr.bf16.mxu0 0
      %1242 = vmatmul.mubr.bf16.gmra.mxu0 %v1157
      %v1243 = vpop.f32.mrf.mxu0
      %v1244 = vadd.f32 %v1084, %v1243
      %v1245 = vpop.f32.mrf.mxu0
      %v1246 = vadd.f32 %v1084, %v1245
      %v1247 = vpop.f32.mrf.mxu0
      %v1248 = vadd.f32 %v1089, %v1247
      %v1249 = vpop.f32.mrf.mxu0
      %v1250 = vadd.f32 %v1089, %v1249
      %1251 = vmatprep.mubr.bf16.mxu0 0
      %1252 = vmatmul.mubr.bf16.gmra.mxu0 %v1158
      %v1253 = vpop.f32.mrf.mxu0
      %v1254 = vadd.f32 %v1094, %v1253
      %v1255 = vpop.f32.mrf.mxu0
      %v1256 = vadd.f32 %v1094, %v1255
      %v1257 = vpop.f32.mrf.mxu0
      %v1258 = vadd.f32 %v1099, %v1257
      %v1259 = vpop.f32.mrf.mxu0
      %v1260 = vadd.f32 %v1099, %v1259
      %1261 = vmatprep.mubr.bf16.mxu0 0
      %1262 = vmatmul.mubr.bf16.gmra.mxu0 %v1159
      %v1263 = vpop.f32.mrf.mxu0
      %v1264 = vadd.f32 %v1104, %v1263
      %v1265 = vpop.f32.mrf.mxu0
      %v1266 = vadd.f32 %v1104, %v1265
      %v1267 = vpop.f32.mrf.mxu0
      %v1268 = vadd.f32 %v1109, %v1267
      %v1269 = vpop.f32.mrf.mxu0
      %v1270 = vadd.f32 %v1109, %v1269
      %1271 = vmatprep.mubr.bf16.mxu0 0
      %1272 = vmatmul.mubr.bf16.gmra.mxu0 %v1160
      %v1273 = vpop.f32.mrf.mxu0
      %v1274 = vadd.f32 %v1114, %v1273
      %v1275 = vpop.f32.mrf.mxu0
      %v1276 = vadd.f32 %v1114, %v1275
      %v1277 = vpop.f32.mrf.mxu0
      %v1278 = vadd.f32 %v1119, %v1277
      %v1279 = vpop.f32.mrf.mxu0
      %v1280 = vadd.f32 %v1119, %v1279
      %1281 = vdwg.mxu0
      %v1282 = vmax.f32 %v1204, 0.0
      %v1283 = vmax.f32 %v1206, 0.0
      %v1284 = vmax.f32 %v1208, 0.0
      %v1285 = vmax.f32 %v1210, 0.0
      %v1286 = vmax.f32 %v1214, 0.0
      %v1287 = vmax.f32 %v1216, 0.0
      %v1288 = vmax.f32 %v1218, 0.0
      %v1289 = vmax.f32 %v1220, 0.0
      %v1290 = vmax.f32 %v1224, 0.0
      %v1291 = vmax.f32 %v1226, 0.0
      %v1292 = vmax.f32 %v1228, 0.0
      %v1293 = vmax.f32 %v1230, 0.0
      %v1294 = vmax.f32 %v1234, 0.0
      %v1295 = vmax.f32 %v1236, 0.0
      %v1296 = vmax.f32 %v1238, 0.0
      %v1297 = vmax.f32 %v1240, 0.0
      %v1298 = vmax.f32 %v1244, 0.0
      %v1299 = vmax.f32 %v1246, 0.0
      %v1300 = vmax.f32 %v1248, 0.0
      %v1301 = vmax.f32 %v1250, 0.0
      %v1302 = vmax.f32 %v1254, 0.0
      %v1303 = vmax.f32 %v1256, 0.0
      %v1304 = vmax.f32 %v1258, 0.0
      %v1305 = vmax.f32 %v1260, 0.0
      %v1306 = vmax.f32 %v1264, 0.0
      %v1307 = vmax.f32 %v1266, 0.0
      %v1308 = vmax.f32 %v1268, 0.0
      %v1309 = vmax.f32 %v1270, 0.0
      %v1310 = vmax.f32 %v1274, 0.0
      %v1311 = vmax.f32 %v1276, 0.0
      %v1312 = vmax.f32 %v1278, 0.0
      %v1313 = vmax.f32 %v1280, 0.0
      %v1314 = vld [vmem:[%s5] sm:$0xf]
      %v1315 = vld [vmem:[%s5 + $0x4] sm:$0xf]
      %v1316 = vld [vmem:[%s5 + $0x8] sm:$0xf]
      %v1317 = vld [vmem:[%s5 + $0xc] sm:$0xf]
      %v1318 = vld [vmem:[%s5 + $0x10] sm:$0xf]
      %v1319 = vld [vmem:[%s5 + $0x14] sm:$0xf]
      %v1320 = vld [vmem:[%s5 + $0x18] sm:$0xf]
      %v1321 = vld [vmem:[%s5 + $0x1c] sm:$0xf]
      %v1322 = vld [vmem:[%s5 + $0x20] sm:$0xf]
      %v1323 = vld [vmem:[%s5 + $0x24] sm:$0xf]
      %v1324 = vld [vmem:[%s5 + $0x28] sm:$0xf]
      %v1325 = vld [vmem:[%s5 + $0x2c] sm:$0xf]
      %v1326 = vld [vmem:[%s5 + $0x30] sm:$0xf]
      %v1327 = vld [vmem:[%s5 + $0x34] sm:$0xf]
      %v1328 = vld [vmem:[%s5 + $0x38] sm:$0xf]
      %v1329 = vld [vmem:[%s5 + $0x3c] sm:$0xf]
      %v1330 = vpack.c.bf16 %v1284, %v1282
      %v1331 = vpack.c.bf16 %v1285, %v1283
      %v1332 = vpack.c.bf16 %v1288, %v1286
      %v1333 = vpack.c.bf16 %v1289, %v1287
      %v1334 = vpack.c.bf16 %v1292, %v1290
      %v1335 = vpack.c.bf16 %v1293, %v1291
      %v1336 = vpack.c.bf16 %v1296, %v1294
      %v1337 = vpack.c.bf16 %v1297, %v1295
      %v1338 = vpack.c.bf16 %v1300, %v1298
      %v1339 = vpack.c.bf16 %v1301, %v1299
      %v1340 = vpack.c.bf16 %v1304, %v1302
      %v1341 = vpack.c.bf16 %v1305, %v1303
      %v1342 = vpack.c.bf16 %v1308, %v1306
      %v1343 = vpack.c.bf16 %v1309, %v1307
      %v1344 = vpack.c.bf16 %v1312, %v1310
      %v1345 = vpack.c.bf16 %v1313, %v1311
      %v1346 = vld [vmem:[%s6] sm:$0xff]
      %v1347 = vld [vmem:[%s6 + $0x8] sm:$0xff]
      %v1348 = vld [vmem:[%s6 + $0x10] sm:$0xff]
      %v1349 = vld [vmem:[%s6 + $0x18] sm:$0xff]
      %v1350 = vld [vmem:[%s6 + $0x20] sm:$0xff]
      %v1351 = vld [vmem:[%s6 + $0x28] sm:$0xff]
      %v1352 = vld [vmem:[%s6 + $0x30] sm:$0xff]
      %v1353 = vld [vmem:[%s6 + $0x38] sm:$0xff]
      %v1354 = vld [vmem:[%s6 + $0x40] sm:$0xff]
      %v1355 = vld [vmem:[%s6 + $0x48] sm:$0xff]
      %v1356 = vld [vmem:[%s6 + $0x50] sm:$0xff]
      %v1357 = vld [vmem:[%s6 + $0x58] sm:$0xff]
      %v1358 = vld [vmem:[%s6 + $0x60] sm:$0xff]
      %v1359 = vld [vmem:[%s6 + $0x68] sm:$0xff]
      %v1360 = vld [vmem:[%s6 + $0x70] sm:$0xff]
      %v1361 = vld [vmem:[%s6 + $0x78] sm:$0xff]
      %1363 = vset.pattern.permute.xlu0 0
      %1364 = vperm.xlu0 %1363, %v1346
      %v1365 = vpop.permute.xlu0 %1364
      %1368 = vset.pattern.permute.xlu0 0
      %1369 = vperm.xlu0 %1368, %v1347
      %v1370 = vpop.permute.xlu0 %1369
      %1373 = vset.pattern.permute.xlu0 0
      %1374 = vperm.xlu0 %1373, %v1348
      %v1375 = vpop.permute.xlu0 %1374
      %1378 = vset.pattern.permute.xlu0 0
      %1379 = vperm.xlu0 %1378, %v1349
      %v1380 = vpop.permute.xlu0 %1379
      %1383 = vset.pattern.permute.xlu0 0
      %1384 = vperm.xlu0 %1383, %v1350
      %v1385 = vpop.permute.xlu0 %1384
      %1388 = vset.pattern.permute.xlu0 0
      %1389 = vperm.xlu0 %1388, %v1351
      %v1390 = vpop.permute.xlu0 %1389
      %1393 = vset.pattern.permute.xlu0 0
      %1394 = vperm.xlu0 %1393, %v1352
      %v1395 = vpop.permute.xlu0 %1394
      %1398 = vset.pattern.permute.xlu0 0
      %1399 = vperm.xlu0 %1398, %v1353
      %v1400 = vpop.permute.xlu0 %1399
      %1403 = vset.pattern.permute.xlu0 0
      %1404 = vperm.xlu0 %1403, %v1354
      %v1405 = vpop.permute.xlu0 %1404
      %1408 = vset.pattern.permute.xlu0 0
      %1409 = vperm.xlu0 %1408, %v1355
      %v1410 = vpop.permute.xlu0 %1409
      %1413 = vset.pattern.permute.xlu0 0
      %1414 = vperm.xlu0 %1413, %v1356
      %v1415 = vpop.permute.xlu0 %1414
      %1418 = vset.pattern.permute.xlu0 0
      %1419 = vperm.xlu0 %1418, %v1357
      %v1420 = vpop.permute.xlu0 %1419
      %1423 = vset.pattern.permute.xlu0 0
      %1424 = vperm.xlu0 %1423, %v1358
      %v1425 = vpop.permute.xlu0 %1424
      %1428 = vset.pattern.permute.xlu0 0
      %1429 = vperm.xlu0 %1428, %v1359
      %v1430 = vpop.permute.xlu0 %1429
      %1433 = vset.pattern.permute.xlu0 0
      %1434 = vperm.xlu0 %1433, %v1360
      %v1435 = vpop.permute.xlu0 %1434
      %1438 = vset.pattern.permute.xlu0 0
      %1439 = vperm.xlu0 %1438, %v1361
      %v1440 = vpop.permute.xlu0 %1439
      %v1458 = vunpack.c.l.b16 %v1314
      %v1459 = vunpack.c.l.b16 %v1315
      %v1460 = vunpack.c.l.b16 %v1316
      %v1461 = vunpack.c.l.b16 %v1317
      %v1462 = vunpack.c.l.b16 %v1318
      %v1463 = vunpack.c.l.b16 %v1319
      %v1464 = vunpack.c.l.b16 %v1320
      %v1465 = vunpack.c.l.b16 %v1321
      %v1466 = vunpack.c.l.b16 %v1322
      %v1467 = vunpack.c.l.b16 %v1323
      %v1468 = vunpack.c.l.b16 %v1324
      %v1469 = vunpack.c.l.b16 %v1325
      %v1470 = vunpack.c.l.b16 %v1326
      %v1471 = vunpack.c.l.b16 %v1327
      %v1472 = vunpack.c.l.b16 %v1328
      %v1473 = vunpack.c.l.b16 %v1329
      %v1474 = vpack.c.b16 %v1459, %v1458
      %v1475 = vpack.c.b16 %v1461, %v1460
      %v1476 = vpack.c.b16 %v1463, %v1462
      %v1477 = vpack.c.b16 %v1465, %v1464
      %v1478 = vpack.c.b16 %v1467, %v1466
      %v1479 = vpack.c.b16 %v1469, %v1468
      %v1480 = vpack.c.b16 %v1471, %v1470
      %v1481 = vpack.c.b16 %v1473, %v1472
      %1490 = vmatprep.subr.bf16.mxu0 %v1345
      %1491 = vmatpush1.bf16.msra.mxu0 %v1344
      %1492 = vmatprep.subr.bf16.mxu0 %v1343
      %1493 = vmatpush1.bf16.msra.mxu0 %v1342
      %1494 = vmatprep.subr.bf16.mxu0 %v1341
      %1495 = vmatpush1.bf16.msra.mxu0 %v1340
      %1496 = vmatprep.subr.bf16.mxu0 %v1339
      %1497 = vmatpush1.bf16.msra.mxu0 %v1338
      %1498 = vmatprep.subr.bf16.mxu0 %v1337
      %1499 = vmatpush1.bf16.msra.mxu0 %v1336
      %1500 = vmatprep.subr.bf16.mxu0 %v1335
      %1501 = vmatpush1.bf16.msra.mxu0 %v1334
      %1502 = vmatprep.subr.bf16.mxu0 %v1333
      %1503 = vmatpush1.bf16.msra.mxu0 %v1332
      %1504 = vmatprep.subr.bf16.mxu0 %v1331
      %1505 = vmatpush1.bf16.msra.mxu0 %v1330
      %1506 = vmatprep.subr.bf16.mxu0 0
      %1507 = vmatpush2.bf16.msra.mxu0 0
      %1508 = vmatprep.subr.bf16.mxu0 0
      %1509 = vmatpush2.bf16.msra.mxu0 0
      %1510 = vmatprep.subr.bf16.mxu0 0
      %1511 = vmatpush2.bf16.msra.mxu0 0
      %1512 = vmatprep.subr.bf16.mxu0 0
      %1513 = vmatpush2.bf16.msra.mxu0 0
      %1514 = vmatprep.subr.bf16.mxu0 0
      %1515 = vmatpush2.bf16.msra.mxu0 0
      %1516 = vmatprep.subr.bf16.mxu0 0
      %1517 = vmatpush2.bf16.msra.mxu0 0
      %1518 = vmatprep.subr.bf16.mxu0 0
      %1519 = vmatpush2.bf16.msra.mxu0 0
      %1520 = vmatprep.subr.bf16.mxu0 0
      %1521 = vmatpush2.bf16.msra.mxu0 0
      %1522 = vmatprep.mubr.bf16.mxu0 0
      %1523 = vmatmul.mubr.bf16.gmra.mxu0 %v1474
      %v1524 = vpop.f32.mrf.mxu0
      %v1525 = vadd.f32 %v1365, %v1524
      %v1526 = vpop.f32.mrf.mxu0
      %v1527 = vadd.f32 %v1365, %v1526
      %v1528 = vpop.f32.mrf.mxu0
      %v1529 = vadd.f32 %v1370, %v1528
      %v1530 = vpop.f32.mrf.mxu0
      %v1531 = vadd.f32 %v1370, %v1530
      %1532 = vmatprep.mubr.bf16.mxu0 0
      %1533 = vmatmul.mubr.bf16.gmra.mxu0 %v1475
      %v1534 = vpop.f32.mrf.mxu0
      %v1535 = vadd.f32 %v1375, %v1534
      %v1536 = vpop.f32.mrf.mxu0
      %v1537 = vadd.f32 %v1375, %v1536
      %v1538 = vpop.f32.mrf.mxu0
      %v1539 = vadd.f32 %v1380, %v1538
      %v1540 = vpop.f32.mrf.mxu0
      %v1541 = vadd.f32 %v1380, %v1540
      %1542 = vmatprep.mubr.bf16.mxu0 0
      %1543 = vmatmul.mubr.bf16.gmra.mxu0 %v1476
      %v1544 = vpop.f32.mrf.mxu0
      %v1545 = vadd.f32 %v1385, %v1544
      %v1546 = vpop.f32.mrf.mxu0
      %v1547 = vadd.f32 %v1385, %v1546
      %v1548 = vpop.f32.mrf.mxu0
      %v1549 = vadd.f32 %v1390, %v1548
      %v1550 = vpop.f32.mrf.mxu0
      %v1551 = vadd.f32 %v1390, %v1550
      %1552 = vmatprep.mubr.bf16.mxu0 0
      %1553 = vmatmul.mubr.bf16.gmra.mxu0 %v1477
      %v1554 = vpop.f32.mrf.mxu0
      %v1555 = vadd.f32 %v1395, %v1554
      %v1556 = vpop.f32.mrf.mxu0
      %v1557 = vadd.f32 %v1395, %v1556
      %v1558 = vpop.f32.mrf.mxu0
      %v1559 = vadd.f32 %v1400, %v1558
      %v1560 = vpop.f32.mrf.mxu0
      %v1561 = vadd.f32 %v1400, %v1560
      %1562 = vmatprep.mubr.bf16.mxu0 0
      %1563 = vmatmul.mubr.bf16.gmra.mxu0 %v1478
      %v1564 = vpop.f32.mrf.mxu0
      %v1565 = vadd.f32 %v1405, %v1564
      %v1566 = vpop.f32.mrf.mxu0
      %v1567 = vadd.f32 %v1405, %v1566
      %v1568 = vpop.f32.mrf.mxu0
      %v1569 = vadd.f32 %v1410, %v1568
      %v1570 = vpop.f32.mrf.mxu0
      %v1571 = vadd.f32 %v1410, %v1570
      %1572 = vmatprep.mubr.bf16.mxu0 0
      %1573 = vmatmul.mubr.bf16.gmra.mxu0 %v1479
      %v1574 = vpop.f32.mrf.mxu0
      %v1575 = vadd.f32 %v1415, %v1574
      %v1576 = vpop.f32.mrf.mxu0
      %v1577 = vadd.f32 %v1415, %v1576
      %v1578 = vpop.f32.mrf.mxu0
      %v1579 = vadd.f32 %v1420, %v1578
      %v1580 = vpop.f32.mrf.mxu0
      %v1581 = vadd.f32 %v1420, %v1580
      %1582 = vmatprep.mubr.bf16.mxu0 0
      %1583 = vmatmul.mubr.bf16.gmra.mxu0 %v1480
      %v1584 = vpop.f32.mrf.mxu0
      %v1585 = vadd.f32 %v1425, %v1584
      %v1586 = vpop.f32.mrf.mxu0
      %v1587 = vadd.f32 %v1425, %v1586
      %v1588 = vpop.f32.mrf.mxu0
      %v1589 = vadd.f32 %v1430, %v1588
      %v1590 = vpop.f32.mrf.mxu0
      %v1591 = vadd.f32 %v1430, %v1590
      %1592 = vmatprep.mubr.bf16.mxu0 0
      %1593 = vmatmul.mubr.bf16.gmra.mxu0 %v1481
      %v1594 = vpop.f32.mrf.mxu0
      %v1595 = vadd.f32 %v1435, %v1594
      %v1596 = vpop.f32.mrf.mxu0
      %v1597 = vadd.f32 %v1435, %v1596
      %v1598 = vpop.f32.mrf.mxu0
      %v1599 = vadd.f32 %v1440, %v1598
      %v1600 = vpop.f32.mrf.mxu0
      %v1601 = vadd.f32 %v1440, %v1600
      %1602 = vdwg.mxu0
      %v1603 = vmax.f32 %v1525, 0.0
      %v1604 = vmax.f32 %v1527, 0.0
      %v1605 = vmax.f32 %v1529, 0.0
      %v1606 = vmax.f32 %v1531, 0.0
      %v1607 = vmax.f32 %v1535, 0.0
      %v1608 = vmax.f32 %v1537, 0.0
      %v1609 = vmax.f32 %v1539, 0.0
      %v1610 = vmax.f32 %v1541, 0.0
      %v1611 = vmax.f32 %v1545, 0.0
      %v1612 = vmax.f32 %v1547, 0.0
      %v1613 = vmax.f32 %v1549, 0.0
      %v1614 = vmax.f32 %v1551, 0.0
      %v1615 = vmax.f32 %v1555, 0.0
      %v1616 = vmax.f32 %v1557, 0.0
      %v1617 = vmax.f32 %v1559, 0.0
      %v1618 = vmax.f32 %v1561, 0.0
      %v1619 = vmax.f32 %v1565, 0.0
      %v1620 = vmax.f32 %v1567, 0.0
      %v1621 = vmax.f32 %v1569, 0.0
      %v1622 = vmax.f32 %v1571, 0.0
      %v1623 = vmax.f32 %v1575, 0.0
      %v1624 = vmax.f32 %v1577, 0.0
      %v1625 = vmax.f32 %v1579, 0.0
      %v1626 = vmax.f32 %v1581, 0.0
      %v1627 = vmax.f32 %v1585, 0.0
      %v1628 = vmax.f32 %v1587, 0.0
      %v1629 = vmax.f32 %v1589, 0.0
      %v1630 = vmax.f32 %v1591, 0.0
      %v1631 = vmax.f32 %v1595, 0.0
      %v1632 = vmax.f32 %v1597, 0.0
      %v1633 = vmax.f32 %v1599, 0.0
      %v1634 = vmax.f32 %v1601, 0.0
      %v1635 = vld [vmem:[%s7] sm:$0x3]
      %v1636 = vpack.c.bf16 %v1605, %v1603
      %v1637 = vpack.c.bf16 %v1606, %v1604
      %v1638 = vpack.c.bf16 %v1609, %v1607
      %v1639 = vpack.c.bf16 %v1610, %v1608
      %v1640 = vpack.c.bf16 %v1613, %v1611
      %v1641 = vpack.c.bf16 %v1614, %v1612
      %v1642 = vpack.c.bf16 %v1617, %v1615
      %v1643 = vpack.c.bf16 %v1618, %v1616
      %v1644 = vpack.c.bf16 %v1621, %v1619
      %v1645 = vpack.c.bf16 %v1622, %v1620
      %v1646 = vpack.c.bf16 %v1625, %v1623
      %v1647 = vpack.c.bf16 %v1626, %v1624
      %v1648 = vpack.c.bf16 %v1629, %v1627
      %v1649 = vpack.c.bf16 %v1630, %v1628
      %v1650 = vpack.c.bf16 %v1633, %v1631
      %v1651 = vpack.c.bf16 %v1634, %v1632
      %v1652 = vld [vmem:[%s8] sm:$0x7]
      %1654 = vset.pattern.permute.xlu0 0
      %1655 = vperm.xlu0 %1654, %v1652
      %v1656 = vpop.permute.xlu0 %1655
      %1658 = vmatprep.subr.bf16.mxu0 %v1651
      %1659 = vmatpush1.bf16.msra.mxu0 %v1650
      %1660 = vmatprep.subr.bf16.mxu0 %v1649
      %1661 = vmatpush1.bf16.msra.mxu0 %v1648
      %1662 = vmatprep.subr.bf16.mxu0 %v1647
      %1663 = vmatpush1.bf16.msra.mxu0 %v1646
      %1664 = vmatprep.subr.bf16.mxu0 %v1645
      %1665 = vmatpush1.bf16.msra.mxu0 %v1644
      %1666 = vmatprep.subr.bf16.mxu0 %v1643
      %1667 = vmatpush1.bf16.msra.mxu0 %v1642
      %1668 = vmatprep.subr.bf16.mxu0 %v1641
      %1669 = vmatpush1.bf16.msra.mxu0 %v1640
      %1670 = vmatprep.subr.bf16.mxu0 %v1639
      %1671 = vmatpush1.bf16.msra.mxu0 %v1638
      %1672 = vmatprep.subr.bf16.mxu0 %v1637
      %1673 = vmatpush1.bf16.msra.mxu0 %v1636
      %1674 = vmatprep.subr.bf16.mxu0 0
      %1675 = vmatpush2.bf16.msra.mxu0 0
      %1676 = vmatprep.subr.bf16.mxu0 0
      %1677 = vmatpush2.bf16.msra.mxu0 0
      %1678 = vmatprep.subr.bf16.mxu0 0
      %1679 = vmatpush2.bf16.msra.mxu0 0
      %1680 = vmatprep.subr.bf16.mxu0 0
      %1681 = vmatpush2.bf16.msra.mxu0 0
      %1682 = vmatprep.subr.bf16.mxu0 0
      %1683 = vmatpush2.bf16.msra.mxu0 0
      %1684 = vmatprep.subr.bf16.mxu0 0
      %1685 = vmatpush2.bf16.msra.mxu0 0
      %1686 = vmatprep.subr.bf16.mxu0 0
      %1687 = vmatpush2.bf16.msra.mxu0 0
      %1688 = vmatprep.subr.bf16.mxu0 0
      %1689 = vmatpush2.bf16.msra.mxu0 0
      %1690 = vmatprep.mubr.bf16.mxu0 0
      %1691 = vmatmul.mubr.bf16.gmra.mxu0 %v1635
      %v1692 = vpop.f32.mrf.mxu0
      %v1693 = vadd.f32 %v1656, %v1692
      %v1694 = vpop.f32.mrf.mxu0
      %v1695 = vadd.f32 %v1656, %v1694
      %v1696 = vpop.f32.mrf.mxu0
      %v1697 = vpop.f32.mrf.mxu0
      %1698 = vdwg.mxu0
      %v1699 = vtanh.pop %v1693
      %v1700 = vtanh.pop %v1695
      %v1701 = vcombine.high %v393, %v393
      %v1703 = vadd.f32 %v1699, %v393
      %v1704 = vadd.f32 %v1700, %v1701
      %v1707 = vcombine.low %v1703, %v1704
      %1709 = vst [vmem:[%s390] sm:$0x77] %v1707
      %s1710 = smul.u32 2, %s25
      %p1711 = scmp.lt.s32.totalorder %s24, 1
      %s1712 = scalar_select %p1711, %s24, 1
      %p1713 = scmp.lt.s32.totalorder %s1710, 1
      %s1714 = scalar_select %p1713, %s1710, 1
      %s1715 = smul.addr %s1712, 2
      %s1716 = sadd.s32 %s1714, %s1715
      %s1717 = smul.addr %s1716, 4
      %s1718 = scalar_lea.vmem %s9, %s1717
      // Predicated region
      $region57: #{tpu_custom_call.1} parent=55 // pred_check
        %p1719 = pneg %p253
      $region58: #{tpu_custom_call.1} parent=55 // pred_check_branch
        %1721 = sbr.rel (%p1719) target = $region60
      $region59: #{tpu_custom_call.1} parent=55 // pred_region
        %s1722 = smul.u32 2, %s25
      $region60: #{tpu_custom_call.1} parent=55 // pred_fallthru
        _
    $region56: #{tpu_custom_call.1} parent=5 // pred_fallthru
      _
    %p1723 = scmp.le.s32.totalorder 2, %s15
    // Predicated region
    $region61: #{tpu_custom_call.1} parent=5 // pred_check
      %p1724 = pneg %p1723
    $region62: #{tpu_custom_call.1} parent=5 // pred_check_branch
      %1726 = sbr.rel (%p1724) target = $region64
    $region63: #{tpu_custom_call.1} parent=5 // pred_region
      %s1727 = ssub.s32 %s15, 2
      // Predicated region
      $region65: #{tpu_custom_call.1} parent=63 // pred_check
        %p1728 = pneg %p259
      $region66: #{tpu_custom_call.1} parent=63 // pred_check_branch
        %1730 = sbr.rel (%p1728) target = $region68
      $region67: #{tpu_custom_call.1} parent=63 // pred_region
        %s1731 = smul.u32 2, %s27
        %p1732 = scmp.lt.s32.totalorder %s26, 1
        %s1733 = scalar_select %p1732, %s26, 1
        %p1734 = scmp.lt.s32.totalorder %s1731, 1
        %s1735 = scalar_select %p1734, %s1731, 1
        %s1736 = smul.addr %s1733, 2
        %s1737 = sadd.s32 %s1735, %s1736
        %s1738 = smul.addr %s1737, 4
        %s1739 = scalar_lea.vmem %s9, %s1738
      $region68: #{tpu_custom_call.1} parent=63 // pred_fallthru
        _
    $region64: #{tpu_custom_call.1} parent=5 // pred_fallthru
      _
  $region6: #{tpu_custom_call.1} parent=0 // loop_footer
    %s19 = sadd.s32 1, %s15
  $region7: #{tpu_custom_call.1} parent=0 // loop_footer_branch
    %14 = sbr.rel target = $region3
  $region8: #{tpu_custom_call.1} parent=0 // loop_exit
    _

</llo_original>
